<compile_context>
chip_gen: v6e
topology: v6e:2x2x1
jax: 0.10.0
libtpu: 0.0.40
codegen_flags: <defaults>
</compile_context>

<pallas_src>
import math

import jax
import jax.numpy as jnp
import numpy as np
from jax.experimental import pallas as pl
from jax.experimental.pallas import tpu as pltpu

EPS = 1e-6


# ------------------------------- in-kernel math ---------------------------------------

def _layer_norm_k(x, alpha, beta):
    # tutorial LayerNormalization: alpha*(x-mean)/(std+eps)+bias, unbiased std (N-1)
    mean = jnp.mean(x, axis=-1, keepdims=True)
    d = x - mean
    var = jnp.sum(d * d, axis=-1, keepdims=True) * (1.0 / (x.shape[-1] - 1))
    return alpha * (d / (jnp.sqrt(var) + EPS)) + beta


def _mha_k(q_in, kv_in, mask, wq, wk, wv, wo, n_heads):
    # q_in: (Sq, D), kv_in: (Sk, D), mask: (Sq, Sk)
    d_model = q_in.shape[-1]
    dk = d_model // n_heads
    scale = 1.0 / math.sqrt(dk)
    # full-width, lane-dense projections (MXU-friendly, D=128)
    q = jnp.dot(q_in, wq, preferred_element_type=jnp.float32)
    k = jnp.dot(kv_in, wk, preferred_element_type=jnp.float32)
    v = jnp.dot(kv_in, wv, preferred_element_type=jnp.float32)
    masked = (mask == 0.0)
    out = None
    for h in range(n_heads):                      # static unrolled head loop
        lo = h * dk
        qh = q[:, lo:lo + dk]
        kh = k[:, lo:lo + dk]
        vh = v[:, lo:lo + dk]
        s = jnp.dot(qh, kh.T, preferred_element_type=jnp.float32) * scale
        s = jnp.where(masked, -1e9, s)            # masked_fill(mask==0, -1e9)
        m = jnp.max(s, axis=-1, keepdims=True)
        p = jnp.exp(s - m)
        denom = jnp.sum(p, axis=-1, keepdims=True)
        p = p * pl.reciprocal(denom, approx=True)  # EUP reciprocal
        # accumulate output projection per head (no lane-axis concat)
        oh = jnp.dot(jnp.dot(p, vh, preferred_element_type=jnp.float32),
                     wo[lo:lo + dk, :], preferred_element_type=jnp.float32)
        out = oh if out is None else out + oh
    return out


# ------------------------------------ kernel -------------------------------------------

def make_decoder_kernel(n_heads):
    def kernel(x_ref, enc_ref, smask_ref, tmask_ref,
               ln_a_ref, ln_b_ref, wself_ref, wcross_ref,
               w1_ref, b1_ref, w2_ref, b2_ref,
               fln_a_ref, fln_b_ref, o_ref, x_acc):
        l = pl.program_id(1)                      # layer index (innermost, "arbitrary")

        @pl.when(l == 0)
        def _():
            x_acc[...] = x_ref[0]                 # load the target sequence once per batch

        x = x_acc[...]                            # (S, D) carried across layers in VMEM
        enc = enc_ref[0]                          # (Ssrc, D)
        smask = smask_ref[0]                      # (S, Ssrc)
        tmask = tmask_ref[0]                      # (S, S)

        # residual 0: pre-norm self-attention (tgt_mask)
        xn = _layer_norm_k(x, ln_a_ref[0, 0], ln_b_ref[0, 0])
        x = x + _mha_k(xn, xn, tmask,
                       wself_ref[0, 0], wself_ref[0, 1],
                       wself_ref[0, 2], wself_ref[0, 3], n_heads)

        # residual 1: pre-norm cross-attention with encoder output (src_mask)
        xn = _layer_norm_k(x, ln_a_ref[0, 1], ln_b_ref[0, 1])
        x = x + _mha_k(xn, enc, smask,
                       wcross_ref[0, 0], wcross_ref[0, 1],
                       wcross_ref[0, 2], wcross_ref[0, 3], n_heads)

        # residual 2: pre-norm feed-forward (Linear -> ReLU -> Linear)
        xn = _layer_norm_k(x, ln_a_ref[0, 2], ln_b_ref[0, 2])
        h = jnp.maximum(
            jnp.dot(xn, w1_ref[0], preferred_element_type=jnp.float32) + b1_ref[0], 0.0)
        x = x + jnp.dot(h, w2_ref[0], preferred_element_type=jnp.float32) + b2_ref[0]

        x_acc[...] = x                            # carry to next layer

        @pl.when(l == pl.num_programs(1) - 1)
        def _():
            # final Decoder norm, lane-dense (D=128) store
            o_ref[0] = _layer_norm_k(x, fln_a_ref[...], fln_b_ref[...])

    return kernel


def decoder_forward(x, enc, src_mask, tgt_mask, params, n_heads):
    (ln_a, ln_b, wself, wcross, w1, b1, w2, b2, fln_a, fln_b) = params
    B, S, D = x.shape
    Ssrc = enc.shape[1]
    L = ln_a.shape[0]

    def batch_spec(s1, s2):
        return pl.BlockSpec((1, s1, s2), lambda b, l: (b, 0, 0))

    def layer_spec(arr):
        nzero = arr.ndim - 1
        return pl.BlockSpec((1,) + tuple(arr.shape[1:]),
                            lambda b, l, _nz=nzero: (l,) + (0,) * _nz)

    kernel = make_decoder_kernel(n_heads)
    return pl.pallas_call(
        kernel,
        out_shape=jax.ShapeDtypeStruct((B, S, D), jnp.float32),
        grid=(B, L),
        in_specs=[
            batch_spec(S, D),                      # x
            batch_spec(Ssrc, D),                   # encoder_output
            batch_spec(S, Ssrc),                   # src_mask
            batch_spec(S, S),                      # tgt_mask
            layer_spec(ln_a), layer_spec(ln_b),    # per-layer LN params
            layer_spec(wself), layer_spec(wcross),  # per-layer attention weights
            layer_spec(w1), layer_spec(b1),
            layer_spec(w2), layer_spec(b2),
            pl.BlockSpec(fln_a.shape, lambda b, l: (0, 0)),   # final norm
            pl.BlockSpec(fln_b.shape, lambda b, l: (0, 0)),
        ],
        out_specs=pl.BlockSpec((1, S, D), lambda b, l: (b, 0, 0)),
        scratch_shapes=[pltpu.VMEM((S, D), jnp.float32)],     # x carried across layers
        compiler_params=pltpu.CompilerParams(
            dimension_semantics=("parallel", "arbitrary"),
            vmem_limit_bytes=32 * 1024 * 1024,
        ),
    )(x, enc, src_mask, tgt_mask, ln_a, ln_b, wself, wcross,
      w1, b1, w2, b2, fln_a, fln_b)


# ------------------------------ pure-JAX reference -------------------------------------

def decoder_ref(x, enc, src_mask, tgt_mask, params, n_heads):
    ln_a, ln_b, wself, wcross, w1, b1, w2, b2, fln_a, fln_b = params
    L = ln_a.shape[0]
    D = x.shape[-1]
    dk = D // n_heads
    scale = 1.0 / math.sqrt(dk)

    def norm(v, a, b):
        mean = jnp.mean(v, -1, keepdims=True)
        d = v - mean
        var = jnp.sum(d * d, -1, keepdims=True) / (v.shape[-1] - 1)
        return a * d / (jnp.sqrt(var) + EPS) + b

    def mha(q_in, kv_in, mask, w):
        q, k, v = q_in @ w[0], kv_in @ w[1], kv_in @ w[2]
        heads = []
        for h in range(n_heads):
            sl = slice(h * dk, (h + 1) * dk)
            s = (q[:, sl] @ k[:, sl].T) * scale
            s = jnp.where(mask == 0.0, -1e9, s)
            heads.append(jax.nn.softmax(s, axis=-1) @ v[:, sl])
        return jnp.concatenate(heads, axis=-1) @ w[3]

    outs = []
    for bi in range(x.shape[0]):
        xb, eb, sm, tm = x[bi], enc[bi], src_mask[bi], tgt_mask[bi]
        for l in range(L):
            xn = norm(xb, ln_a[l, 0], ln_b[l, 0])
            xb = xb + mha(xn, xn, tm, wself[l])
            xn = norm(xb, ln_a[l, 1], ln_b[l, 1])
            xb = xb + mha(xn, eb, sm, wcross[l])
            xn = norm(xb, ln_a[l, 2], ln_b[l, 2])
            xb = xb + jnp.maximum(xn @ w1[l] + b1[l], 0.0) @ w2[l] + b2[l]
        outs.append(norm(xb, fln_a, fln_b))
    return jnp.stack(outs)


# --------------------------------------- main -------------------------------------------

if __name__ == "__main__":
    # Small but lane-dense shapes: D multiple of 128, d_ff multiple of 128, S multiple of 8.
    B, S, Ssrc, D, H, DFF, L = 2, 8, 16, 128, 4, 256, 2

    key = jax.random.PRNGKey(0)
    ks = jax.random.split(key, 12)
    sc = 0.1
    ln_a = (1.0 + 0.1 * jax.random.normal(ks[0], (L, 3, 1, D))).astype(jnp.float32)
    ln_b = (0.1 * jax.random.normal(ks[1], (L, 3, 1, D))).astype(jnp.float32)
    wself = (sc * jax.random.normal(ks[2], (L, 4, D, D))).astype(jnp.float32)   # q,k,v,o
    wcross = (sc * jax.random.normal(ks[3], (L, 4, D, D))).astype(jnp.float32)  # q,k,v,o
    w1 = (sc * jax.random.normal(ks[4], (L, D, DFF))).astype(jnp.float32)
    b1 = (0.1 * jax.random.normal(ks[5], (L, 1, DFF))).astype(jnp.float32)
    w2 = (sc * jax.random.normal(ks[6], (L, DFF, D))).astype(jnp.float32)
    b2 = (0.1 * jax.random.normal(ks[7], (L, 1, D))).astype(jnp.float32)
    fln_a = (1.0 + 0.1 * jax.random.normal(ks[8], (1, D))).astype(jnp.float32)
    fln_b = (0.1 * jax.random.normal(ks[9], (1, D))).astype(jnp.float32)
    params = (ln_a, ln_b, wself, wcross, w1, b1, w2, b2, fln_a, fln_b)

    x = jax.random.normal(ks[10], (B, S, D), dtype=jnp.float32)
    enc = jax.random.normal(ks[11], (B, Ssrc, D), dtype=jnp.float32)
    tgt_mask = jnp.broadcast_to(jnp.tril(jnp.ones((S, S), jnp.float32)), (B, S, S))
    src_mask = jnp.ones((B, S, Ssrc), jnp.float32)

    out = decoder_forward(x, enc, src_mask, tgt_mask, params, H)
    out = jax.block_until_ready(out)

    ref = decoder_ref(x, enc, src_mask, tgt_mask, params, H)
    # tolerance accommodates the EUP approx-reciprocal softmax normalization
    np.testing.assert_allclose(np.asarray(out), np.asarray(ref), rtol=5e-3, atol=5e-3)

    # TODO(synk): dropout inside ResidualConnection/attention is inference-mode identity here.
    print("KERNEL_OK")
</pallas_src>

<mosaic_0001>
module attributes {stable_mosaic.version = 11 : i64} {
  func.func @kernel(%arg0: i32, %arg1: i32, %arg2: memref<1x8x128xf32, #tpu.memory_space<vmem>>, %arg3: memref<1x16x128xf32, #tpu.memory_space<vmem>>, %arg4: memref<1x8x16xf32, #tpu.memory_space<vmem>>, %arg5: memref<1x8x8xf32, #tpu.memory_space<vmem>>, %arg6: memref<1x3x1x128xf32, #tpu.memory_space<vmem>>, %arg7: memref<1x3x1x128xf32, #tpu.memory_space<vmem>>, %arg8: memref<1x4x128x128xf32, #tpu.memory_space<vmem>>, %arg9: memref<1x4x128x128xf32, #tpu.memory_space<vmem>>, %arg10: memref<1x128x256xf32, #tpu.memory_space<vmem>>, %arg11: memref<1x1x256xf32, #tpu.memory_space<vmem>>, %arg12: memref<1x256x128xf32, #tpu.memory_space<vmem>>, %arg13: memref<1x1x128xf32, #tpu.memory_space<vmem>>, %arg14: memref<1x128xf32, #tpu.memory_space<vmem>>, %arg15: memref<1x128xf32, #tpu.memory_space<vmem>>, %arg16: memref<1x8x128xf32, #tpu.memory_space<vmem>>, %arg17: memref<8x128xf32, #tpu.memory_space<vmem>>) attributes {dimension_semantics = [#tpu.dimension_semantics<parallel>, #tpu.dimension_semantics<arbitrary>], iteration_bounds = array<i64: 2, 2>, scalar_prefetch = 0 : i64, scratch_operands = 1 : i64, tpu.core_type = #tpu.core_type<tc>, window_params = [{transform_indices = @transform_0, window_bounds = array<i64: 1, 8, 128>}, {transform_indices = @transform_1, window_bounds = array<i64: 1, 16, 128>}, {transform_indices = @transform_2, window_bounds = array<i64: 1, 8, 16>}, {transform_indices = @transform_3, window_bounds = array<i64: 1, 8, 8>}, {transform_indices = @transform_4, window_bounds = array<i64: 1, 3, 1, 128>}, {transform_indices = @transform_5, window_bounds = array<i64: 1, 3, 1, 128>}, {transform_indices = @transform_6, window_bounds = array<i64: 1, 4, 128, 128>}, {transform_indices = @transform_7, window_bounds = array<i64: 1, 4, 128, 128>}, {transform_indices = @transform_8, window_bounds = array<i64: 1, 128, 256>}, {transform_indices = @transform_9, window_bounds = array<i64: 1, 1, 256>}, {transform_indices = @transform_10, window_bounds = array<i64: 1, 256, 128>}, {transform_indices = @transform_11, window_bounds = array<i64: 1, 1, 128>}, {pipeline_mode = #tpu.pipeline_mode<synchronous>, transform_indices = @transform_12, window_bounds = array<i64: 1, 128>}, {pipeline_mode = #tpu.pipeline_mode<synchronous>, transform_indices = @transform_13, window_bounds = array<i64: 1, 128>}, {transform_indices = @transform_14, window_bounds = array<i64: 1, 8, 128>}]} {
    %c0_i32 = arith.constant 0 : i32
    %0 = arith.cmpi eq, %arg1, %c0_i32 : i32
    %1 = arith.extui %0 : i1 to i32
    %c0_i32_0 = arith.constant 0 : i32
    %2 = arith.cmpi ne, %1, %c0_i32_0 : i32
    scf.if %2 {
      %c0_160 = arith.constant 0 : index
      %c0_161 = arith.constant 0 : index
      %c0_162 = arith.constant 0 : index
      %313 = vector.load %arg2[%c0_160, %c0_161, %c0_162] : memref<1x8x128xf32, #tpu.memory_space<vmem>>, vector<1x8x128xf32>
      %314 = vector.shape_cast %313 : vector<1x8x128xf32> to vector<8x128xf32>
      %c0_163 = arith.constant 0 : index
      %c0_164 = arith.constant 0 : index
      %315 = vector.load %arg17[%c0_163, %c0_164] : memref<8x128xf32, #tpu.memory_space<vmem>>, vector<8x128xf32>
      tpu.vector_store %arg17[%c0_163, %c0_164], %314 {strides = array<i32>} : memref<8x128xf32, #tpu.memory_space<vmem>>, vector<8x128xf32>,
    } else {
    }
    %c0 = arith.constant 0 : index
    %c0_1 = arith.constant 0 : index
    %3 = vector.load %arg17[%c0, %c0_1] : memref<8x128xf32, #tpu.memory_space<vmem>>, vector<8x128xf32>
    %c0_2 = arith.constant 0 : index
    %c0_3 = arith.constant 0 : index
    %c0_4 = arith.constant 0 : index
    %4 = vector.load %arg3[%c0_2, %c0_3, %c0_4] : memref<1x16x128xf32, #tpu.memory_space<vmem>>, vector<1x16x128xf32>
    %5 = vector.shape_cast %4 : vector<1x16x128xf32> to vector<16x128xf32>
    %c0_5 = arith.constant 0 : index
    %c0_6 = arith.constant 0 : index
    %c0_7 = arith.constant 0 : index
    %6 = vector.load %arg4[%c0_5, %c0_6, %c0_7] : memref<1x8x16xf32, #tpu.memory_space<vmem>>, vector<1x8x16xf32>
    %7 = vector.shape_cast %6 : vector<1x8x16xf32> to vector<8x16xf32>
    %c0_8 = arith.constant 0 : index
    %c0_9 = arith.constant 0 : index
    %c0_10 = arith.constant 0 : index
    %8 = vector.load %arg5[%c0_8, %c0_9, %c0_10] : memref<1x8x8xf32, #tpu.memory_space<vmem>>, vector<1x8x8xf32>
    %9 = vector.shape_cast %8 : vector<1x8x8xf32> to vector<8x8xf32>
    %c0_11 = arith.constant 0 : index
    %c0_12 = arith.constant 0 : index
    %c0_13 = arith.constant 0 : index
    %c0_14 = arith.constant 0 : index
    %10 = vector.load %arg6[%c0_11, %c0_12, %c0_13, %c0_14] : memref<1x3x1x128xf32, #tpu.memory_space<vmem>>, vector<1x1x1x128xf32>
    %11 = vector.shape_cast %10 : vector<1x1x1x128xf32> to vector<1x128xf32>
    %c0_15 = arith.constant 0 : index
    %c0_16 = arith.constant 0 : index
    %c0_17 = arith.constant 0 : index
    %c0_18 = arith.constant 0 : index
    %12 = vector.load %arg7[%c0_15, %c0_16, %c0_17, %c0_18] : memref<1x3x1x128xf32, #tpu.memory_space<vmem>>, vector<1x1x1x128xf32>
    %13 = vector.shape_cast %12 : vector<1x1x1x128xf32> to vector<1x128xf32>
    %cst = arith.constant dense<0.000000e+00> : vector<8xf32>
    %14 = vector.multi_reduction <add>, %3, %cst [1] : vector<8x128xf32> to vector<8xf32>
    %15 = vector.shape_cast %14 : vector<8xf32> to vector<8x1xf32>
    %cst_19 = arith.constant 1.280000e+02 : f32
    %16 = vector.broadcast %cst_19 : f32 to vector<8x1xf32>
    %17 = arith.divf %15, %16 : vector<8x1xf32>
    %18 = vector.broadcast %17 : vector<8x1xf32> to vector<8x128xf32>
    %19 = arith.subf %3, %18 : vector<8x128xf32>
    %20 = arith.mulf %19, %19 : vector<8x128xf32>
    %cst_20 = arith.constant dense<0.000000e+00> : vector<8xf32>
    %21 = vector.multi_reduction <add>, %20, %cst_20 [1] : vector<8x128xf32> to vector<8xf32>
    %22 = vector.shape_cast %21 : vector<8xf32> to vector<8x1xf32>
    %cst_21 = arith.constant 0.00787401571 : f32
    %23 = vector.broadcast %cst_21 : f32 to vector<8x1xf32>
    %24 = arith.mulf %22, %23 : vector<8x1xf32>
    %25 = math.sqrt %24 : vector<8x1xf32>
    %cst_22 = arith.constant 9.99999997E-7 : f32
    %26 = vector.broadcast %cst_22 : f32 to vector<8x1xf32>
    %27 = arith.addf %25, %26 : vector<8x1xf32>
    %28 = vector.broadcast %27 : vector<8x1xf32> to vector<8x128xf32>
    %29 = arith.divf %19, %28 : vector<8x128xf32>
    %30 = vector.broadcast %11 : vector<1x128xf32> to vector<8x128xf32>
    %31 = arith.mulf %30, %29 : vector<8x128xf32>
    %32 = vector.broadcast %13 : vector<1x128xf32> to vector<8x128xf32>
    %33 = arith.addf %31, %32 : vector<8x128xf32>
    %c0_23 = arith.constant 0 : index
    %c0_24 = arith.constant 0 : index
    %c0_25 = arith.constant 0 : index
    %c0_26 = arith.constant 0 : index
    %34 = vector.load %arg8[%c0_23, %c0_24, %c0_25, %c0_26] : memref<1x4x128x128xf32, #tpu.memory_space<vmem>>, vector<1x1x128x128xf32>
    %35 = vector.shape_cast %34 : vector<1x1x128x128xf32> to vector<128x128xf32>
    %c0_27 = arith.constant 0 : index
    %c1 = arith.constant 1 : index
    %c0_28 = arith.constant 0 : index
    %c0_29 = arith.constant 0 : index
    %36 = vector.load %arg8[%c0_27, %c1, %c0_28, %c0_29] : memref<1x4x128x128xf32, #tpu.memory_space<vmem>>, vector<1x1x128x128xf32>
    %37 = vector.shape_cast %36 : vector<1x1x128x128xf32> to vector<128x128xf32>
    %c0_30 = arith.constant 0 : index
    %c2 = arith.constant 2 : index
    %c0_31 = arith.constant 0 : index
    %c0_32 = arith.constant 0 : index
    %38 = vector.load %arg8[%c0_30, %c2, %c0_31, %c0_32] : memref<1x4x128x128xf32, #tpu.memory_space<vmem>>, vector<1x1x128x128xf32>
    %39 = vector.shape_cast %38 : vector<1x1x128x128xf32> to vector<128x128xf32>
    %c0_33 = arith.constant 0 : index
    %c3 = arith.constant 3 : index
    %c0_34 = arith.constant 0 : index
    %c0_35 = arith.constant 0 : index
    %40 = vector.load %arg8[%c0_33, %c3, %c0_34, %c0_35] : memref<1x4x128x128xf32, #tpu.memory_space<vmem>>, vector<1x1x128x128xf32>
    %41 = vector.shape_cast %40 : vector<1x1x128x128xf32> to vector<128x128xf32>
    %cst_36 = arith.constant dense<0.000000e+00> : vector<8x128xf32>
    %42 = tpu.matmul %33, %35, %cst_36 {dimension_numbers = #tpu.dot_dimension_numbers<[1], [0], [0], [1], [0, 0, 1, 1], [], []>} : vector<8x128xf32>, vector<128x128xf32>, vector<8x128xf32> -> vector<8x128xf32>
    %cst_37 = arith.constant dense<0.000000e+00> : vector<8x128xf32>
    %43 = tpu.matmul %33, %37, %cst_37 {dimension_numbers = #tpu.dot_dimension_numbers<[1], [0], [0], [1], [0, 0, 1, 1], [], []>} : vector<8x128xf32>, vector<128x128xf32>, vector<8x128xf32> -> vector<8x128xf32>
    %cst_38 = arith.constant dense<0.000000e+00> : vector<8x128xf32>
    %44 = tpu.matmul %33, %39, %cst_38 {dimension_numbers = #tpu.dot_dimension_numbers<[1], [0], [0], [1], [0, 0, 1, 1], [], []>} : vector<8x128xf32>, vector<128x128xf32>, vector<8x128xf32> -> vector<8x128xf32>
    %cst_39 = arith.constant 0.000000e+00 : f32
    %45 = vector.broadcast %cst_39 : f32 to vector<8x8xf32>
    %46 = arith.cmpf oeq, %9, %45 : vector<8x8xf32>
    %47 = vector.extract_strided_slice %42 {offsets = [0, 0], sizes = [8, 32], strides = [1, 1]} : vector<8x128xf32> to vector<8x32xf32>
    %48 = vector.extract_strided_slice %43 {offsets = [0, 0], sizes = [8, 32], strides = [1, 1]} : vector<8x128xf32> to vector<8x32xf32>
    %49 = vector.extract_strided_slice %44 {offsets = [0, 0], sizes = [8, 32], strides = [1, 1]} : vector<8x128xf32> to vector<8x32xf32>
    %50 = tpu.transpose %48, [1, 0] : vector<8x32xf32> -> vector<32x8xf32>
    %cst_40 = arith.constant dense<0.000000e+00> : vector<8x8xf32>
    %51 = tpu.matmul %47, %50, %cst_40 {dimension_numbers = #tpu.dot_dimension_numbers<[1], [0], [0], [1], [0, 0, 1, 1], [], []>} : vector<8x32xf32>, vector<32x8xf32>, vector<8x8xf32> -> vector<8x8xf32>
    %cst_41 = arith.constant 0.176776692 : f32
    %52 = vector.broadcast %cst_41 : f32 to vector<8x8xf32>
    %53 = arith.mulf %51, %52 : vector<8x8xf32>
    %cst_42 = arith.constant -1.000000e+09 : f32
    %54 = vector.broadcast %cst_42 : f32 to vector<8x8xf32>
    %55 = arith.select %46, %54, %53 : vector<8x8xi1>, vector<8x8xf32>
    %cst_43 = arith.constant dense<0xFF800000> : vector<8xf32>
    %56 = vector.multi_reduction <maximumf>, %55, %cst_43 [1] : vector<8x8xf32> to vector<8xf32>
    %57 = vector.shape_cast %56 : vector<8xf32> to vector<8x1xf32>
    %58 = vector.broadcast %57 : vector<8x1xf32> to vector<8x8xf32>
    %59 = arith.subf %55, %58 : vector<8x8xf32>
    %60 = math.exp %59 : vector<8x8xf32>
    %cst_44 = arith.constant dense<0.000000e+00> : vector<8xf32>
    %61 = vector.multi_reduction <add>, %60, %cst_44 [1] : vector<8x8xf32> to vector<8xf32>
    %62 = vector.shape_cast %61 : vector<8xf32> to vector<8x1xf32>
    %63 = tpu.reciprocal %62 {approx = true} : vector<8x1xf32> -> vector<8x1xf32>
    %64 = vector.broadcast %63 : vector<8x1xf32> to vector<8x8xf32>
    %65 = arith.mulf %60, %64 : vector<8x8xf32>
    %cst_45 = arith.constant dense<0.000000e+00> : vector<8x32xf32>
    %66 = tpu.matmul %65, %49, %cst_45 {dimension_numbers = #tpu.dot_dimension_numbers<[1], [0], [0], [1], [0, 0, 1, 1], [], []>} : vector<8x8xf32>, vector<8x32xf32>, vector<8x32xf32> -> vector<8x32xf32>
    %67 = vector.extract_strided_slice %41 {offsets = [0, 0], sizes = [32, 128], strides = [1, 1]} : vector<128x128xf32> to vector<32x128xf32>
    %cst_46 = arith.constant dense<0.000000e+00> : vector<8x128xf32>
    %68 = tpu.matmul %66, %67, %cst_46 {dimension_numbers = #tpu.dot_dimension_numbers<[1], [0], [0], [1], [0, 0, 1, 1], [], []>} : vector<8x32xf32>, vector<32x128xf32>, vector<8x128xf32> -> vector<8x128xf32>
    %69 = vector.extract_strided_slice %42 {offsets = [0, 32], sizes = [8, 32], strides = [1, 1]} : vector<8x128xf32> to vector<8x32xf32>
    %70 = vector.extract_strided_slice %43 {offsets = [0, 32], sizes = [8, 32], strides = [1, 1]} : vector<8x128xf32> to vector<8x32xf32>
    %71 = vector.extract_strided_slice %44 {offsets = [0, 32], sizes = [8, 32], strides = [1, 1]} : vector<8x128xf32> to vector<8x32xf32>
    %72 = tpu.transpose %70, [1, 0] : vector<8x32xf32> -> vector<32x8xf32>
    %cst_47 = arith.constant dense<0.000000e+00> : vector<8x8xf32>
    %73 = tpu.matmul %69, %72, %cst_47 {dimension_numbers = #tpu.dot_dimension_numbers<[1], [0], [0], [1], [0, 0, 1, 1], [], []>} : vector<8x32xf32>, vector<32x8xf32>, vector<8x8xf32> -> vector<8x8xf32>
    %cst_48 = arith.constant 0.176776692 : f32
    %74 = vector.broadcast %cst_48 : f32 to vector<8x8xf32>
    %75 = arith.mulf %73, %74 : vector<8x8xf32>
    %cst_49 = arith.constant -1.000000e+09 : f32
    %76 = vector.broadcast %cst_49 : f32 to vector<8x8xf32>
    %77 = arith.select %46, %76, %75 : vector<8x8xi1>, vector<8x8xf32>
    %cst_50 = arith.constant dense<0xFF800000> : vector<8xf32>
    %78 = vector.multi_reduction <maximumf>, %77, %cst_50 [1] : vector<8x8xf32> to vector<8xf32>
    %79 = vector.shape_cast %78 : vector<8xf32> to vector<8x1xf32>
    %80 = vector.broadcast %79 : vector<8x1xf32> to vector<8x8xf32>
    %81 = arith.subf %77, %80 : vector<8x8xf32>
    %82 = math.exp %81 : vector<8x8xf32>
    %cst_51 = arith.constant dense<0.000000e+00> : vector<8xf32>
    %83 = vector.multi_reduction <add>, %82, %cst_51 [1] : vector<8x8xf32> to vector<8xf32>
    %84 = vector.shape_cast %83 : vector<8xf32> to vector<8x1xf32>
    %85 = tpu.reciprocal %84 {approx = true} : vector<8x1xf32> -> vector<8x1xf32>
    %86 = vector.broadcast %85 : vector<8x1xf32> to vector<8x8xf32>
    %87 = arith.mulf %82, %86 : vector<8x8xf32>
    %cst_52 = arith.constant dense<0.000000e+00> : vector<8x32xf32>
    %88 = tpu.matmul %87, %71, %cst_52 {dimension_numbers = #tpu.dot_dimension_numbers<[1], [0], [0], [1], [0, 0, 1, 1], [], []>} : vector<8x8xf32>, vector<8x32xf32>, vector<8x32xf32> -> vector<8x32xf32>
    %89 = vector.extract_strided_slice %41 {offsets = [32, 0], sizes = [32, 128], strides = [1, 1]} : vector<128x128xf32> to vector<32x128xf32>
    %cst_53 = arith.constant dense<0.000000e+00> : vector<8x128xf32>
    %90 = tpu.matmul %88, %89, %cst_53 {dimension_numbers = #tpu.dot_dimension_numbers<[1], [0], [0], [1], [0, 0, 1, 1], [], []>} : vector<8x32xf32>, vector<32x128xf32>, vector<8x128xf32> -> vector<8x128xf32>
    %91 = arith.addf %68, %90 : vector<8x128xf32>
    %92 = vector.extract_strided_slice %42 {offsets = [0, 64], sizes = [8, 32], strides = [1, 1]} : vector<8x128xf32> to vector<8x32xf32>
    %93 = vector.extract_strided_slice %43 {offsets = [0, 64], sizes = [8, 32], strides = [1, 1]} : vector<8x128xf32> to vector<8x32xf32>
    %94 = vector.extract_strided_slice %44 {offsets = [0, 64], sizes = [8, 32], strides = [1, 1]} : vector<8x128xf32> to vector<8x32xf32>
    %95 = tpu.transpose %93, [1, 0] : vector<8x32xf32> -> vector<32x8xf32>
    %cst_54 = arith.constant dense<0.000000e+00> : vector<8x8xf32>
    %96 = tpu.matmul %92, %95, %cst_54 {dimension_numbers = #tpu.dot_dimension_numbers<[1], [0], [0], [1], [0, 0, 1, 1], [], []>} : vector<8x32xf32>, vector<32x8xf32>, vector<8x8xf32> -> vector<8x8xf32>
    %cst_55 = arith.constant 0.176776692 : f32
    %97 = vector.broadcast %cst_55 : f32 to vector<8x8xf32>
    %98 = arith.mulf %96, %97 : vector<8x8xf32>
    %cst_56 = arith.constant -1.000000e+09 : f32
    %99 = vector.broadcast %cst_56 : f32 to vector<8x8xf32>
    %100 = arith.select %46, %99, %98 : vector<8x8xi1>, vector<8x8xf32>
    %cst_57 = arith.constant dense<0xFF800000> : vector<8xf32>
    %101 = vector.multi_reduction <maximumf>, %100, %cst_57 [1] : vector<8x8xf32> to vector<8xf32>
    %102 = vector.shape_cast %101 : vector<8xf32> to vector<8x1xf32>
    %103 = vector.broadcast %102 : vector<8x1xf32> to vector<8x8xf32>
    %104 = arith.subf %100, %103 : vector<8x8xf32>
    %105 = math.exp %104 : vector<8x8xf32>
    %cst_58 = arith.constant dense<0.000000e+00> : vector<8xf32>
    %106 = vector.multi_reduction <add>, %105, %cst_58 [1] : vector<8x8xf32> to vector<8xf32>
    %107 = vector.shape_cast %106 : vector<8xf32> to vector<8x1xf32>
    %108 = tpu.reciprocal %107 {approx = true} : vector<8x1xf32> -> vector<8x1xf32>
    %109 = vector.broadcast %108 : vector<8x1xf32> to vector<8x8xf32>
    %110 = arith.mulf %105, %109 : vector<8x8xf32>
    %cst_59 = arith.constant dense<0.000000e+00> : vector<8x32xf32>
    %111 = tpu.matmul %110, %94, %cst_59 {dimension_numbers = #tpu.dot_dimension_numbers<[1], [0], [0], [1], [0, 0, 1, 1], [], []>} : vector<8x8xf32>, vector<8x32xf32>, vector<8x32xf32> -> vector<8x32xf32>
    %112 = vector.extract_strided_slice %41 {offsets = [64, 0], sizes = [32, 128], strides = [1, 1]} : vector<128x128xf32> to vector<32x128xf32>
    %cst_60 = arith.constant dense<0.000000e+00> : vector<8x128xf32>
    %113 = tpu.matmul %111, %112, %cst_60 {dimension_numbers = #tpu.dot_dimension_numbers<[1], [0], [0], [1], [0, 0, 1, 1], [], []>} : vector<8x32xf32>, vector<32x128xf32>, vector<8x128xf32> -> vector<8x128xf32>
    %114 = arith.addf %91, %113 : vector<8x128xf32>
    %115 = vector.extract_strided_slice %42 {offsets = [0, 96], sizes = [8, 32], strides = [1, 1]} : vector<8x128xf32> to vector<8x32xf32>
    %116 = vector.extract_strided_slice %43 {offsets = [0, 96], sizes = [8, 32], strides = [1, 1]} : vector<8x128xf32> to vector<8x32xf32>
    %117 = vector.extract_strided_slice %44 {offsets = [0, 96], sizes = [8, 32], strides = [1, 1]} : vector<8x128xf32> to vector<8x32xf32>
    %118 = tpu.transpose %116, [1, 0] : vector<8x32xf32> -> vector<32x8xf32>
    %cst_61 = arith.constant dense<0.000000e+00> : vector<8x8xf32>
    %119 = tpu.matmul %115, %118, %cst_61 {dimension_numbers = #tpu.dot_dimension_numbers<[1], [0], [0], [1], [0, 0, 1, 1], [], []>} : vector<8x32xf32>, vector<32x8xf32>, vector<8x8xf32> -> vector<8x8xf32>
    %cst_62 = arith.constant 0.176776692 : f32
    %120 = vector.broadcast %cst_62 : f32 to vector<8x8xf32>
    %121 = arith.mulf %119, %120 : vector<8x8xf32>
    %cst_63 = arith.constant -1.000000e+09 : f32
    %122 = vector.broadcast %cst_63 : f32 to vector<8x8xf32>
    %123 = arith.select %46, %122, %121 : vector<8x8xi1>, vector<8x8xf32>
    %cst_64 = arith.constant dense<0xFF800000> : vector<8xf32>
    %124 = vector.multi_reduction <maximumf>, %123, %cst_64 [1] : vector<8x8xf32> to vector<8xf32>
    %125 = vector.shape_cast %124 : vector<8xf32> to vector<8x1xf32>
    %126 = vector.broadcast %125 : vector<8x1xf32> to vector<8x8xf32>
    %127 = arith.subf %123, %126 : vector<8x8xf32>
    %128 = math.exp %127 : vector<8x8xf32>
    %cst_65 = arith.constant dense<0.000000e+00> : vector<8xf32>
    %129 = vector.multi_reduction <add>, %128, %cst_65 [1] : vector<8x8xf32> to vector<8xf32>
    %130 = vector.shape_cast %129 : vector<8xf32> to vector<8x1xf32>
    %131 = tpu.reciprocal %130 {approx = true} : vector<8x1xf32> -> vector<8x1xf32>
    %132 = vector.broadcast %131 : vector<8x1xf32> to vector<8x8xf32>
    %133 = arith.mulf %128, %132 : vector<8x8xf32>
    %cst_66 = arith.constant dense<0.000000e+00> : vector<8x32xf32>
    %134 = tpu.matmul %133, %117, %cst_66 {dimension_numbers = #tpu.dot_dimension_numbers<[1], [0], [0], [1], [0, 0, 1, 1], [], []>} : vector<8x8xf32>, vector<8x32xf32>, vector<8x32xf32> -> vector<8x32xf32>
    %135 = vector.extract_strided_slice %41 {offsets = [96, 0], sizes = [32, 128], strides = [1, 1]} : vector<128x128xf32> to vector<32x128xf32>
    %cst_67 = arith.constant dense<0.000000e+00> : vector<8x128xf32>
    %136 = tpu.matmul %134, %135, %cst_67 {dimension_numbers = #tpu.dot_dimension_numbers<[1], [0], [0], [1], [0, 0, 1, 1], [], []>} : vector<8x32xf32>, vector<32x128xf32>, vector<8x128xf32> -> vector<8x128xf32>
    %137 = arith.addf %114, %136 : vector<8x128xf32>
    %138 = arith.addf %3, %137 : vector<8x128xf32>
    %c0_68 = arith.constant 0 : index
    %c1_69 = arith.constant 1 : index
    %c0_70 = arith.constant 0 : index
    %c0_71 = arith.constant 0 : index
    %139 = vector.load %arg6[%c0_68, %c1_69, %c0_70, %c0_71] : memref<1x3x1x128xf32, #tpu.memory_space<vmem>>, vector<1x1x1x128xf32>
    %140 = vector.shape_cast %139 : vector<1x1x1x128xf32> to vector<1x128xf32>
    %c0_72 = arith.constant 0 : index
    %c1_73 = arith.constant 1 : index
    %c0_74 = arith.constant 0 : index
    %c0_75 = arith.constant 0 : index
    %141 = vector.load %arg7[%c0_72, %c1_73, %c0_74, %c0_75] : memref<1x3x1x128xf32, #tpu.memory_space<vmem>>, vector<1x1x1x128xf32>
    %142 = vector.shape_cast %141 : vector<1x1x1x128xf32> to vector<1x128xf32>
    %cst_76 = arith.constant dense<0.000000e+00> : vector<8xf32>
    %143 = vector.multi_reduction <add>, %138, %cst_76 [1] : vector<8x128xf32> to vector<8xf32>
    %144 = vector.shape_cast %143 : vector<8xf32> to vector<8x1xf32>
    %cst_77 = arith.constant 1.280000e+02 : f32
    %145 = vector.broadcast %cst_77 : f32 to vector<8x1xf32>
    %146 = arith.divf %144, %145 : vector<8x1xf32>
    %147 = vector.broadcast %146 : vector<8x1xf32> to vector<8x128xf32>
    %148 = arith.subf %138, %147 : vector<8x128xf32>
    %149 = arith.mulf %148, %148 : vector<8x128xf32>
    %cst_78 = arith.constant dense<0.000000e+00> : vector<8xf32>
    %150 = vector.multi_reduction <add>, %149, %cst_78 [1] : vector<8x128xf32> to vector<8xf32>
    %151 = vector.shape_cast %150 : vector<8xf32> to vector<8x1xf32>
    %cst_79 = arith.constant 0.00787401571 : f32
    %152 = vector.broadcast %cst_79 : f32 to vector<8x1xf32>
    %153 = arith.mulf %151, %152 : vector<8x1xf32>
    %154 = math.sqrt %153 : vector<8x1xf32>
    %cst_80 = arith.constant 9.99999997E-7 : f32
    %155 = vector.broadcast %cst_80 : f32 to vector<8x1xf32>
    %156 = arith.addf %154, %155 : vector<8x1xf32>
    %157 = vector.broadcast %156 : vector<8x1xf32> to vector<8x128xf32>
    %158 = arith.divf %148, %157 : vector<8x128xf32>
    %159 = vector.broadcast %140 : vector<1x128xf32> to vector<8x128xf32>
    %160 = arith.mulf %159, %158 : vector<8x128xf32>
    %161 = vector.broadcast %142 : vector<1x128xf32> to vector<8x128xf32>
    %162 = arith.addf %160, %161 : vector<8x128xf32>
    %c0_81 = arith.constant 0 : index
    %c0_82 = arith.constant 0 : index
    %c0_83 = arith.constant 0 : index
    %c0_84 = arith.constant 0 : index
    %163 = vector.load %arg9[%c0_81, %c0_82, %c0_83, %c0_84] : memref<1x4x128x128xf32, #tpu.memory_space<vmem>>, vector<1x1x128x128xf32>
    %164 = vector.shape_cast %163 : vector<1x1x128x128xf32> to vector<128x128xf32>
    %c0_85 = arith.constant 0 : index
    %c1_86 = arith.constant 1 : index
    %c0_87 = arith.constant 0 : index
    %c0_88 = arith.constant 0 : index
    %165 = vector.load %arg9[%c0_85, %c1_86, %c0_87, %c0_88] : memref<1x4x128x128xf32, #tpu.memory_space<vmem>>, vector<1x1x128x128xf32>
    %166 = vector.shape_cast %165 : vector<1x1x128x128xf32> to vector<128x128xf32>
    %c0_89 = arith.constant 0 : index
    %c2_90 = arith.constant 2 : index
    %c0_91 = arith.constant 0 : index
    %c0_92 = arith.constant 0 : index
    %167 = vector.load %arg9[%c0_89, %c2_90, %c0_91, %c0_92] : memref<1x4x128x128xf32, #tpu.memory_space<vmem>>, vector<1x1x128x128xf32>
    %168 = vector.shape_cast %167 : vector<1x1x128x128xf32> to vector<128x128xf32>
    %c0_93 = arith.constant 0 : index
    %c3_94 = arith.constant 3 : index
    %c0_95 = arith.constant 0 : index
    %c0_96 = arith.constant 0 : index
    %169 = vector.load %arg9[%c0_93, %c3_94, %c0_95, %c0_96] : memref<1x4x128x128xf32, #tpu.memory_space<vmem>>, vector<1x1x128x128xf32>
    %170 = vector.shape_cast %169 : vector<1x1x128x128xf32> to vector<128x128xf32>
    %cst_97 = arith.constant dense<0.000000e+00> : vector<8x128xf32>
    %171 = tpu.matmul %162, %164, %cst_97 {dimension_numbers = #tpu.dot_dimension_numbers<[1], [0], [0], [1], [0, 0, 1, 1], [], []>} : vector<8x128xf32>, vector<128x128xf32>, vector<8x128xf32> -> vector<8x128xf32>
    %cst_98 = arith.constant dense<0.000000e+00> : vector<16x128xf32>
    %172 = tpu.matmul %5, %166, %cst_98 {dimension_numbers = #tpu.dot_dimension_numbers<[1], [0], [0], [1], [0, 0, 1, 1], [], []>} : vector<16x128xf32>, vector<128x128xf32>, vector<16x128xf32> -> vector<16x128xf32>
    %cst_99 = arith.constant dense<0.000000e+00> : vector<16x128xf32>
    %173 = tpu.matmul %5, %168, %cst_99 {dimension_numbers = #tpu.dot_dimension_numbers<[1], [0], [0], [1], [0, 0, 1, 1], [], []>} : vector<16x128xf32>, vector<128x128xf32>, vector<16x128xf32> -> vector<16x128xf32>
    %cst_100 = arith.constant 0.000000e+00 : f32
    %174 = vector.broadcast %cst_100 : f32 to vector<8x16xf32>
    %175 = arith.cmpf oeq, %7, %174 : vector<8x16xf32>
    %176 = vector.extract_strided_slice %171 {offsets = [0, 0], sizes = [8, 32], strides = [1, 1]} : vector<8x128xf32> to vector<8x32xf32>
    %177 = vector.extract_strided_slice %172 {offsets = [0, 0], sizes = [16, 32], strides = [1, 1]} : vector<16x128xf32> to vector<16x32xf32>
    %178 = vector.extract_strided_slice %173 {offsets = [0, 0], sizes = [16, 32], strides = [1, 1]} : vector<16x128xf32> to vector<16x32xf32>
    %179 = tpu.transpose %177, [1, 0] : vector<16x32xf32> -> vector<32x16xf32>
    %cst_101 = arith.constant dense<0.000000e+00> : vector<8x16xf32>
    %180 = tpu.matmul %176, %179, %cst_101 {dimension_numbers = #tpu.dot_dimension_numbers<[1], [0], [0], [1], [0, 0, 1, 1], [], []>} : vector<8x32xf32>, vector<32x16xf32>, vector<8x16xf32> -> vector<8x16xf32>
    %cst_102 = arith.constant 0.176776692 : f32
    %181 = vector.broadcast %cst_102 : f32 to vector<8x16xf32>
    %182 = arith.mulf %180, %181 : vector<8x16xf32>
    %cst_103 = arith.constant -1.000000e+09 : f32
    %183 = vector.broadcast %cst_103 : f32 to vector<8x16xf32>
    %184 = arith.select %175, %183, %182 : vector<8x16xi1>, vector<8x16xf32>
    %cst_104 = arith.constant dense<0xFF800000> : vector<8xf32>
    %185 = vector.multi_reduction <maximumf>, %184, %cst_104 [1] : vector<8x16xf32> to vector<8xf32>
    %186 = vector.shape_cast %185 : vector<8xf32> to vector<8x1xf32>
    %187 = vector.broadcast %186 : vector<8x1xf32> to vector<8x16xf32>
    %188 = arith.subf %184, %187 : vector<8x16xf32>
    %189 = math.exp %188 : vector<8x16xf32>
    %cst_105 = arith.constant dense<0.000000e+00> : vector<8xf32>
    %190 = vector.multi_reduction <add>, %189, %cst_105 [1] : vector<8x16xf32> to vector<8xf32>
    %191 = vector.shape_cast %190 : vector<8xf32> to vector<8x1xf32>
    %192 = tpu.reciprocal %191 {approx = true} : vector<8x1xf32> -> vector<8x1xf32>
    %193 = vector.broadcast %192 : vector<8x1xf32> to vector<8x16xf32>
    %194 = arith.mulf %189, %193 : vector<8x16xf32>
    %cst_106 = arith.constant dense<0.000000e+00> : vector<8x32xf32>
    %195 = tpu.matmul %194, %178, %cst_106 {dimension_numbers = #tpu.dot_dimension_numbers<[1], [0], [0], [1], [0, 0, 1, 1], [], []>} : vector<8x16xf32>, vector<16x32xf32>, vector<8x32xf32> -> vector<8x32xf32>
    %196 = vector.extract_strided_slice %170 {offsets = [0, 0], sizes = [32, 128], strides = [1, 1]} : vector<128x128xf32> to vector<32x128xf32>
    %cst_107 = arith.constant dense<0.000000e+00> : vector<8x128xf32>
    %197 = tpu.matmul %195, %196, %cst_107 {dimension_numbers = #tpu.dot_dimension_numbers<[1], [0], [0], [1], [0, 0, 1, 1], [], []>} : vector<8x32xf32>, vector<32x128xf32>, vector<8x128xf32> -> vector<8x128xf32>
    %198 = vector.extract_strided_slice %171 {offsets = [0, 32], sizes = [8, 32], strides = [1, 1]} : vector<8x128xf32> to vector<8x32xf32>
    %199 = vector.extract_strided_slice %172 {offsets = [0, 32], sizes = [16, 32], strides = [1, 1]} : vector<16x128xf32> to vector<16x32xf32>
    %200 = vector.extract_strided_slice %173 {offsets = [0, 32], sizes = [16, 32], strides = [1, 1]} : vector<16x128xf32> to vector<16x32xf32>
    %201 = tpu.transpose %199, [1, 0] : vector<16x32xf32> -> vector<32x16xf32>
    %cst_108 = arith.constant dense<0.000000e+00> : vector<8x16xf32>
    %202 = tpu.matmul %198, %201, %cst_108 {dimension_numbers = #tpu.dot_dimension_numbers<[1], [0], [0], [1], [0, 0, 1, 1], [], []>} : vector<8x32xf32>, vector<32x16xf32>, vector<8x16xf32> -> vector<8x16xf32>
    %cst_109 = arith.constant 0.176776692 : f32
    %203 = vector.broadcast %cst_109 : f32 to vector<8x16xf32>
    %204 = arith.mulf %202, %203 : vector<8x16xf32>
    %cst_110 = arith.constant -1.000000e+09 : f32
    %205 = vector.broadcast %cst_110 : f32 to vector<8x16xf32>
    %206 = arith.select %175, %205, %204 : vector<8x16xi1>, vector<8x16xf32>
    %cst_111 = arith.constant dense<0xFF800000> : vector<8xf32>
    %207 = vector.multi_reduction <maximumf>, %206, %cst_111 [1] : vector<8x16xf32> to vector<8xf32>
    %208 = vector.shape_cast %207 : vector<8xf32> to vector<8x1xf32>
    %209 = vector.broadcast %208 : vector<8x1xf32> to vector<8x16xf32>
    %210 = arith.subf %206, %209 : vector<8x16xf32>
    %211 = math.exp %210 : vector<8x16xf32>
    %cst_112 = arith.constant dense<0.000000e+00> : vector<8xf32>
    %212 = vector.multi_reduction <add>, %211, %cst_112 [1] : vector<8x16xf32> to vector<8xf32>
    %213 = vector.shape_cast %212 : vector<8xf32> to vector<8x1xf32>
    %214 = tpu.reciprocal %213 {approx = true} : vector<8x1xf32> -> vector<8x1xf32>
    %215 = vector.broadcast %214 : vector<8x1xf32> to vector<8x16xf32>
    %216 = arith.mulf %211, %215 : vector<8x16xf32>
    %cst_113 = arith.constant dense<0.000000e+00> : vector<8x32xf32>
    %217 = tpu.matmul %216, %200, %cst_113 {dimension_numbers = #tpu.dot_dimension_numbers<[1], [0], [0], [1], [0, 0, 1, 1], [], []>} : vector<8x16xf32>, vector<16x32xf32>, vector<8x32xf32> -> vector<8x32xf32>
    %218 = vector.extract_strided_slice %170 {offsets = [32, 0], sizes = [32, 128], strides = [1, 1]} : vector<128x128xf32> to vector<32x128xf32>
    %cst_114 = arith.constant dense<0.000000e+00> : vector<8x128xf32>
    %219 = tpu.matmul %217, %218, %cst_114 {dimension_numbers = #tpu.dot_dimension_numbers<[1], [0], [0], [1], [0, 0, 1, 1], [], []>} : vector<8x32xf32>, vector<32x128xf32>, vector<8x128xf32> -> vector<8x128xf32>
    %220 = arith.addf %197, %219 : vector<8x128xf32>
    %221 = vector.extract_strided_slice %171 {offsets = [0, 64], sizes = [8, 32], strides = [1, 1]} : vector<8x128xf32> to vector<8x32xf32>
    %222 = vector.extract_strided_slice %172 {offsets = [0, 64], sizes = [16, 32], strides = [1, 1]} : vector<16x128xf32> to vector<16x32xf32>
    %223 = vector.extract_strided_slice %173 {offsets = [0, 64], sizes = [16, 32], strides = [1, 1]} : vector<16x128xf32> to vector<16x32xf32>
    %224 = tpu.transpose %222, [1, 0] : vector<16x32xf32> -> vector<32x16xf32>
    %cst_115 = arith.constant dense<0.000000e+00> : vector<8x16xf32>
    %225 = tpu.matmul %221, %224, %cst_115 {dimension_numbers = #tpu.dot_dimension_numbers<[1], [0], [0], [1], [0, 0, 1, 1], [], []>} : vector<8x32xf32>, vector<32x16xf32>, vector<8x16xf32> -> vector<8x16xf32>
    %cst_116 = arith.constant 0.176776692 : f32
    %226 = vector.broadcast %cst_116 : f32 to vector<8x16xf32>
    %227 = arith.mulf %225, %226 : vector<8x16xf32>
    %cst_117 = arith.constant -1.000000e+09 : f32
    %228 = vector.broadcast %cst_117 : f32 to vector<8x16xf32>
    %229 = arith.select %175, %228, %227 : vector<8x16xi1>, vector<8x16xf32>
    %cst_118 = arith.constant dense<0xFF800000> : vector<8xf32>
    %230 = vector.multi_reduction <maximumf>, %229, %cst_118 [1] : vector<8x16xf32> to vector<8xf32>
    %231 = vector.shape_cast %230 : vector<8xf32> to vector<8x1xf32>
    %232 = vector.broadcast %231 : vector<8x1xf32> to vector<8x16xf32>
    %233 = arith.subf %229, %232 : vector<8x16xf32>
    %234 = math.exp %233 : vector<8x16xf32>
    %cst_119 = arith.constant dense<0.000000e+00> : vector<8xf32>
    %235 = vector.multi_reduction <add>, %234, %cst_119 [1] : vector<8x16xf32> to vector<8xf32>
    %236 = vector.shape_cast %235 : vector<8xf32> to vector<8x1xf32>
    %237 = tpu.reciprocal %236 {approx = true} : vector<8x1xf32> -> vector<8x1xf32>
    %238 = vector.broadcast %237 : vector<8x1xf32> to vector<8x16xf32>
    %239 = arith.mulf %234, %238 : vector<8x16xf32>
    %cst_120 = arith.constant dense<0.000000e+00> : vector<8x32xf32>
    %240 = tpu.matmul %239, %223, %cst_120 {dimension_numbers = #tpu.dot_dimension_numbers<[1], [0], [0], [1], [0, 0, 1, 1], [], []>} : vector<8x16xf32>, vector<16x32xf32>, vector<8x32xf32> -> vector<8x32xf32>
    %241 = vector.extract_strided_slice %170 {offsets = [64, 0], sizes = [32, 128], strides = [1, 1]} : vector<128x128xf32> to vector<32x128xf32>
    %cst_121 = arith.constant dense<0.000000e+00> : vector<8x128xf32>
    %242 = tpu.matmul %240, %241, %cst_121 {dimension_numbers = #tpu.dot_dimension_numbers<[1], [0], [0], [1], [0, 0, 1, 1], [], []>} : vector<8x32xf32>, vector<32x128xf32>, vector<8x128xf32> -> vector<8x128xf32>
    %243 = arith.addf %220, %242 : vector<8x128xf32>
    %244 = vector.extract_strided_slice %171 {offsets = [0, 96], sizes = [8, 32], strides = [1, 1]} : vector<8x128xf32> to vector<8x32xf32>
    %245 = vector.extract_strided_slice %172 {offsets = [0, 96], sizes = [16, 32], strides = [1, 1]} : vector<16x128xf32> to vector<16x32xf32>
    %246 = vector.extract_strided_slice %173 {offsets = [0, 96], sizes = [16, 32], strides = [1, 1]} : vector<16x128xf32> to vector<16x32xf32>
    %247 = tpu.transpose %245, [1, 0] : vector<16x32xf32> -> vector<32x16xf32>
    %cst_122 = arith.constant dense<0.000000e+00> : vector<8x16xf32>
    %248 = tpu.matmul %244, %247, %cst_122 {dimension_numbers = #tpu.dot_dimension_numbers<[1], [0], [0], [1], [0, 0, 1, 1], [], []>} : vector<8x32xf32>, vector<32x16xf32>, vector<8x16xf32> -> vector<8x16xf32>
    %cst_123 = arith.constant 0.176776692 : f32
    %249 = vector.broadcast %cst_123 : f32 to vector<8x16xf32>
    %250 = arith.mulf %248, %249 : vector<8x16xf32>
    %cst_124 = arith.constant -1.000000e+09 : f32
    %251 = vector.broadcast %cst_124 : f32 to vector<8x16xf32>
    %252 = arith.select %175, %251, %250 : vector<8x16xi1>, vector<8x16xf32>
    %cst_125 = arith.constant dense<0xFF800000> : vector<8xf32>
    %253 = vector.multi_reduction <maximumf>, %252, %cst_125 [1] : vector<8x16xf32> to vector<8xf32>
    %254 = vector.shape_cast %253 : vector<8xf32> to vector<8x1xf32>
    %255 = vector.broadcast %254 : vector<8x1xf32> to vector<8x16xf32>
    %256 = arith.subf %252, %255 : vector<8x16xf32>
    %257 = math.exp %256 : vector<8x16xf32>
    %cst_126 = arith.constant dense<0.000000e+00> : vector<8xf32>
    %258 = vector.multi_reduction <add>, %257, %cst_126 [1] : vector<8x16xf32> to vector<8xf32>
    %259 = vector.shape_cast %258 : vector<8xf32> to vector<8x1xf32>
    %260 = tpu.reciprocal %259 {approx = true} : vector<8x1xf32> -> vector<8x1xf32>
    %261 = vector.broadcast %260 : vector<8x1xf32> to vector<8x16xf32>
    %262 = arith.mulf %257, %261 : vector<8x16xf32>
    %cst_127 = arith.constant dense<0.000000e+00> : vector<8x32xf32>
    %263 = tpu.matmul %262, %246, %cst_127 {dimension_numbers = #tpu.dot_dimension_numbers<[1], [0], [0], [1], [0, 0, 1, 1], [], []>} : vector<8x16xf32>, vector<16x32xf32>, vector<8x32xf32> -> vector<8x32xf32>
    %264 = vector.extract_strided_slice %170 {offsets = [96, 0], sizes = [32, 128], strides = [1, 1]} : vector<128x128xf32> to vector<32x128xf32>
    %cst_128 = arith.constant dense<0.000000e+00> : vector<8x128xf32>
    %265 = tpu.matmul %263, %264, %cst_128 {dimension_numbers = #tpu.dot_dimension_numbers<[1], [0], [0], [1], [0, 0, 1, 1], [], []>} : vector<8x32xf32>, vector<32x128xf32>, vector<8x128xf32> -> vector<8x128xf32>
    %266 = arith.addf %243, %265 : vector<8x128xf32>
    %267 = arith.addf %138, %266 : vector<8x128xf32>
    %c0_129 = arith.constant 0 : index
    %c2_130 = arith.constant 2 : index
    %c0_131 = arith.constant 0 : index
    %c0_132 = arith.constant 0 : index
    %268 = vector.load %arg6[%c0_129, %c2_130, %c0_131, %c0_132] : memref<1x3x1x128xf32, #tpu.memory_space<vmem>>, vector<1x1x1x128xf32>
    %269 = vector.shape_cast %268 : vector<1x1x1x128xf32> to vector<1x128xf32>
    %c0_133 = arith.constant 0 : index
    %c2_134 = arith.constant 2 : index
    %c0_135 = arith.constant 0 : index
    %c0_136 = arith.constant 0 : index
    %270 = vector.load %arg7[%c0_133, %c2_134, %c0_135, %c0_136] : memref<1x3x1x128xf32, #tpu.memory_space<vmem>>, vector<1x1x1x128xf32>
    %271 = vector.shape_cast %270 : vector<1x1x1x128xf32> to vector<1x128xf32>
    %cst_137 = arith.constant dense<0.000000e+00> : vector<8xf32>
    %272 = vector.multi_reduction <add>, %267, %cst_137 [1] : vector<8x128xf32> to vector<8xf32>
    %273 = vector.shape_cast %272 : vector<8xf32> to vector<8x1xf32>
    %cst_138 = arith.constant 1.280000e+02 : f32
    %274 = vector.broadcast %cst_138 : f32 to vector<8x1xf32>
    %275 = arith.divf %273, %274 : vector<8x1xf32>
    %276 = vector.broadcast %275 : vector<8x1xf32> to vector<8x128xf32>
    %277 = arith.subf %267, %276 : vector<8x128xf32>
    %278 = arith.mulf %277, %277 : vector<8x128xf32>
    %cst_139 = arith.constant dense<0.000000e+00> : vector<8xf32>
    %279 = vector.multi_reduction <add>, %278, %cst_139 [1] : vector<8x128xf32> to vector<8xf32>
    %280 = vector.shape_cast %279 : vector<8xf32> to vector<8x1xf32>
    %cst_140 = arith.constant 0.00787401571 : f32
    %281 = vector.broadcast %cst_140 : f32 to vector<8x1xf32>
    %282 = arith.mulf %280, %281 : vector<8x1xf32>
    %283 = math.sqrt %282 : vector<8x1xf32>
    %cst_141 = arith.constant 9.99999997E-7 : f32
    %284 = vector.broadcast %cst_141 : f32 to vector<8x1xf32>
    %285 = arith.addf %283, %284 : vector<8x1xf32>
    %286 = vector.broadcast %285 : vector<8x1xf32> to vector<8x128xf32>
    %287 = arith.divf %277, %286 : vector<8x128xf32>
    %288 = vector.broadcast %269 : vector<1x128xf32> to vector<8x128xf32>
    %289 = arith.mulf %288, %287 : vector<8x128xf32>
    %290 = vector.broadcast %271 : vector<1x128xf32> to vector<8x128xf32>
    %291 = arith.addf %289, %290 : vector<8x128xf32>
    %c0_142 = arith.constant 0 : index
    %c0_143 = arith.constant 0 : index
    %c0_144 = arith.constant 0 : index
    %292 = vector.load %arg10[%c0_142, %c0_143, %c0_144] : memref<1x128x256xf32, #tpu.memory_space<vmem>>, vector<1x128x256xf32>
    %293 = vector.shape_cast %292 : vector<1x128x256xf32> to vector<128x256xf32>
    %cst_145 = arith.constant dense<0.000000e+00> : vector<8x256xf32>
    %294 = tpu.matmul %291, %293, %cst_145 {dimension_numbers = #tpu.dot_dimension_numbers<[1], [0], [0], [1], [0, 0, 1, 1], [], []>} : vector<8x128xf32>, vector<128x256xf32>, vector<8x256xf32> -> vector<8x256xf32>
    %c0_146 = arith.constant 0 : index
    %c0_147 = arith.constant 0 : index
    %c0_148 = arith.constant 0 : index
    %295 = vector.load %arg11[%c0_146, %c0_147, %c0_148] : memref<1x1x256xf32, #tpu.memory_space<vmem>>, vector<1x1x256xf32>
    %296 = vector.shape_cast %295 : vector<1x1x256xf32> to vector<1x256xf32>
    %297 = vector.broadcast %296 : vector<1x256xf32> to vector<8x256xf32>
    %298 = arith.addf %294, %297 : vector<8x256xf32>
    %cst_149 = arith.constant 0.000000e+00 : f32
    %299 = vector.broadcast %cst_149 : f32 to vector<8x256xf32>
    %300 = arith.maximumf %298, %299 : vector<8x256xf32>
    %c0_150 = arith.constant 0 : index
    %c0_151 = arith.constant 0 : index
    %c0_152 = arith.constant 0 : index
    %301 = vector.load %arg12[%c0_150, %c0_151, %c0_152] : memref<1x256x128xf32, #tpu.memory_space<vmem>>, vector<1x256x128xf32>
    %302 = vector.shape_cast %301 : vector<1x256x128xf32> to vector<256x128xf32>
    %cst_153 = arith.constant dense<0.000000e+00> : vector<8x128xf32>
    %303 = tpu.matmul %300, %302, %cst_153 {dimension_numbers = #tpu.dot_dimension_numbers<[1], [0], [0], [1], [0, 0, 1, 1], [], []>} : vector<8x256xf32>, vector<256x128xf32>, vector<8x128xf32> -> vector<8x128xf32>
    %304 = arith.addf %267, %303 : vector<8x128xf32>
    %c0_154 = arith.constant 0 : index
    %c0_155 = arith.constant 0 : index
    %c0_156 = arith.constant 0 : index
    %305 = vector.load %arg13[%c0_154, %c0_155, %c0_156] : memref<1x1x128xf32, #tpu.memory_space<vmem>>, vector<1x1x128xf32>
    %306 = vector.shape_cast %305 : vector<1x1x128xf32> to vector<1x128xf32>
    %307 = vector.broadcast %306 : vector<1x128xf32> to vector<8x128xf32>
    %308 = arith.addf %304, %307 : vector<8x128xf32>
    %c0_157 = arith.constant 0 : index
    %c0_158 = arith.constant 0 : index
    %309 = vector.load %arg17[%c0_157, %c0_158] : memref<8x128xf32, #tpu.memory_space<vmem>>, vector<8x128xf32>
    tpu.vector_store %arg17[%c0_157, %c0_158], %308 {strides = array<i32>} : memref<8x128xf32, #tpu.memory_space<vmem>>, vector<8x128xf32>,
    %c1_i32 = arith.constant 1 : i32
    %310 = arith.cmpi eq, %arg1, %c1_i32 : i32
    %311 = arith.extui %310 : i1 to i32
    %c0_i32_159 = arith.constant 0 : i32
    %312 = arith.cmpi ne, %311, %c0_i32_159 : i32
    scf.if %312 {
      %c0_160 = arith.constant 0 : index
      %c0_161 = arith.constant 0 : index
      %313 = vector.load %arg14[%c0_160, %c0_161] : memref<1x128xf32, #tpu.memory_space<vmem>>, vector<1x128xf32>
      %c0_162 = arith.constant 0 : index
      %c0_163 = arith.constant 0 : index
      %314 = vector.load %arg15[%c0_162, %c0_163] : memref<1x128xf32, #tpu.memory_space<vmem>>, vector<1x128xf32>
      %cst_164 = arith.constant dense<0.000000e+00> : vector<8xf32>
      %315 = vector.multi_reduction <add>, %308, %cst_164 [1] : vector<8x128xf32> to vector<8xf32>
      %316 = vector.shape_cast %315 : vector<8xf32> to vector<8x1xf32>
      %cst_165 = arith.constant 1.280000e+02 : f32
      %317 = vector.broadcast %cst_165 : f32 to vector<8x1xf32>
      %318 = arith.divf %316, %317 : vector<8x1xf32>
      %319 = vector.broadcast %318 : vector<8x1xf32> to vector<8x128xf32>
      %320 = arith.subf %308, %319 : vector<8x128xf32>
      %321 = arith.mulf %320, %320 : vector<8x128xf32>
      %cst_166 = arith.constant dense<0.000000e+00> : vector<8xf32>
      %322 = vector.multi_reduction <add>, %321, %cst_166 [1] : vector<8x128xf32> to vector<8xf32>
      %323 = vector.shape_cast %322 : vector<8xf32> to vector<8x1xf32>
      %cst_167 = arith.constant 0.00787401571 : f32
      %324 = vector.broadcast %cst_167 : f32 to vector<8x1xf32>
      %325 = arith.mulf %323, %324 : vector<8x1xf32>
      %326 = math.sqrt %325 : vector<8x1xf32>
      %cst_168 = arith.constant 9.99999997E-7 : f32
      %327 = vector.broadcast %cst_168 : f32 to vector<8x1xf32>
      %328 = arith.addf %326, %327 : vector<8x1xf32>
      %329 = vector.broadcast %328 : vector<8x1xf32> to vector<8x128xf32>
      %330 = arith.divf %320, %329 : vector<8x128xf32>
      %331 = vector.broadcast %313 : vector<1x128xf32> to vector<8x128xf32>
      %332 = arith.mulf %331, %330 : vector<8x128xf32>
      %333 = vector.broadcast %314 : vector<1x128xf32> to vector<8x128xf32>
      %334 = arith.addf %332, %333 : vector<8x128xf32>
      %c0_169 = arith.constant 0 : index
      %c0_170 = arith.constant 0 : index
      %c0_171 = arith.constant 0 : index
      %335 = vector.load %arg16[%c0_169, %c0_170, %c0_171] : memref<1x8x128xf32, #tpu.memory_space<vmem>>, vector<1x8x128xf32>
      %336 = vector.shape_cast %335 : vector<1x8x128xf32> to vector<8x128xf32>
      %337 = vector.shape_cast %334 : vector<8x128xf32> to vector<1x8x128xf32>
      tpu.vector_store %arg16[%c0_169, %c0_170, %c0_171], %337 {strides = array<i32>} : memref<1x8x128xf32, #tpu.memory_space<vmem>>, vector<1x8x128xf32>,
    } else {
    }
    return
  }
  func.func @transform_0(%arg0: i32, %arg1: i32) -> (i32, i32, i32) {
    %c0_i32 = arith.constant 0 : i32
    %c0_i32_0 = arith.constant 0 : i32
    %c0_i32_1 = arith.constant 0 : i32
    return %arg0, %c0_i32, %c0_i32_0 : i32, i32, i32
  }
  func.func @transform_1(%arg0: i32, %arg1: i32) -> (i32, i32, i32) {
    %c0_i32 = arith.constant 0 : i32
    %c0_i32_0 = arith.constant 0 : i32
    %c0_i32_1 = arith.constant 0 : i32
    return %arg0, %c0_i32, %c0_i32_0 : i32, i32, i32
  }
  func.func @transform_2(%arg0: i32, %arg1: i32) -> (i32, i32, i32) {
    %c0_i32 = arith.constant 0 : i32
    %c0_i32_0 = arith.constant 0 : i32
    %c0_i32_1 = arith.constant 0 : i32
    return %arg0, %c0_i32, %c0_i32_0 : i32, i32, i32
  }
  func.func @transform_3(%arg0: i32, %arg1: i32) -> (i32, i32, i32) {
    %c0_i32 = arith.constant 0 : i32
    %c0_i32_0 = arith.constant 0 : i32
    %c0_i32_1 = arith.constant 0 : i32
    return %arg0, %c0_i32, %c0_i32_0 : i32, i32, i32
  }
  func.func @transform_4(%arg0: i32, %arg1: i32) -> (i32, i32, i32, i32) {
    %c0_i32 = arith.constant 0 : i32
    %c0_i32_0 = arith.constant 0 : i32
    %c0_i32_1 = arith.constant 0 : i32
    %c0_i32_2 = arith.constant 0 : i32
    return %arg1, %c0_i32, %c0_i32_0, %c0_i32_1 : i32, i32, i32, i32
  }
  func.func @transform_5(%arg0: i32, %arg1: i32) -> (i32, i32, i32, i32) {
    %c0_i32 = arith.constant 0 : i32
    %c0_i32_0 = arith.constant 0 : i32
    %c0_i32_1 = arith.constant 0 : i32
    %c0_i32_2 = arith.constant 0 : i32
    return %arg1, %c0_i32, %c0_i32_0, %c0_i32_1 : i32, i32, i32, i32
  }
  func.func @transform_6(%arg0: i32, %arg1: i32) -> (i32, i32, i32, i32) {
    %c0_i32 = arith.constant 0 : i32
    %c0_i32_0 = arith.constant 0 : i32
    %c0_i32_1 = arith.constant 0 : i32
    %c0_i32_2 = arith.constant 0 : i32
    return %arg1, %c0_i32, %c0_i32_0, %c0_i32_1 : i32, i32, i32, i32
  }
  func.func @transform_7(%arg0: i32, %arg1: i32) -> (i32, i32, i32, i32) {
    %c0_i32 = arith.constant 0 : i32
    %c0_i32_0 = arith.constant 0 : i32
    %c0_i32_1 = arith.constant 0 : i32
    %c0_i32_2 = arith.constant 0 : i32
    return %arg1, %c0_i32, %c0_i32_0, %c0_i32_1 : i32, i32, i32, i32
  }
  func.func @transform_8(%arg0: i32, %arg1: i32) -> (i32, i32, i32) {
    %c0_i32 = arith.constant 0 : i32
    %c0_i32_0 = arith.constant 0 : i32
    %c0_i32_1 = arith.constant 0 : i32
    return %arg1, %c0_i32, %c0_i32_0 : i32, i32, i32
  }
  func.func @transform_9(%arg0: i32, %arg1: i32) -> (i32, i32, i32) {
    %c0_i32 = arith.constant 0 : i32
    %c0_i32_0 = arith.constant 0 : i32
    %c0_i32_1 = arith.constant 0 : i32
    return %arg1, %c0_i32, %c0_i32_0 : i32, i32, i32
  }
  func.func @transform_10(%arg0: i32, %arg1: i32) -> (i32, i32, i32) {
    %c0_i32 = arith.constant 0 : i32
    %c0_i32_0 = arith.constant 0 : i32
    %c0_i32_1 = arith.constant 0 : i32
    return %arg1, %c0_i32, %c0_i32_0 : i32, i32, i32
  }
  func.func @transform_11(%arg0: i32, %arg1: i32) -> (i32, i32, i32) {
    %c0_i32 = arith.constant 0 : i32
    %c0_i32_0 = arith.constant 0 : i32
    %c0_i32_1 = arith.constant 0 : i32
    return %arg1, %c0_i32, %c0_i32_0 : i32, i32, i32
  }
  func.func @transform_12(%arg0: i32, %arg1: i32) -> (i32, i32) {
    %c0_i32 = arith.constant 0 : i32
    %c0_i32_0 = arith.constant 0 : i32
    %c0_i32_1 = arith.constant 0 : i32
    return %c0_i32, %c0_i32_0 : i32, i32
  }
  func.func @transform_13(%arg0: i32, %arg1: i32) -> (i32, i32) {
    %c0_i32 = arith.constant 0 : i32
    %c0_i32_0 = arith.constant 0 : i32
    %c0_i32_1 = arith.constant 0 : i32
    return %c0_i32, %c0_i32_0 : i32, i32
  }
  func.func @transform_14(%arg0: i32, %arg1: i32) -> (i32, i32, i32) {
    %c0_i32 = arith.constant 0 : i32
    %c0_i32_0 = arith.constant 0 : i32
    %c0_i32_1 = arith.constant 0 : i32
    return %arg0, %c0_i32, %c0_i32_0 : i32, i32, i32
  }
}

</mosaic_0001>

<llo_original>
// kernel: tpu_custom_call.1
$region0: #{tpu_custom_call.1}
  #allocation0 [shape = 'u32[]', space=smem, size = 0x4, offset = 0x4, fixed_abs, tag = 'smem constant byte address 0x4 - core index']
  #allocation1 [shape = 'u32[144,128]{1,0:T(1,128)}', space=vmem, size = 0x12000, scoped, tag = 'internal scratch']
  #allocation2 [shape = 'f32[8,128]{1,0:T(8,128)}', space=vmem, size = 0x1000, scoped, tag = 'scratch operand']
  %s0 = inlined_call_operand.hbm [shape: f32[2,8,128], index: 0, kind: input, shape index: {}]
  %s1 = inlined_call_operand.hbm [shape: f32[2,16,128], index: 1, kind: input, shape index: {}]
  %s2 = inlined_call_operand.hbm [shape: f32[2,8,16], index: 2, kind: input, shape index: {}]
  %s3 = inlined_call_operand.hbm [shape: f32[2,8,8], index: 3, kind: input, shape index: {}]
  %s4 = inlined_call_operand.vmem [shape: f32[2,3,1,128], index: 4, kind: input, shape index: {}]
  %s5 = inlined_call_operand.hbm [shape: f32[2,3,1,128], index: 5, kind: input, shape index: {}]
  %s6 = inlined_call_operand.hbm [shape: f32[2,4,128,128], index: 6, kind: input, shape index: {}]
  %s7 = inlined_call_operand.hbm [shape: f32[2,4,128,128], index: 7, kind: input, shape index: {}]
  %s8 = inlined_call_operand.hbm [shape: f32[2,128,256], index: 8, kind: input, shape index: {}]
  %s9 = inlined_call_operand.vmem [shape: f32[2,1,256], index: 9, kind: input, shape index: {}]
  %s10 = inlined_call_operand.hbm [shape: f32[2,256,128], index: 10, kind: input, shape index: {}]
  %s11 = inlined_call_operand.vmem [shape: f32[2,1,128], index: 11, kind: input, shape index: {}]
  %s12 = inlined_call_operand.vmem [shape: f32[1,128], index: 12, kind: input, shape index: {}]
  %s13 = inlined_call_operand.vmem [shape: f32[1,128], index: 13, kind: input, shape index: {}]
  %s14 = inlined_call_operand.hbm [shape: f32[2,8,128], index: 14, kind: output, shape index: {}]
  %s15 = sld [smem:[#allocation0]]
  $region133: #{tpu_custom_call.1} parent=0
    _
  %s17 = ssub.s32 1, %s15
  %s18 = scalar_select 0, %s17, %s15
  $region1: #{tpu_custom_call.1} parent=0
    #allocation3 [shape = 'u8[8192]{0}', space=vmem, size = 0x2000, scoped, tag = 'input window, operand 0']
    #allocation4 [shape = 's32[2]{0}', space=sflag, size = 0x8, scoped, tag = 'scoped memory for tpu_custom_call.1']
    #allocation5 [shape = 's32[2]{0}', space=sflag, size = 0x8, scoped, tag = 'scoped memory for tpu_custom_call.1']
    #allocation6 [shape = 'u8[16384]{0}', space=vmem, size = 0x4000, scoped, tag = 'input window, operand 1']
    #allocation7 [shape = 's32[2]{0}', space=sflag, size = 0x8, scoped, tag = 'scoped memory for tpu_custom_call.1']
    #allocation8 [shape = 'u8[8192]{0}', space=vmem, size = 0x2000, scoped, tag = 'input window, operand 2']
    #allocation9 [shape = 'u8[8192]{0}', space=vmem, size = 0x2000, scoped, tag = 'input window, operand 3']
    #allocation10 [shape = 's32[2]{0}', space=sflag, size = 0x8, scoped, tag = 'scoped memory for tpu_custom_call.1']
    #allocation11 [shape = 'u8[3072]{0}', space=vmem, size = 0xc00, scoped, tag = 'input window, operand 5']
    #allocation12 [shape = 'u8[524288]{0}', space=vmem, size = 0x80000, scoped, tag = 'input window, operand 6']
    #allocation13 [shape = 's32[2]{0}', space=sflag, size = 0x8, scoped, tag = 'scoped memory for tpu_custom_call.1']
    #allocation14 [shape = 'u8[524288]{0}', space=vmem, size = 0x80000, scoped, tag = 'input window, operand 7']
    #allocation15 [shape = 'u8[262144]{0}', space=vmem, size = 0x40000, scoped, tag = 'input window, operand 8']
    #allocation16 [shape = 's32[2]{0}', space=sflag, size = 0x8, scoped, tag = 'scoped memory for tpu_custom_call.1']
    #allocation17 [shape = 'u8[262144]{0}', space=vmem, size = 0x40000, scoped, tag = 'input window, operand 10']
    #allocation18 [shape = 'u8[8192]{0}', space=vmem, size = 0x2000, scoped, tag = 'output window, operand 0']
    %19 = vsyncpa [#allocation4], 0
    %s20 = scalar_lea.sflag [#allocation4], 1
    %21 = vsyncpa %s20, 0
    %22 = vsyncpa [#allocation7], 0
    %s23 = scalar_lea.sflag [#allocation7], 1
    %24 = vsyncpa %s23, 0
    %25 = vsyncpa [#allocation10], 0
    %s26 = scalar_lea.sflag [#allocation10], 1
    %27 = vsyncpa %s26, 0
    %28 = vsyncpa [#allocation13], 0
    %s29 = scalar_lea.sflag [#allocation13], 1
    %30 = vsyncpa %s29, 0
    %31 = vsyncpa [#allocation16], 0
    %s32 = scalar_lea.sflag [#allocation16], 1
    %33 = vsyncpa %s32, 0
    %34 = vsyncpa [#allocation5], 0
    %s35 = scalar_lea.sflag [#allocation5], 1
    %36 = vsyncpa %s35, 0
    loop: start=0, step=1, limit=6
    $region2: #{tpu_custom_call.1} parent=1 // loop_pre_header
      _
    $region3: #{tpu_custom_call.1} parent=1 // loop_header
      %s38 = sphi 0, %s42
      %p39 = scmp.ge.s32.totalorder %s38, 6
      %s45 = sphi 0, %s57
      %s46 = sphi 0, %s53
      %s47 = sphi 0, %s45
      %s48 = sphi 0, %s46
      %s49 = sphi 0, %s47
      %s50 = sphi 0, %s48
      %s60 = sphi 0, %s62
      %s63 = sphi 0, %s60
      %s64 = sphi 0, %s63
      %s80 = sphi 0, %s64
      %s86 = sphi 0, %s88
      %s89 = sphi 0, %s86
      %s90 = sphi 0, %s89
      %s106 = sphi 0, %s90
      %s112 = sphi 0, %s114
      %s115 = sphi 0, %s112
      %s116 = sphi 0, %s115
      %s132 = sphi 0, %s116
      %s138 = sphi 0, %s140
      %s141 = sphi 0, %s138
      %s142 = sphi 0, %s141
      %s158 = sphi 0, %s142
      %s164 = sphi 0, %s166
      %s167 = sphi 0, %s164
      %s168 = sphi 0, %s167
      %s184 = sphi 0, %s168
      %s190 = sphi 0, %s192
      %s193 = sphi 0, %s190
      %s194 = sphi 0, %s193
      %s210 = sphi 0, %s194
      %s216 = sphi 0, %s218
      %s219 = sphi 0, %s216
      %s220 = sphi 0, %s219
      %s236 = sphi 0, %s220
      %s242 = sphi 0, %s244
      %s245 = sphi 0, %s242
      %s246 = sphi 0, %s245
      %s262 = sphi 0, %s246
      %s268 = sphi 0, %s270
      %s271 = sphi 0, %s268
      %s272 = sphi 0, %s271
      %s288 = sphi 0, %s272
      %s294 = sphi 0, %s296
      %s297 = sphi 0, %s294
      %s298 = sphi 0, %s297
      %s314 = sphi 0, %s298
      %s320 = sphi 0, %s322
      %s323 = sphi 0, %s320
      %s324 = sphi 0, %s323
      %s340 = sphi 0, %s324
      %s346 = sphi 0, %s348
      %s349 = sphi 0, %s346
      %s350 = sphi 0, %s349
      %s366 = sphi 0, %s350
      %s370 = sphi 0, %s370
      %s372 = sphi 0, %s370
      %s373 = sphi 0, %s372
      %s387 = sphi 0, %s373
      %s391 = sphi 0, %s391
      %s393 = sphi 0, %s391
      %s394 = sphi 0, %s393
      %s408 = sphi 0, %s394
      %s414 = sphi 0, %s416
      %s417 = sphi 0, %s414
      %s418 = sphi 0, %s417
      %s434 = sphi 0, %s418
    $region4: #{tpu_custom_call.1} parent=1 // loop_header_branch
      %41 = sbr.rel (%p39) target = $region8
    $region5: #{tpu_custom_call.1} parent=1 // loop_body
      %s43 = ssub.s32 %s38, 1
      %s44 = ssub.s32 %s38, 2
      %s51 = sadd.s32 1, %s46
      %p52 = scmp.ge.s32.totalorder %s51, 2
      %s53 = scalar_select %p52, 0, %s51
      %s54 = sadd.s32 1, %s45
      %s55 = scalar_select %p52, %s54, %s45
      %p56 = scmp.ge.s32.totalorder %s55, 2
      %s57 = scalar_select %p56, 0, %s55
      %s58 = ssub.s32 %s45, %s57
      %p59 = scmp.eq.s32.totalorder %s58, 0
      %s61 = sadd.s32 %s60, 1
      %s62 = scalar_select %p59, %s60, %s61
      %p65 = pneg %p59
      %p66 = scmp.eq.s32.totalorder %s38, 3
      %p67 = por %p65, %p66
      %p68 = scmp.ne.s32.totalorder %s60, %s63
      %p69 = scmp.eq.s32.totalorder %s38, 0
      %p70 = por %p68, %p69
      %p71 = scmp.ne.s32.totalorder %s60, %s63
      %p72 = scmp.eq.s32.totalorder %s43, 3
      %p73 = por %p71, %p72
      %p74 = scmp.ne.s32.totalorder %s63, %s64
      %p75 = scmp.eq.s32.totalorder %s43, 0
      %p76 = por %p74, %p75
      %p77 = scmp.ne.s32.totalorder %s63, %s64
      %p78 = scmp.eq.s32.totalorder %s44, 3
      %p79 = por %p77, %p78
      %p81 = scmp.ne.s32.totalorder %s64, %s80
      %p82 = scmp.eq.s32.totalorder %s44, 0
      %p83 = por %p81, %p82
      %s84 = ssub.s32 %s45, %s57
      %p85 = scmp.eq.s32.totalorder %s84, 0
      %s87 = sadd.s32 %s86, 1
      %s88 = scalar_select %p85, %s86, %s87
      %p91 = pneg %p85
      %p92 = scmp.eq.s32.totalorder %s38, 3
      %p93 = por %p91, %p92
      %p94 = scmp.ne.s32.totalorder %s86, %s89
      %p95 = scmp.eq.s32.totalorder %s38, 0
      %p96 = por %p94, %p95
      %p97 = scmp.ne.s32.totalorder %s86, %s89
      %p98 = scmp.eq.s32.totalorder %s43, 3
      %p99 = por %p97, %p98
      %p100 = scmp.ne.s32.totalorder %s89, %s90
      %p101 = scmp.eq.s32.totalorder %s43, 0
      %p102 = por %p100, %p101
      %p103 = scmp.ne.s32.totalorder %s89, %s90
      %p104 = scmp.eq.s32.totalorder %s44, 3
      %p105 = por %p103, %p104
      %p107 = scmp.ne.s32.totalorder %s90, %s106
      %p108 = scmp.eq.s32.totalorder %s44, 0
      %p109 = por %p107, %p108
      %s110 = ssub.s32 %s45, %s57
      %p111 = scmp.eq.s32.totalorder %s110, 0
      %s113 = sadd.s32 %s112, 1
      %s114 = scalar_select %p111, %s112, %s113
      %p117 = pneg %p111
      %p118 = scmp.eq.s32.totalorder %s38, 3
      %p119 = por %p117, %p118
      %p120 = scmp.ne.s32.totalorder %s112, %s115
      %p121 = scmp.eq.s32.totalorder %s38, 0
      %p122 = por %p120, %p121
      %p123 = scmp.ne.s32.totalorder %s112, %s115
      %p124 = scmp.eq.s32.totalorder %s43, 3
      %p125 = por %p123, %p124
      %p126 = scmp.ne.s32.totalorder %s115, %s116
      %p127 = scmp.eq.s32.totalorder %s43, 0
      %p128 = por %p126, %p127
      %p129 = scmp.ne.s32.totalorder %s115, %s116
      %p130 = scmp.eq.s32.totalorder %s44, 3
      %p131 = por %p129, %p130
      %p133 = scmp.ne.s32.totalorder %s116, %s132
      %p134 = scmp.eq.s32.totalorder %s44, 0
      %p135 = por %p133, %p134
      %s136 = ssub.s32 %s45, %s57
      %p137 = scmp.eq.s32.totalorder %s136, 0
      %s139 = sadd.s32 %s138, 1
      %s140 = scalar_select %p137, %s138, %s139
      %p143 = pneg %p137
      %p144 = scmp.eq.s32.totalorder %s38, 3
      %p145 = por %p143, %p144
      %p146 = scmp.ne.s32.totalorder %s138, %s141
      %p147 = scmp.eq.s32.totalorder %s38, 0
      %p148 = por %p146, %p147
      %p149 = scmp.ne.s32.totalorder %s138, %s141
      %p150 = scmp.eq.s32.totalorder %s43, 3
      %p151 = por %p149, %p150
      %p152 = scmp.ne.s32.totalorder %s141, %s142
      %p153 = scmp.eq.s32.totalorder %s43, 0
      %p154 = por %p152, %p153
      %p155 = scmp.ne.s32.totalorder %s141, %s142
      %p156 = scmp.eq.s32.totalorder %s44, 3
      %p157 = por %p155, %p156
      %p159 = scmp.ne.s32.totalorder %s142, %s158
      %p160 = scmp.eq.s32.totalorder %s44, 0
      %p161 = por %p159, %p160
      %s162 = ssub.s32 %s46, %s53
      %p163 = scmp.eq.s32.totalorder %s162, 0
      %s165 = sadd.s32 %s164, 1
      %s166 = scalar_select %p163, %s164, %s165
      %p169 = pneg %p163
      %p170 = scmp.eq.s32.totalorder %s38, 3
      %p171 = por %p169, %p170
      %p172 = scmp.ne.s32.totalorder %s164, %s167
      %p173 = scmp.eq.s32.totalorder %s38, 0
      %p174 = por %p172, %p173
      %p175 = scmp.ne.s32.totalorder %s164, %s167
      %p176 = scmp.eq.s32.totalorder %s43, 3
      %p177 = por %p175, %p176
      %p178 = scmp.ne.s32.totalorder %s167, %s168
      %p179 = scmp.eq.s32.totalorder %s43, 0
      %p180 = por %p178, %p179
      %p181 = scmp.ne.s32.totalorder %s167, %s168
      %p182 = scmp.eq.s32.totalorder %s44, 3
      %p183 = por %p181, %p182
      %p185 = scmp.ne.s32.totalorder %s168, %s184
      %p186 = scmp.eq.s32.totalorder %s44, 0
      %p187 = por %p185, %p186
      %s188 = ssub.s32 %s46, %s53
      %p189 = scmp.eq.s32.totalorder %s188, 0
      %s191 = sadd.s32 %s190, 1
      %s192 = scalar_select %p189, %s190, %s191
      %p195 = pneg %p189
      %p196 = scmp.eq.s32.totalorder %s38, 3
      %p197 = por %p195, %p196
      %p198 = scmp.ne.s32.totalorder %s190, %s193
      %p199 = scmp.eq.s32.totalorder %s38, 0
      %p200 = por %p198, %p199
      %p201 = scmp.ne.s32.totalorder %s190, %s193
      %p202 = scmp.eq.s32.totalorder %s43, 3
      %p203 = por %p201, %p202
      %p204 = scmp.ne.s32.totalorder %s193, %s194
      %p205 = scmp.eq.s32.totalorder %s43, 0
      %p206 = por %p204, %p205
      %p207 = scmp.ne.s32.totalorder %s193, %s194
      %p208 = scmp.eq.s32.totalorder %s44, 3
      %p209 = por %p207, %p208
      %p211 = scmp.ne.s32.totalorder %s194, %s210
      %p212 = scmp.eq.s32.totalorder %s44, 0
      %p213 = por %p211, %p212
      %s214 = ssub.s32 %s46, %s53
      %p215 = scmp.eq.s32.totalorder %s214, 0
      %s217 = sadd.s32 %s216, 1
      %s218 = scalar_select %p215, %s216, %s217
      %p221 = pneg %p215
      %p222 = scmp.eq.s32.totalorder %s38, 3
      %p223 = por %p221, %p222
      %p224 = scmp.ne.s32.totalorder %s216, %s219
      %p225 = scmp.eq.s32.totalorder %s38, 0
      %p226 = por %p224, %p225
      %p227 = scmp.ne.s32.totalorder %s216, %s219
      %p228 = scmp.eq.s32.totalorder %s43, 3
      %p229 = por %p227, %p228
      %p230 = scmp.ne.s32.totalorder %s219, %s220
      %p231 = scmp.eq.s32.totalorder %s43, 0
      %p232 = por %p230, %p231
      %p233 = scmp.ne.s32.totalorder %s219, %s220
      %p234 = scmp.eq.s32.totalorder %s44, 3
      %p235 = por %p233, %p234
      %p237 = scmp.ne.s32.totalorder %s220, %s236
      %p238 = scmp.eq.s32.totalorder %s44, 0
      %p239 = por %p237, %p238
      %s240 = ssub.s32 %s46, %s53
      %p241 = scmp.eq.s32.totalorder %s240, 0
      %s243 = sadd.s32 %s242, 1
      %s244 = scalar_select %p241, %s242, %s243
      %p247 = pneg %p241
      %p248 = scmp.eq.s32.totalorder %s38, 3
      %p249 = por %p247, %p248
      %p250 = scmp.ne.s32.totalorder %s242, %s245
      %p251 = scmp.eq.s32.totalorder %s38, 0
      %p252 = por %p250, %p251
      %p253 = scmp.ne.s32.totalorder %s242, %s245
      %p254 = scmp.eq.s32.totalorder %s43, 3
      %p255 = por %p253, %p254
      %p256 = scmp.ne.s32.totalorder %s245, %s246
      %p257 = scmp.eq.s32.totalorder %s43, 0
      %p258 = por %p256, %p257
      %p259 = scmp.ne.s32.totalorder %s245, %s246
      %p260 = scmp.eq.s32.totalorder %s44, 3
      %p261 = por %p259, %p260
      %p263 = scmp.ne.s32.totalorder %s246, %s262
      %p264 = scmp.eq.s32.totalorder %s44, 0
      %p265 = por %p263, %p264
      %s266 = ssub.s32 %s46, %s53
      %p267 = scmp.eq.s32.totalorder %s266, 0
      %s269 = sadd.s32 %s268, 1
      %s270 = scalar_select %p267, %s268, %s269
      %p273 = pneg %p267
      %p274 = scmp.eq.s32.totalorder %s38, 3
      %p275 = por %p273, %p274
      %p276 = scmp.ne.s32.totalorder %s268, %s271
      %p277 = scmp.eq.s32.totalorder %s38, 0
      %p278 = por %p276, %p277
      %p279 = scmp.ne.s32.totalorder %s268, %s271
      %p280 = scmp.eq.s32.totalorder %s43, 3
      %p281 = por %p279, %p280
      %p282 = scmp.ne.s32.totalorder %s271, %s272
      %p283 = scmp.eq.s32.totalorder %s43, 0
      %p284 = por %p282, %p283
      %p285 = scmp.ne.s32.totalorder %s271, %s272
      %p286 = scmp.eq.s32.totalorder %s44, 3
      %p287 = por %p285, %p286
      %p289 = scmp.ne.s32.totalorder %s272, %s288
      %p290 = scmp.eq.s32.totalorder %s44, 0
      %p291 = por %p289, %p290
      %s292 = ssub.s32 %s46, %s53
      %p293 = scmp.eq.s32.totalorder %s292, 0
      %s295 = sadd.s32 %s294, 1
      %s296 = scalar_select %p293, %s294, %s295
      %p299 = pneg %p293
      %p300 = scmp.eq.s32.totalorder %s38, 3
      %p301 = por %p299, %p300
      %p302 = scmp.ne.s32.totalorder %s294, %s297
      %p303 = scmp.eq.s32.totalorder %s38, 0
      %p304 = por %p302, %p303
      %p305 = scmp.ne.s32.totalorder %s294, %s297
      %p306 = scmp.eq.s32.totalorder %s43, 3
      %p307 = por %p305, %p306
      %p308 = scmp.ne.s32.totalorder %s297, %s298
      %p309 = scmp.eq.s32.totalorder %s43, 0
      %p310 = por %p308, %p309
      %p311 = scmp.ne.s32.totalorder %s297, %s298
      %p312 = scmp.eq.s32.totalorder %s44, 3
      %p313 = por %p311, %p312
      %p315 = scmp.ne.s32.totalorder %s298, %s314
      %p316 = scmp.eq.s32.totalorder %s44, 0
      %p317 = por %p315, %p316
      %s318 = ssub.s32 %s46, %s53
      %p319 = scmp.eq.s32.totalorder %s318, 0
      %s321 = sadd.s32 %s320, 1
      %s322 = scalar_select %p319, %s320, %s321
      %p325 = pneg %p319
      %p326 = scmp.eq.s32.totalorder %s38, 3
      %p327 = por %p325, %p326
      %p328 = scmp.ne.s32.totalorder %s320, %s323
      %p329 = scmp.eq.s32.totalorder %s38, 0
      %p330 = por %p328, %p329
      %p331 = scmp.ne.s32.totalorder %s320, %s323
      %p332 = scmp.eq.s32.totalorder %s43, 3
      %p333 = por %p331, %p332
      %p334 = scmp.ne.s32.totalorder %s323, %s324
      %p335 = scmp.eq.s32.totalorder %s43, 0
      %p336 = por %p334, %p335
      %p337 = scmp.ne.s32.totalorder %s323, %s324
      %p338 = scmp.eq.s32.totalorder %s44, 3
      %p339 = por %p337, %p338
      %p341 = scmp.ne.s32.totalorder %s324, %s340
      %p342 = scmp.eq.s32.totalorder %s44, 0
      %p343 = por %p341, %p342
      %s344 = ssub.s32 %s46, %s53
      %p345 = scmp.eq.s32.totalorder %s344, 0
      %s347 = sadd.s32 %s346, 1
      %s348 = scalar_select %p345, %s346, %s347
      %p351 = pneg %p345
      %p352 = scmp.eq.s32.totalorder %s38, 3
      %p353 = por %p351, %p352
      %p354 = scmp.ne.s32.totalorder %s346, %s349
      %p355 = scmp.eq.s32.totalorder %s38, 0
      %p356 = por %p354, %p355
      %p357 = scmp.ne.s32.totalorder %s346, %s349
      %p358 = scmp.eq.s32.totalorder %s43, 3
      %p359 = por %p357, %p358
      %p360 = scmp.ne.s32.totalorder %s349, %s350
      %p361 = scmp.eq.s32.totalorder %s43, 0
      %p362 = por %p360, %p361
      %p363 = scmp.ne.s32.totalorder %s349, %s350
      %p364 = scmp.eq.s32.totalorder %s44, 3
      %p365 = por %p363, %p364
      %p367 = scmp.ne.s32.totalorder %s350, %s366
      %p368 = scmp.eq.s32.totalorder %s44, 0
      %p369 = por %p367, %p368
      %s371 = sadd.s32 %s370, 1
      %p374 = scmp.eq.s32.totalorder %s38, 3
      %p375 = scmp.ne.s32.totalorder %s370, %s372
      %p376 = scmp.eq.s32.totalorder %s38, 0
      %p377 = por %p375, %p376
      %p378 = scmp.ne.s32.totalorder %s370, %s372
      %p379 = scmp.eq.s32.totalorder %s43, 3
      %p380 = por %p378, %p379
      %p381 = scmp.ne.s32.totalorder %s372, %s373
      %p382 = scmp.eq.s32.totalorder %s43, 0
      %p383 = por %p381, %p382
      %p384 = scmp.ne.s32.totalorder %s372, %s373
      %p385 = scmp.eq.s32.totalorder %s44, 3
      %p386 = por %p384, %p385
      %p388 = scmp.ne.s32.totalorder %s373, %s387
      %p389 = scmp.eq.s32.totalorder %s44, 0
      %p390 = por %p388, %p389
      %s392 = sadd.s32 %s391, 1
      %p395 = scmp.eq.s32.totalorder %s38, 3
      %p396 = scmp.ne.s32.totalorder %s391, %s393
      %p397 = scmp.eq.s32.totalorder %s38, 0
      %p398 = por %p396, %p397
      %p399 = scmp.ne.s32.totalorder %s391, %s393
      %p400 = scmp.eq.s32.totalorder %s43, 3
      %p401 = por %p399, %p400
      %p402 = scmp.ne.s32.totalorder %s393, %s394
      %p403 = scmp.eq.s32.totalorder %s43, 0
      %p404 = por %p402, %p403
      %p405 = scmp.ne.s32.totalorder %s393, %s394
      %p406 = scmp.eq.s32.totalorder %s44, 3
      %p407 = por %p405, %p406
      %p409 = scmp.ne.s32.totalorder %s394, %s408
      %p410 = scmp.eq.s32.totalorder %s44, 0
      %p411 = por %p409, %p410
      %s412 = ssub.s32 %s45, %s57
      %p413 = scmp.eq.s32.totalorder %s412, 0
      %s415 = sadd.s32 %s414, 1
      %s416 = scalar_select %p413, %s414, %s415
      %p419 = pneg %p413
      %p420 = scmp.eq.s32.totalorder %s38, 3
      %p421 = por %p419, %p420
      %p422 = scmp.ne.s32.totalorder %s414, %s417
      %p423 = scmp.eq.s32.totalorder %s38, 0
      %p424 = por %p422, %p423
      %p425 = scmp.ne.s32.totalorder %s414, %s417
      %p426 = scmp.eq.s32.totalorder %s43, 3
      %p427 = por %p425, %p426
      %p428 = scmp.ne.s32.totalorder %s417, %s418
      %p429 = scmp.eq.s32.totalorder %s43, 0
      %p430 = por %p428, %p429
      %p431 = scmp.ne.s32.totalorder %s417, %s418
      %p432 = scmp.eq.s32.totalorder %s44, 3
      %p433 = por %p431, %p432
      %p435 = scmp.ne.s32.totalorder %s418, %s434
      %p436 = scmp.eq.s32.totalorder %s44, 0
      %p437 = por %p435, %p436
      %p438 = scmp.le.s32.totalorder 1, %s38
      %p439 = scmp.lt.s32.totalorder %s38, 5
      %p440 = pnand %p438, %p439
      %p441 = pneg %p440
      // Predicated region
      $region9: #{tpu_custom_call.1} parent=5 // pred_check
        _
      $region10: #{tpu_custom_call.1} parent=5 // pred_check_branch
        %443 = sbr.rel (%p440) target = $region12
      $region11: #{tpu_custom_call.1} parent=5 // pred_region
        %s444 = ssub.s32 %s38, 1
        // Predicated region
        $region13: #{tpu_custom_call.1} parent=11 // pred_check
          %p445 = pneg %p383
        $region14: #{tpu_custom_call.1} parent=11 // pred_check_branch
          %447 = sbr.rel (%p445) target = $region16
        $region15: #{tpu_custom_call.1} parent=11 // pred_region
          _
        $region16: #{tpu_custom_call.1} parent=11 // pred_fallthru
          _
        // Predicated region
        $region17: #{tpu_custom_call.1} parent=11 // pred_check
          %p448 = pneg %p404
        $region18: #{tpu_custom_call.1} parent=11 // pred_check_branch
          %450 = sbr.rel (%p448) target = $region20
        $region19: #{tpu_custom_call.1} parent=11 // pred_region
          _
        $region20: #{tpu_custom_call.1} parent=11 // pred_fallthru
          _
      $region12: #{tpu_custom_call.1} parent=5 // pred_fallthru
        _
      %p451 = scmp.lt.s32.totalorder %s38, 4
      // Predicated region
      $region21: #{tpu_custom_call.1} parent=5 // pred_check
        %p452 = pneg %p451
      $region22: #{tpu_custom_call.1} parent=5 // pred_check_branch
        %454 = sbr.rel (%p452) target = $region24
      $region23: #{tpu_custom_call.1} parent=5 // pred_region
        // Predicated region
        $region25: #{tpu_custom_call.1} parent=23 // pred_check
          %p455 = pneg %p70
        $region26: #{tpu_custom_call.1} parent=23 // pred_check_branch
          %457 = sbr.rel (%p455) target = $region28
        $region27: #{tpu_custom_call.1} parent=23 // pred_region
          %s458 = sand.u32 %s60, 1
          %s459 = scalar_lea.sflag [#allocation4], %s458
          %s460 = sand.u32 %s60, 1
          %s461 = smul.addr %s460, 8
          %s462 = scalar_lea.vmem [#allocation3], %s461
          %s464 = ssub.s32 128, 128
          %465 = vsyncadd %s459, %s464
          %s466 = smul.addr %s45, 128
          %s467 = scalar_lea.hbm %s0, %s466
          %s469 = sshll.u32 %s462, 4
          %s470 = int_to_ptr.vmem [resolvable:$true] %s469
          %472 = dma.hbm_to_vmem [thread:$0]  %s467, 128, %s470, %s459
        $region28: #{tpu_custom_call.1} parent=23 // pred_fallthru
          _
        // Predicated region
        $region29: #{tpu_custom_call.1} parent=23 // pred_check
          %p473 = pneg %p96
        $region30: #{tpu_custom_call.1} parent=23 // pred_check_branch
          %475 = sbr.rel (%p473) target = $region32
        $region31: #{tpu_custom_call.1} parent=23 // pred_region
          %s476 = sand.u32 %s38, 1
          %s477 = scalar_lea.sflag [#allocation7], %s476
          %s478 = sand.u32 %s86, 1
          %s479 = smul.addr %s478, 16
          %s480 = scalar_lea.vmem [#allocation6], %s479
          %s482 = ssub.s32 256, 256
          %483 = vsyncadd %s477, %s482
          %s484 = smul.addr %s45, 2
          %s485 = smul.addr %s484, 128
          %s486 = scalar_lea.hbm %s1, %s485
          %s487 = sshll.u32 %s480, 4
          %s488 = int_to_ptr.vmem [resolvable:$true] %s487
          %493 = dma.hbm_to_vmem [thread:$0]  %s486, 256, %s488, %s477, 128, 128, 8
        $region32: #{tpu_custom_call.1} parent=23 // pred_fallthru
          _
        // Predicated region
        $region33: #{tpu_custom_call.1} parent=23 // pred_check
          %p494 = pneg %p122
        $region34: #{tpu_custom_call.1} parent=23 // pred_check_branch
          %496 = sbr.rel (%p494) target = $region36
        $region35: #{tpu_custom_call.1} parent=23 // pred_region
          %s497 = sand.u32 %s38, 1
          %s498 = scalar_lea.sflag [#allocation7], %s497
          %s499 = sand.u32 %s112, 1
          %s500 = smul.addr %s499, 8
          %s501 = scalar_lea.vmem [#allocation8], %s500
          %s503 = ssub.s32 128, 128
          %504 = vsyncadd %s498, %s503
          %s505 = smul.addr %s45, 128
          %s506 = scalar_lea.hbm %s2, %s505
          %s508 = sshll.u32 %s501, 4
          %s509 = int_to_ptr.vmem [resolvable:$true] %s508
          %511 = dma.hbm_to_vmem [thread:$0]  %s506, 128, %s509, %s498
        $region36: #{tpu_custom_call.1} parent=23 // pred_fallthru
          _
        // Predicated region
        $region37: #{tpu_custom_call.1} parent=23 // pred_check
          %p512 = pneg %p148
        $region38: #{tpu_custom_call.1} parent=23 // pred_check_branch
          %514 = sbr.rel (%p512) target = $region40
        $region39: #{tpu_custom_call.1} parent=23 // pred_region
          %s515 = sand.u32 %s38, 1
          %s516 = scalar_lea.sflag [#allocation10], %s515
          %s517 = sand.u32 %s138, 1
          %s518 = smul.addr %s517, 8
          %s519 = scalar_lea.vmem [#allocation9], %s518
          %s521 = ssub.s32 128, 128
          %522 = vsyncadd %s516, %s521
          %s523 = smul.addr %s45, 128
          %s524 = scalar_lea.hbm %s3, %s523
          %s526 = sshll.u32 %s519, 4
          %s527 = int_to_ptr.vmem [resolvable:$true] %s526
          %529 = dma.hbm_to_vmem [thread:$0]  %s524, 128, %s527, %s516
        $region40: #{tpu_custom_call.1} parent=23 // pred_fallthru
          _
        // Predicated region
        $region41: #{tpu_custom_call.1} parent=23 // pred_check
          %p530 = pneg %p174
        $region42: #{tpu_custom_call.1} parent=23 // pred_check_branch
          %532 = sbr.rel (%p530) target = $region44
        $region43: #{tpu_custom_call.1} parent=23 // pred_region
          %p533 = scmp.lt.s32.totalorder %s46, 1
          %s534 = scalar_select %p533, %s46, 1
          %s535 = smul.addr %s534, 3
          %s536 = scalar_lea.vmem %s4, %s535
        $region44: #{tpu_custom_call.1} parent=23 // pred_fallthru
          _
        // Predicated region
        $region45: #{tpu_custom_call.1} parent=23 // pred_check
          %p537 = pneg %p200
        $region46: #{tpu_custom_call.1} parent=23 // pred_check_branch
          %539 = sbr.rel (%p537) target = $region48
        $region47: #{tpu_custom_call.1} parent=23 // pred_region
          %s540 = sand.u32 %s38, 1
          %s541 = scalar_lea.sflag [#allocation10], %s540
          %s542 = sand.u32 %s190, 1
          %s543 = smul.addr %s542, 3
          %s544 = scalar_lea.vmem [#allocation11], %s543
          %s546 = ssub.s32 48, 48
          %547 = vsyncadd %s541, %s546
          %s548 = smul.addr %s46, 3
          %s549 = smul.addr %s548, 16
          %s550 = scalar_lea.hbm %s5, %s549
          %s551 = sshll.u32 %s544, 4
          %s552 = int_to_ptr.vmem [resolvable:$true] %s551
          %557 = dma.hbm_to_vmem [thread:$0]  %s550, 48, %s552, %s541, 16, 16, 1
        $region48: #{tpu_custom_call.1} parent=23 // pred_fallthru
          _
        // Predicated region
        $region49: #{tpu_custom_call.1} parent=23 // pred_check
          %p558 = pneg %p226
        $region50: #{tpu_custom_call.1} parent=23 // pred_check_branch
          %560 = sbr.rel (%p558) target = $region52
        $region51: #{tpu_custom_call.1} parent=23 // pred_region
          %s561 = sand.u32 %s38, 1
          %s562 = scalar_lea.sflag [#allocation13], %s561
          %s563 = sand.u32 %s216, 1
          %s564 = smul.addr %s563, 512
          %s565 = scalar_lea.vmem [#allocation12], %s564
          %s567 = ssub.s32 8192, 8192
          %568 = vsyncadd %s562, %s567
          %s569 = smul.addr %s46, 64
          %s570 = smul.addr %s569, 128
          %s571 = scalar_lea.hbm %s6, %s570
          %s572 = sshll.u32 %s565, 4
          %s573 = int_to_ptr.vmem [resolvable:$true] %s572
          %578 = dma.hbm_to_vmem [thread:$0]  %s571, 8192, %s573, %s562, 128, 128, 8
        $region52: #{tpu_custom_call.1} parent=23 // pred_fallthru
          _
        // Predicated region
        $region53: #{tpu_custom_call.1} parent=23 // pred_check
          %p579 = pneg %p252
        $region54: #{tpu_custom_call.1} parent=23 // pred_check_branch
          %581 = sbr.rel (%p579) target = $region56
        $region55: #{tpu_custom_call.1} parent=23 // pred_region
          %s582 = sand.u32 %s38, 1
          %s583 = scalar_lea.sflag [#allocation13], %s582
          %s584 = sand.u32 %s242, 1
          %s585 = smul.addr %s584, 512
          %s586 = scalar_lea.vmem [#allocation14], %s585
          %s588 = ssub.s32 8192, 8192
          %589 = vsyncadd %s583, %s588
          %s590 = smul.addr %s46, 64
          %s591 = smul.addr %s590, 128
          %s592 = scalar_lea.hbm %s7, %s591
          %s593 = sshll.u32 %s586, 4
          %s594 = int_to_ptr.vmem [resolvable:$true] %s593
          %599 = dma.hbm_to_vmem [thread:$0]  %s592, 8192, %s594, %s583, 128, 128, 8
        $region56: #{tpu_custom_call.1} parent=23 // pred_fallthru
          _
        // Predicated region
        $region57: #{tpu_custom_call.1} parent=23 // pred_check
          %p600 = pneg %p278
        $region58: #{tpu_custom_call.1} parent=23 // pred_check_branch
          %602 = sbr.rel (%p600) target = $region60
        $region59: #{tpu_custom_call.1} parent=23 // pred_region
          %s603 = sand.u32 %s38, 1
          %s604 = scalar_lea.sflag [#allocation16], %s603
          %s605 = sand.u32 %s268, 1
          %s606 = smul.addr %s605, 256
          %s607 = scalar_lea.vmem [#allocation15], %s606
          %s609 = ssub.s32 4096, 4096
          %610 = vsyncadd %s604, %s609
          %s611 = smul.addr %s46, 32
          %s612 = smul.addr %s611, 128
          %s613 = scalar_lea.hbm %s8, %s612
          %s614 = sshll.u32 %s607, 4
          %s615 = int_to_ptr.vmem [resolvable:$true] %s614
          %620 = dma.hbm_to_vmem [thread:$0]  %s613, 4096, %s615, %s604, 256, 256, 16
        $region60: #{tpu_custom_call.1} parent=23 // pred_fallthru
          _
        // Predicated region
        $region61: #{tpu_custom_call.1} parent=23 // pred_check
          %p621 = pneg %p304
        $region62: #{tpu_custom_call.1} parent=23 // pred_check_branch
          %623 = sbr.rel (%p621) target = $region64
        $region63: #{tpu_custom_call.1} parent=23 // pred_region
          %p624 = scmp.lt.s32.totalorder %s46, 1
          %s625 = scalar_select %p624, %s46, 1
          %s626 = smul.addr %s625, 2
          %s627 = scalar_lea.vmem %s9, %s626
        $region64: #{tpu_custom_call.1} parent=23 // pred_fallthru
          _
        // Predicated region
        $region65: #{tpu_custom_call.1} parent=23 // pred_check
          %p628 = pneg %p330
        $region66: #{tpu_custom_call.1} parent=23 // pred_check_branch
          %630 = sbr.rel (%p628) target = $region68
        $region67: #{tpu_custom_call.1} parent=23 // pred_region
          %s631 = sand.u32 %s38, 1
          %s632 = scalar_lea.sflag [#allocation16], %s631
          %s633 = sand.u32 %s320, 1
          %s634 = smul.addr %s633, 256
          %s635 = scalar_lea.vmem [#allocation17], %s634
          %s637 = ssub.s32 4096, 4096
          %638 = vsyncadd %s632, %s637
          %s639 = smul.addr %s46, 32
          %s640 = smul.addr %s639, 128
          %s641 = scalar_lea.hbm %s10, %s640
          %s642 = sshll.u32 %s635, 4
          %s643 = int_to_ptr.vmem [resolvable:$true] %s642
          %648 = dma.hbm_to_vmem [thread:$0]  %s641, 4096, %s643, %s632, 128, 128, 8
        $region68: #{tpu_custom_call.1} parent=23 // pred_fallthru
          _
        // Predicated region
        $region69: #{tpu_custom_call.1} parent=23 // pred_check
          %p649 = pneg %p356
        $region70: #{tpu_custom_call.1} parent=23 // pred_check_branch
          %651 = sbr.rel (%p649) target = $region72
        $region71: #{tpu_custom_call.1} parent=23 // pred_region
          %p652 = scmp.lt.s32.totalorder %s46, 1
          %s653 = scalar_select %p652, %s46, 1
          %s654 = scalar_lea.vmem %s11, %s653
        $region72: #{tpu_custom_call.1} parent=23 // pred_fallthru
          _
      $region24: #{tpu_custom_call.1} parent=5 // pred_fallthru
        _
      %p655 = scmp.le.s32.totalorder 1, %s38
      %p656 = scmp.lt.s32.totalorder %s38, 5
      %p657 = pnand %p655, %p656
      %p658 = pneg %p657
      // Predicated region
      $region73: #{tpu_custom_call.1} parent=5 // pred_check
        _
      $region74: #{tpu_custom_call.1} parent=5 // pred_check_branch
        %660 = sbr.rel (%p657) target = $region76
      $region75: #{tpu_custom_call.1} parent=5 // pred_region
        %s661 = ssub.s32 %s38, 1
        %s662 = sand.u32 %s63, 1
        %s663 = scalar_lea.sflag [#allocation4], %s662
        %s664 = sand.u32 %s63, 1
        %s665 = smul.addr %s664, 8
        %s666 = scalar_lea.vmem [#allocation3], %s665
        // Predicated region
        $region77: #{tpu_custom_call.1} parent=75 // pred_check
          %p667 = pneg %p76
        $region78: #{tpu_custom_call.1} parent=75 // pred_check_branch
          %669 = sbr.rel (%p667) target = $region80
        $region79: #{tpu_custom_call.1} parent=75 // pred_region
          %670 = dma.done %s663, 128
        $region80: #{tpu_custom_call.1} parent=75 // pred_fallthru
          _
        %s671 = sand.u32 %s43, 1
        %s672 = scalar_lea.sflag [#allocation7], %s671
        %s673 = sand.u32 %s89, 1
        %s674 = smul.addr %s673, 16
        %s675 = scalar_lea.vmem [#allocation6], %s674
        // Predicated region
        $region81: #{tpu_custom_call.1} parent=75 // pred_check
          %p676 = pneg %p102
        $region82: #{tpu_custom_call.1} parent=75 // pred_check_branch
          %678 = sbr.rel (%p676) target = $region84
        $region83: #{tpu_custom_call.1} parent=75 // pred_region
          %679 = dma.done %s672, 256
        $region84: #{tpu_custom_call.1} parent=75 // pred_fallthru
          _
        %s680 = sand.u32 %s43, 1
        %s681 = scalar_lea.sflag [#allocation7], %s680
        %s682 = sand.u32 %s115, 1
        %s683 = smul.addr %s682, 8
        %s684 = scalar_lea.vmem [#allocation8], %s683
        // Predicated region
        $region85: #{tpu_custom_call.1} parent=75 // pred_check
          %p685 = pneg %p128
        $region86: #{tpu_custom_call.1} parent=75 // pred_check_branch
          %687 = sbr.rel (%p685) target = $region88
        $region87: #{tpu_custom_call.1} parent=75 // pred_region
          %688 = dma.done %s681, 128
        $region88: #{tpu_custom_call.1} parent=75 // pred_fallthru
          _
        %s689 = sand.u32 %s43, 1
        %s690 = scalar_lea.sflag [#allocation10], %s689
        %s691 = sand.u32 %s141, 1
        %s692 = smul.addr %s691, 8
        %s693 = scalar_lea.vmem [#allocation9], %s692
        // Predicated region
        $region89: #{tpu_custom_call.1} parent=75 // pred_check
          %p694 = pneg %p154
        $region90: #{tpu_custom_call.1} parent=75 // pred_check_branch
          %696 = sbr.rel (%p694) target = $region92
        $region91: #{tpu_custom_call.1} parent=75 // pred_region
          %697 = dma.done %s690, 128
        $region92: #{tpu_custom_call.1} parent=75 // pred_fallthru
          _
        %s698 = sand.u32 %s43, 1
        %s699 = scalar_lea.sflag [#allocation10], %s698
        %s700 = sand.u32 %s193, 1
        %s701 = smul.addr %s700, 3
        %s702 = scalar_lea.vmem [#allocation11], %s701
        // Predicated region
        $region93: #{tpu_custom_call.1} parent=75 // pred_check
          %p703 = pneg %p206
        $region94: #{tpu_custom_call.1} parent=75 // pred_check_branch
          %705 = sbr.rel (%p703) target = $region96
        $region95: #{tpu_custom_call.1} parent=75 // pred_region
          %706 = dma.done %s699, 48
        $region96: #{tpu_custom_call.1} parent=75 // pred_fallthru
          _
        %s707 = sand.u32 %s43, 1
        %s708 = scalar_lea.sflag [#allocation13], %s707
        %s709 = sand.u32 %s219, 1
        %s710 = smul.addr %s709, 512
        %s711 = scalar_lea.vmem [#allocation12], %s710
        // Predicated region
        $region97: #{tpu_custom_call.1} parent=75 // pred_check
          %p712 = pneg %p232
        $region98: #{tpu_custom_call.1} parent=75 // pred_check_branch
          %714 = sbr.rel (%p712) target = $region100
        $region99: #{tpu_custom_call.1} parent=75 // pred_region
          %715 = dma.done %s708, 8192
        $region100: #{tpu_custom_call.1} parent=75 // pred_fallthru
          _
        %s716 = sand.u32 %s43, 1
        %s717 = scalar_lea.sflag [#allocation13], %s716
        %s718 = sand.u32 %s245, 1
        %s719 = smul.addr %s718, 512
        %s720 = scalar_lea.vmem [#allocation14], %s719
        // Predicated region
        $region101: #{tpu_custom_call.1} parent=75 // pred_check
          %p721 = pneg %p258
        $region102: #{tpu_custom_call.1} parent=75 // pred_check_branch
          %723 = sbr.rel (%p721) target = $region104
        $region103: #{tpu_custom_call.1} parent=75 // pred_region
          %724 = dma.done %s717, 8192
        $region104: #{tpu_custom_call.1} parent=75 // pred_fallthru
          _
        %s725 = sand.u32 %s43, 1
        %s726 = scalar_lea.sflag [#allocation16], %s725
        %s727 = sand.u32 %s271, 1
        %s728 = smul.addr %s727, 256
        %s729 = scalar_lea.vmem [#allocation15], %s728
        // Predicated region
        $region105: #{tpu_custom_call.1} parent=75 // pred_check
          %p730 = pneg %p284
        $region106: #{tpu_custom_call.1} parent=75 // pred_check_branch
          %732 = sbr.rel (%p730) target = $region108
        $region107: #{tpu_custom_call.1} parent=75 // pred_region
          %733 = dma.done %s726, 4096
        $region108: #{tpu_custom_call.1} parent=75 // pred_fallthru
          _
        %s734 = sand.u32 %s43, 1
        %s735 = scalar_lea.sflag [#allocation16], %s734
        %s736 = sand.u32 %s323, 1
        %s737 = smul.addr %s736, 256
        %s738 = scalar_lea.vmem [#allocation17], %s737
        // Predicated region
        $region109: #{tpu_custom_call.1} parent=75 // pred_check
          %p739 = pneg %p336
        $region110: #{tpu_custom_call.1} parent=75 // pred_check_branch
          %741 = sbr.rel (%p739) target = $region112
        $region111: #{tpu_custom_call.1} parent=75 // pred_region
          %742 = dma.done %s735, 4096
        $region112: #{tpu_custom_call.1} parent=75 // pred_fallthru
          _
        %s743 = sand.u32 %s63, 1
        %s744 = scalar_lea.sflag [#allocation4], %s743
        %s745 = sand.u32 %s63, 1
        %s746 = smul.addr %s745, 8
        %s747 = scalar_lea.vmem [#allocation3], %s746
        %p748 = pneg %p76
        %p749 = pneg %p73
        %s750 = sand.u32 %s43, 1
        %s751 = scalar_lea.sflag [#allocation7], %s750
        %s752 = sand.u32 %s89, 1
        %s753 = smul.addr %s752, 16
        %s754 = scalar_lea.vmem [#allocation6], %s753
        %p755 = pneg %p102
        %p756 = pneg %p99
        %s757 = sand.u32 %s43, 1
        %s758 = scalar_lea.sflag [#allocation7], %s757
        %s759 = sand.u32 %s115, 1
        %s760 = smul.addr %s759, 8
        %s761 = scalar_lea.vmem [#allocation8], %s760
        %p762 = pneg %p128
        %p763 = pneg %p125
        %s764 = sand.u32 %s43, 1
        %s765 = scalar_lea.sflag [#allocation10], %s764
        %s766 = sand.u32 %s141, 1
        %s767 = smul.addr %s766, 8
        %s768 = scalar_lea.vmem [#allocation9], %s767
        %p769 = pneg %p154
        %p770 = pneg %p151
        %p771 = scmp.lt.s32.totalorder %s48, 1
        %s772 = scalar_select %p771, %s48, 1
        %s773 = smul.addr %s772, 3
        %s774 = scalar_lea.vmem %s4, %s773
        %p775 = pneg %p180
        %p776 = pneg %p177
        %s777 = sand.u32 %s43, 1
        %s778 = scalar_lea.sflag [#allocation10], %s777
        %s779 = sand.u32 %s193, 1
        %s780 = smul.addr %s779, 3
        %s781 = scalar_lea.vmem [#allocation11], %s780
        %p782 = pneg %p206
        %p783 = pneg %p203
        %s784 = sand.u32 %s43, 1
        %s785 = scalar_lea.sflag [#allocation13], %s784
        %s786 = sand.u32 %s219, 1
        %s787 = smul.addr %s786, 512
        %s788 = scalar_lea.vmem [#allocation12], %s787
        %p789 = pneg %p232
        %p790 = pneg %p229
        %s791 = sand.u32 %s43, 1
        %s792 = scalar_lea.sflag [#allocation13], %s791
        %s793 = sand.u32 %s245, 1
        %s794 = smul.addr %s793, 512
        %s795 = scalar_lea.vmem [#allocation14], %s794
        %p796 = pneg %p258
        %p797 = pneg %p255
        %s798 = sand.u32 %s43, 1
        %s799 = scalar_lea.sflag [#allocation16], %s798
        %s800 = sand.u32 %s271, 1
        %s801 = smul.addr %s800, 256
        %s802 = scalar_lea.vmem [#allocation15], %s801
        %p803 = pneg %p284
        %p804 = pneg %p281
        %p805 = scmp.lt.s32.totalorder %s48, 1
        %s806 = scalar_select %p805, %s48, 1
        %s807 = smul.addr %s806, 2
        %s808 = scalar_lea.vmem %s9, %s807
        %p809 = pneg %p310
        %p810 = pneg %p307
        %s811 = sand.u32 %s43, 1
        %s812 = scalar_lea.sflag [#allocation16], %s811
        %s813 = sand.u32 %s323, 1
        %s814 = smul.addr %s813, 256
        %s815 = scalar_lea.vmem [#allocation17], %s814
        %p816 = pneg %p336
        %p817 = pneg %p333
        %p818 = scmp.lt.s32.totalorder %s48, 1
        %s819 = scalar_select %p818, %s48, 1
        %s820 = scalar_lea.vmem %s11, %s819
        %p821 = pneg %p362
        %p822 = pneg %p359
        %p823 = pneg %p383
        %p824 = pneg %p380
        %p825 = pneg %p404
        %p826 = pneg %p401
        %p827 = pneg %p430
        %p828 = pneg %p427
        %s829 = sand.u32 %s417, 1
        %s830 = scalar_lea.sflag [#allocation5], %s829
        %s831 = sand.u32 %s417, 1
        %s832 = smul.addr %s831, 8
        %s833 = scalar_lea.vmem [#allocation18], %s832
        %p834 = scmp.lt.s32.totalorder %s48, 1
        %s835 = scalar_select %p834, %s48, 1
        %s836 = smul.addr %s835, 3
        %s837 = scalar_lea.vmem %s4, %s836
        %p838 = scmp.lt.s32.totalorder %s48, 1
        %s839 = scalar_select %p838, %s48, 1
        %s840 = smul.addr %s839, 2
        %s841 = scalar_lea.vmem %s9, %s840
        %p842 = scmp.lt.s32.totalorder %s48, 1
        %s843 = scalar_select %p842, %s48, 1
        %s844 = scalar_lea.vmem %s11, %s843
        %p845 = scmp.eq.s32.totalorder %s48, 0
        // Predicated region
        $region113: #{tpu_custom_call.1} parent=75 // pred_check
          %p846 = pneg %p845
        $region114: #{tpu_custom_call.1} parent=75 // pred_check_branch
          %848 = sbr.rel (%p846) target = $region116
        $region115: #{tpu_custom_call.1} parent=75 // pred_region
          %v849 = vld [vmem:[%s666] sm:$0xff]
          %850 = vst [vmem:[#allocation2] sm:$0xff] %v849
        $region116: #{tpu_custom_call.1} parent=75 // pred_fallthru
          _
        %v851 = vld [vmem:[#allocation2] sm:$0xff]
        %v852 = vld [vmem:[%s675] sm:$0xff]
        %v853 = vld [vmem:[%s675 + $0x8] sm:$0xff]
        %v854 = vld [vmem:[%s684] sm:$0xff]
        %v855 = vld [vmem:[%s693] sm:$0xff]
        %v856 = vld [vmem:[%s837] sm:$0x1]
        %v857 = vld [vmem:[%s702] sm:$0x1]
        %858 = vadd.xlane.f32.xlu0 %v851
        %v859 = vpop.xlane.xlu0 %858
        %v860 = vrcp.pop 128.0
        %v861 = vmul.f32 %v859, %v860
        %v862 = vsub.f32 %v851, %v861
        %v863 = vmul.f32 %v862, %v862
        %864 = vadd.xlane.f32.xlu0 %v863
        %v865 = vpop.xlane.xlu0 %864
        %v866 = vmul.f32 %v865, 0.007874016
        %v867 = vrsqrt.pop %v866
        %v868 = vmul.f32 %v866, %v867
        %vm869 = vcmp.eq.f32.partialorder %v866, inf
        %v870 = vsel %vm869, %v866, %v868
        %vm871 = vcmp.eq.f32.partialorder %v866, 0.0
        %v872 = vand.u32 %v866, 2147483648
        %v873 = vsel %vm871, %v872, %v870
        %v874 = vadd.f32 %v873, 1e-06
        %v875 = vrcp.pop %v874
        %v876 = vmul.f32 %v862, %v875
        %v878 = vlaneseq
        %v879 = vshrl.u32 %v878, 7
        %v880 = vsub.s32 0, %v879
        %v881 = vrot.slane %v856, %v880
        %v883 = vmul.f32 %v881, %v876
        %v885 = vlaneseq
        %v886 = vshrl.u32 %v885, 7
        %v887 = vsub.s32 0, %v886
        %v888 = vrot.slane %v857, %v887
        %v890 = vadd.f32 %v883, %v888
        %v891 = vld [vmem:[%s711] sm:$0xff]
        %v892 = vld [vmem:[%s711 + $0x8] sm:$0xff]
        %v893 = vld [vmem:[%s711 + $0x10] sm:$0xff]
        %v894 = vld [vmem:[%s711 + $0x18] sm:$0xff]
        %v895 = vld [vmem:[%s711 + $0x20] sm:$0xff]
        %v896 = vld [vmem:[%s711 + $0x28] sm:$0xff]
        %v897 = vld [vmem:[%s711 + $0x30] sm:$0xff]
        %v898 = vld [vmem:[%s711 + $0x38] sm:$0xff]
        %v899 = vld [vmem:[%s711 + $0x40] sm:$0xff]
        %v900 = vld [vmem:[%s711 + $0x48] sm:$0xff]
        %v901 = vld [vmem:[%s711 + $0x50] sm:$0xff]
        %v902 = vld [vmem:[%s711 + $0x58] sm:$0xff]
        %v903 = vld [vmem:[%s711 + $0x60] sm:$0xff]
        %v904 = vld [vmem:[%s711 + $0x68] sm:$0xff]
        %v905 = vld [vmem:[%s711 + $0x70] sm:$0xff]
        %v906 = vld [vmem:[%s711 + $0x78] sm:$0xff]
        %s907 = scalar_lea.vmem %s711, 128 [#allocation12]
        %v908 = vld [vmem:[%s907] sm:$0xff]
        %v909 = vld [vmem:[%s907 + $0x8] sm:$0xff]
        %v910 = vld [vmem:[%s907 + $0x10] sm:$0xff]
        %v911 = vld [vmem:[%s907 + $0x18] sm:$0xff]
        %v912 = vld [vmem:[%s907 + $0x20] sm:$0xff]
        %v913 = vld [vmem:[%s907 + $0x28] sm:$0xff]
        %v914 = vld [vmem:[%s907 + $0x30] sm:$0xff]
        %v915 = vld [vmem:[%s907 + $0x38] sm:$0xff]
        %v916 = vld [vmem:[%s907 + $0x40] sm:$0xff]
        %v917 = vld [vmem:[%s907 + $0x48] sm:$0xff]
        %v918 = vld [vmem:[%s907 + $0x50] sm:$0xff]
        %v919 = vld [vmem:[%s907 + $0x58] sm:$0xff]
        %v920 = vld [vmem:[%s907 + $0x60] sm:$0xff]
        %v921 = vld [vmem:[%s907 + $0x68] sm:$0xff]
        %v922 = vld [vmem:[%s907 + $0x70] sm:$0xff]
        %v923 = vld [vmem:[%s907 + $0x78] sm:$0xff]
        %s924 = scalar_lea.vmem %s711, 256 [#allocation12]
        %v925 = vld [vmem:[%s924] sm:$0xff]
        %v926 = vld [vmem:[%s924 + $0x8] sm:$0xff]
        %v927 = vld [vmem:[%s924 + $0x10] sm:$0xff]
        %v928 = vld [vmem:[%s924 + $0x18] sm:$0xff]
        %v929 = vld [vmem:[%s924 + $0x20] sm:$0xff]
        %v930 = vld [vmem:[%s924 + $0x28] sm:$0xff]
        %v931 = vld [vmem:[%s924 + $0x30] sm:$0xff]
        %v932 = vld [vmem:[%s924 + $0x38] sm:$0xff]
        %v933 = vld [vmem:[%s924 + $0x40] sm:$0xff]
        %v934 = vld [vmem:[%s924 + $0x48] sm:$0xff]
        %v935 = vld [vmem:[%s924 + $0x50] sm:$0xff]
        %v936 = vld [vmem:[%s924 + $0x58] sm:$0xff]
        %v937 = vld [vmem:[%s924 + $0x60] sm:$0xff]
        %v938 = vld [vmem:[%s924 + $0x68] sm:$0xff]
        %v939 = vld [vmem:[%s924 + $0x70] sm:$0xff]
        %v940 = vld [vmem:[%s924 + $0x78] sm:$0xff]
        %s941 = scalar_lea.vmem %s711, 384 [#allocation12]
        %v942 = vld [vmem:[%s941] sm:$0xff]
        %v943 = vld [vmem:[%s941 + $0x8] sm:$0xff]
        %v944 = vld [vmem:[%s941 + $0x10] sm:$0xff]
        %v945 = vld [vmem:[%s941 + $0x18] sm:$0xff]
        %v946 = vld [vmem:[%s941 + $0x20] sm:$0xff]
        %v947 = vld [vmem:[%s941 + $0x28] sm:$0xff]
        %v948 = vld [vmem:[%s941 + $0x30] sm:$0xff]
        %v949 = vld [vmem:[%s941 + $0x38] sm:$0xff]
        %v950 = vld [vmem:[%s941 + $0x40] sm:$0xff]
        %v951 = vld [vmem:[%s941 + $0x48] sm:$0xff]
        %v952 = vld [vmem:[%s941 + $0x50] sm:$0xff]
        %v953 = vld [vmem:[%s941 + $0x58] sm:$0xff]
        %v954 = vld [vmem:[%s941 + $0x60] sm:$0xff]
        %v955 = vld [vmem:[%s941 + $0x68] sm:$0xff]
        %v956 = vld [vmem:[%s941 + $0x70] sm:$0xff]
        %v957 = vld [vmem:[%s941 + $0x78] sm:$0xff]
        %958 = vmatprep.subr.mxu0 0.0
        %959 = vmatpush1.msra.mxu0 %v906
        %960 = vmatprep.subr.mxu0 0.0
        %961 = vmatpush1.msra.mxu0 %v905
        %962 = vmatprep.subr.mxu0 0.0
        %963 = vmatpush1.msra.mxu0 %v904
        %964 = vmatprep.subr.mxu0 0.0
        %965 = vmatpush1.msra.mxu0 %v903
        %966 = vmatprep.subr.mxu0 0.0
        %967 = vmatpush1.msra.mxu0 %v902
        %968 = vmatprep.subr.mxu0 0.0
        %969 = vmatpush1.msra.mxu0 %v901
        %970 = vmatprep.subr.mxu0 0.0
        %971 = vmatpush1.msra.mxu0 %v900
        %972 = vmatprep.subr.mxu0 0.0
        %973 = vmatpush1.msra.mxu0 %v899
        %974 = vmatprep.subr.mxu0 0.0
        %975 = vmatpush1.msra.mxu0 %v898
        %976 = vmatprep.subr.mxu0 0.0
        %977 = vmatpush1.msra.mxu0 %v897
        %978 = vmatprep.subr.mxu0 0.0
        %979 = vmatpush1.msra.mxu0 %v896
        %980 = vmatprep.subr.mxu0 0.0
        %981 = vmatpush1.msra.mxu0 %v895
        %982 = vmatprep.subr.mxu0 0.0
        %983 = vmatpush1.msra.mxu0 %v894
        %984 = vmatprep.subr.mxu0 0.0
        %985 = vmatpush1.msra.mxu0 %v893
        %986 = vmatprep.subr.mxu0 0.0
        %987 = vmatpush1.msra.mxu0 %v892
        %988 = vmatprep.subr.mxu0 0.0
        %989 = vmatpush1.msra.mxu0 %v891
        %990 = vmatprep.subr.mxu0 0.0
        %991 = vmatpush2.msra.mxu0 0.0
        %992 = vmatprep.subr.mxu0 0.0
        %993 = vmatpush2.msra.mxu0 0.0
        %994 = vmatprep.subr.mxu0 0.0
        %995 = vmatpush2.msra.mxu0 0.0
        %996 = vmatprep.subr.mxu0 0.0
        %997 = vmatpush2.msra.mxu0 0.0
        %998 = vmatprep.subr.mxu0 0.0
        %999 = vmatpush2.msra.mxu0 0.0
        %1000 = vmatprep.subr.mxu0 0.0
        %1001 = vmatpush2.msra.mxu0 0.0
        %1002 = vmatprep.subr.mxu0 0.0
        %1003 = vmatpush2.msra.mxu0 0.0
        %1004 = vmatprep.subr.mxu0 0.0
        %1005 = vmatpush2.msra.mxu0 0.0
        %1006 = vmatprep.subr.mxu0 0.0
        %1007 = vmatpush2.msra.mxu0 0.0
        %1008 = vmatprep.subr.mxu0 0.0
        %1009 = vmatpush2.msra.mxu0 0.0
        %1010 = vmatprep.subr.mxu0 0.0
        %1011 = vmatpush2.msra.mxu0 0.0
        %1012 = vmatprep.subr.mxu0 0.0
        %1013 = vmatpush2.msra.mxu0 0.0
        %1014 = vmatprep.subr.mxu0 0.0
        %1015 = vmatpush2.msra.mxu0 0.0
        %1016 = vmatprep.subr.mxu0 0.0
        %1017 = vmatpush2.msra.mxu0 0.0
        %1018 = vmatprep.subr.mxu0 0.0
        %1019 = vmatpush2.msra.mxu0 0.0
        %1020 = vmatprep.subr.mxu0 0.0
        %1021 = vmatpush2.msra.mxu0 0.0
        %1022 = vmatprep.mubr.f32.mxu0 0.0
        %1023 = vmatmul.mubr.f32.gmra.mxu0 %v890
        %v1024 = vpop.f32.mrf.mxu0
        %v1025 = vadd.f32 0.0, %v1024
        %v1026 = vpop.f32.mrf.mxu0
        %1027 = vdwg.mxu0
        %1028 = vmatprep.subr.mxu0 0.0
        %1029 = vmatpush1.msra.mxu0 %v923
        %1030 = vmatprep.subr.mxu0 0.0
        %1031 = vmatpush1.msra.mxu0 %v922
        %1032 = vmatprep.subr.mxu0 0.0
        %1033 = vmatpush1.msra.mxu0 %v921
        %1034 = vmatprep.subr.mxu0 0.0
        %1035 = vmatpush1.msra.mxu0 %v920
        %1036 = vmatprep.subr.mxu0 0.0
        %1037 = vmatpush1.msra.mxu0 %v919
        %1038 = vmatprep.subr.mxu0 0.0
        %1039 = vmatpush1.msra.mxu0 %v918
        %1040 = vmatprep.subr.mxu0 0.0
        %1041 = vmatpush1.msra.mxu0 %v917
        %1042 = vmatprep.subr.mxu0 0.0
        %1043 = vmatpush1.msra.mxu0 %v916
        %1044 = vmatprep.subr.mxu0 0.0
        %1045 = vmatpush1.msra.mxu0 %v915
        %1046 = vmatprep.subr.mxu0 0.0
        %1047 = vmatpush1.msra.mxu0 %v914
        %1048 = vmatprep.subr.mxu0 0.0
        %1049 = vmatpush1.msra.mxu0 %v913
        %1050 = vmatprep.subr.mxu0 0.0
        %1051 = vmatpush1.msra.mxu0 %v912
        %1052 = vmatprep.subr.mxu0 0.0
        %1053 = vmatpush1.msra.mxu0 %v911
        %1054 = vmatprep.subr.mxu0 0.0
        %1055 = vmatpush1.msra.mxu0 %v910
        %1056 = vmatprep.subr.mxu0 0.0
        %1057 = vmatpush1.msra.mxu0 %v909
        %1058 = vmatprep.subr.mxu0 0.0
        %1059 = vmatpush1.msra.mxu0 %v908
        %1060 = vmatprep.subr.mxu0 0.0
        %1061 = vmatpush2.msra.mxu0 0.0
        %1062 = vmatprep.subr.mxu0 0.0
        %1063 = vmatpush2.msra.mxu0 0.0
        %1064 = vmatprep.subr.mxu0 0.0
        %1065 = vmatpush2.msra.mxu0 0.0
        %1066 = vmatprep.subr.mxu0 0.0
        %1067 = vmatpush2.msra.mxu0 0.0
        %1068 = vmatprep.subr.mxu0 0.0
        %1069 = vmatpush2.msra.mxu0 0.0
        %1070 = vmatprep.subr.mxu0 0.0
        %1071 = vmatpush2.msra.mxu0 0.0
        %1072 = vmatprep.subr.mxu0 0.0
        %1073 = vmatpush2.msra.mxu0 0.0
        %1074 = vmatprep.subr.mxu0 0.0
        %1075 = vmatpush2.msra.mxu0 0.0
        %1076 = vmatprep.subr.mxu0 0.0
        %1077 = vmatpush2.msra.mxu0 0.0
        %1078 = vmatprep.subr.mxu0 0.0
        %1079 = vmatpush2.msra.mxu0 0.0
        %1080 = vmatprep.subr.mxu0 0.0
        %1081 = vmatpush2.msra.mxu0 0.0
        %1082 = vmatprep.subr.mxu0 0.0
        %1083 = vmatpush2.msra.mxu0 0.0
        %1084 = vmatprep.subr.mxu0 0.0
        %1085 = vmatpush2.msra.mxu0 0.0
        %1086 = vmatprep.subr.mxu0 0.0
        %1087 = vmatpush2.msra.mxu0 0.0
        %1088 = vmatprep.subr.mxu0 0.0
        %1089 = vmatpush2.msra.mxu0 0.0
        %1090 = vmatprep.subr.mxu0 0.0
        %1091 = vmatpush2.msra.mxu0 0.0
        %1092 = vmatprep.mubr.f32.mxu0 0.0
        %1093 = vmatmul.mubr.f32.gmra.mxu0 %v890
        %v1094 = vpop.f32.mrf.mxu0
        %v1095 = vadd.f32 0.0, %v1094
        %v1096 = vpop.f32.mrf.mxu0
        %1097 = vdwg.mxu0
        %1098 = vmatprep.subr.mxu0 0.0
        %1099 = vmatpush1.msra.mxu0 %v940
        %1100 = vmatprep.subr.mxu0 0.0
        %1101 = vmatpush1.msra.mxu0 %v939
        %1102 = vmatprep.subr.mxu0 0.0
        %1103 = vmatpush1.msra.mxu0 %v938
        %1104 = vmatprep.subr.mxu0 0.0
        %1105 = vmatpush1.msra.mxu0 %v937
        %1106 = vmatprep.subr.mxu0 0.0
        %1107 = vmatpush1.msra.mxu0 %v936
        %1108 = vmatprep.subr.mxu0 0.0
        %1109 = vmatpush1.msra.mxu0 %v935
        %1110 = vmatprep.subr.mxu0 0.0
        %1111 = vmatpush1.msra.mxu0 %v934
        %1112 = vmatprep.subr.mxu0 0.0
        %1113 = vmatpush1.msra.mxu0 %v933
        %1114 = vmatprep.subr.mxu0 0.0
        %1115 = vmatpush1.msra.mxu0 %v932
        %1116 = vmatprep.subr.mxu0 0.0
        %1117 = vmatpush1.msra.mxu0 %v931
        %1118 = vmatprep.subr.mxu0 0.0
        %1119 = vmatpush1.msra.mxu0 %v930
        %1120 = vmatprep.subr.mxu0 0.0
        %1121 = vmatpush1.msra.mxu0 %v929
        %1122 = vmatprep.subr.mxu0 0.0
        %1123 = vmatpush1.msra.mxu0 %v928
        %1124 = vmatprep.subr.mxu0 0.0
        %1125 = vmatpush1.msra.mxu0 %v927
        %1126 = vmatprep.subr.mxu0 0.0
        %1127 = vmatpush1.msra.mxu0 %v926
        %1128 = vmatprep.subr.mxu0 0.0
        %1129 = vmatpush1.msra.mxu0 %v925
        %1130 = vmatprep.subr.mxu0 0.0
        %1131 = vmatpush2.msra.mxu0 0.0
        %1132 = vmatprep.subr.mxu0 0.0
        %1133 = vmatpush2.msra.mxu0 0.0
        %1134 = vmatprep.subr.mxu0 0.0
        %1135 = vmatpush2.msra.mxu0 0.0
        %1136 = vmatprep.subr.mxu0 0.0
        %1137 = vmatpush2.msra.mxu0 0.0
        %1138 = vmatprep.subr.mxu0 0.0
        %1139 = vmatpush2.msra.mxu0 0.0
        %1140 = vmatprep.subr.mxu0 0.0
        %1141 = vmatpush2.msra.mxu0 0.0
        %1142 = vmatprep.subr.mxu0 0.0
        %1143 = vmatpush2.msra.mxu0 0.0
        %1144 = vmatprep.subr.mxu0 0.0
        %1145 = vmatpush2.msra.mxu0 0.0
        %1146 = vmatprep.subr.mxu0 0.0
        %1147 = vmatpush2.msra.mxu0 0.0
        %1148 = vmatprep.subr.mxu0 0.0
        %1149 = vmatpush2.msra.mxu0 0.0
        %1150 = vmatprep.subr.mxu0 0.0
        %1151 = vmatpush2.msra.mxu0 0.0
        %1152 = vmatprep.subr.mxu0 0.0
        %1153 = vmatpush2.msra.mxu0 0.0
        %1154 = vmatprep.subr.mxu0 0.0
        %1155 = vmatpush2.msra.mxu0 0.0
        %1156 = vmatprep.subr.mxu0 0.0
        %1157 = vmatpush2.msra.mxu0 0.0
        %1158 = vmatprep.subr.mxu0 0.0
        %1159 = vmatpush2.msra.mxu0 0.0
        %1160 = vmatprep.subr.mxu0 0.0
        %1161 = vmatpush2.msra.mxu0 0.0
        %1162 = vmatprep.mubr.f32.mxu0 0.0
        %1163 = vmatmul.mubr.f32.gmra.mxu0 %v890
        %v1164 = vpop.f32.mrf.mxu0
        %v1165 = vadd.f32 0.0, %v1164
        %v1166 = vpop.f32.mrf.mxu0
        %1167 = vdwg.mxu0
        %vm1168 = vcmp.eq.f32.partialorder %v855, 0.0
        %vm1169 = vcmask 261120
        %v1171 = vsel %vm1169, %v1025, 0
        %v1174 = vsel %vm1169, %v1095, 0
        %1176 = vmatprep.subr.mxu0 0.0
        %1177 = vmatpush1.xpose.msra.mxu0 0.0
        %1178 = vmatprep.subr.mxu0 0.0
        %1179 = vmatpush1.xpose.msra.mxu0 0.0
        %1180 = vmatprep.subr.mxu0 0.0
        %1181 = vmatpush1.xpose.msra.mxu0 0.0
        %1182 = vmatprep.subr.mxu0 0.0
        %1183 = vmatpush1.xpose.msra.mxu0 0.0
        %1184 = vmatprep.subr.mxu0 0.0
        %1185 = vmatpush1.xpose.msra.mxu0 0.0
        %1186 = vmatprep.subr.mxu0 0.0
        %1187 = vmatpush1.xpose.msra.mxu0 0.0
        %1188 = vmatprep.subr.mxu0 0.0
        %1189 = vmatpush1.xpose.msra.mxu0 0.0
        %1190 = vmatprep.subr.mxu0 0.0
        %1191 = vmatpush1.xpose.msra.mxu0 0.0
        %1192 = vmatprep.subr.mxu0 0.0
        %1193 = vmatpush1.xpose.msra.mxu0 0.0
        %1194 = vmatprep.subr.mxu0 0.0
        %1195 = vmatpush1.xpose.msra.mxu0 0.0
        %1196 = vmatprep.subr.mxu0 0.0
        %1197 = vmatpush1.xpose.msra.mxu0 0.0
        %1198 = vmatprep.subr.mxu0 0.0
        %1199 = vmatpush1.xpose.msra.mxu0 0.0
        %1200 = vmatprep.subr.mxu0 0.0
        %1201 = vmatpush1.xpose.msra.mxu0 0.0
        %1202 = vmatprep.subr.mxu0 0.0
        %1203 = vmatpush1.xpose.msra.mxu0 0.0
        %1204 = vmatprep.subr.mxu0 0.0
        %1205 = vmatpush1.xpose.msra.mxu0 0.0
        %1206 = vmatprep.subr.mxu0 0.0
        %1207 = vmatpush1.xpose.msra.mxu0 %v1174
        %1208 = vmatprep.subr.mxu0 0.0
        %1209 = vmatpush2.xpose.msra.mxu0 0.0
        %1210 = vmatprep.subr.mxu0 0.0
        %1211 = vmatpush2.xpose.msra.mxu0 0.0
        %1212 = vmatprep.subr.mxu0 0.0
        %1213 = vmatpush2.xpose.msra.mxu0 0.0
        %1214 = vmatprep.subr.mxu0 0.0
        %1215 = vmatpush2.xpose.msra.mxu0 0.0
        %1216 = vmatprep.subr.mxu0 0.0
        %1217 = vmatpush2.xpose.msra.mxu0 0.0
        %1218 = vmatprep.subr.mxu0 0.0
        %1219 = vmatpush2.xpose.msra.mxu0 0.0
        %1220 = vmatprep.subr.mxu0 0.0
        %1221 = vmatpush2.xpose.msra.mxu0 0.0
        %1222 = vmatprep.subr.mxu0 0.0
        %1223 = vmatpush2.xpose.msra.mxu0 0.0
        %1224 = vmatprep.subr.mxu0 0.0
        %1225 = vmatpush2.xpose.msra.mxu0 0.0
        %1226 = vmatprep.subr.mxu0 0.0
        %1227 = vmatpush2.xpose.msra.mxu0 0.0
        %1228 = vmatprep.subr.mxu0 0.0
        %1229 = vmatpush2.xpose.msra.mxu0 0.0
        %1230 = vmatprep.subr.mxu0 0.0
        %1231 = vmatpush2.xpose.msra.mxu0 0.0
        %1232 = vmatprep.subr.mxu0 0.0
        %1233 = vmatpush2.xpose.msra.mxu0 0.0
        %1234 = vmatprep.subr.mxu0 0.0
        %1235 = vmatpush2.xpose.msra.mxu0 0.0
        %1236 = vmatprep.subr.mxu0 0.0
        %1237 = vmatpush2.xpose.msra.mxu0 0.0
        %1238 = vmatprep.subr.mxu0 0.0
        %1239 = vmatpush2.xpose.msra.mxu0 0.0
        %1240 = vmatprep.mubr.f32.mxu0 0.0
        %1241 = vmatmul.mubr.f32.gmra.mxu0 %v1171
        %v1242 = vpop.f32.mrf.mxu0
        %v1243 = vadd.f32 0.0, %v1242
        %v1244 = vpop.f32.mrf.mxu0
        %1245 = vdwg.mxu0
        %v1246 = vmul.f32 %v1243, 0.17677669
        %v1247 = vsel %vm1168, -1e+09, %v1246
        %vm1248 = vcmask 64512
        %v1249 = vsel %vm1248, %v1247, -inf
        %1250 = vmax.xlane.f32.xlu0 %v1249
        %v1251 = vpop.xlane.xlu0 %1250
        %v1252 = vsub.f32 %v1247, %v1251
        %v1253 = vmul.f32 %v1252, 1.442695
        %v1254 = vpow.pop %v1253
        %v1255 = vsel %vm1248, %v1254, 0.0
        %1256 = vadd.xlane.f32.xlu0 %v1255
        %v1257 = vpop.xlane.xlu0 %1256
        %v1258 = vrcp.pop %v1257
        %v1259 = vmul.f32 %v1254, %v1258
        %v1261 = vsel %vm1248, %v1259, 0
        %1263 = vmatprep.subr.mxu0 0.0
        %1264 = vmatpush1.msra.mxu0 0.0
        %1265 = vmatprep.subr.mxu0 0.0
        %1266 = vmatpush1.msra.mxu0 0.0
        %1267 = vmatprep.subr.mxu0 0.0
        %1268 = vmatpush1.msra.mxu0 0.0
        %1269 = vmatprep.subr.mxu0 0.0
        %1270 = vmatpush1.msra.mxu0 0.0
        %1271 = vmatprep.subr.mxu0 0.0
        %1272 = vmatpush1.msra.mxu0 0.0
        %1273 = vmatprep.subr.mxu0 0.0
        %1274 = vmatpush1.msra.mxu0 0.0
        %1275 = vmatprep.subr.mxu0 0.0
        %1276 = vmatpush1.msra.mxu0 0.0
        %1277 = vmatprep.subr.mxu0 0.0
        %1278 = vmatpush1.msra.mxu0 0.0
        %1279 = vmatprep.subr.mxu0 0.0
        %1280 = vmatpush1.msra.mxu0 0.0
        %1281 = vmatprep.subr.mxu0 0.0
        %1282 = vmatpush1.msra.mxu0 0.0
        %1283 = vmatprep.subr.mxu0 0.0
        %1284 = vmatpush1.msra.mxu0 0.0
        %1285 = vmatprep.subr.mxu0 0.0
        %1286 = vmatpush1.msra.mxu0 0.0
        %1287 = vmatprep.subr.mxu0 0.0
        %1288 = vmatpush1.msra.mxu0 0.0
        %1289 = vmatprep.subr.mxu0 0.0
        %1290 = vmatpush1.msra.mxu0 0.0
        %1291 = vmatprep.subr.mxu0 0.0
        %1292 = vmatpush1.msra.mxu0 0.0
        %1293 = vmatprep.subr.mxu0 0.0
        %1294 = vmatpush1.msra.mxu0 %v1165
        %1295 = vmatprep.subr.mxu0 0.0
        %1296 = vmatpush2.msra.mxu0 0.0
        %1297 = vmatprep.subr.mxu0 0.0
        %1298 = vmatpush2.msra.mxu0 0.0
        %1299 = vmatprep.subr.mxu0 0.0
        %1300 = vmatpush2.msra.mxu0 0.0
        %1301 = vmatprep.subr.mxu0 0.0
        %1302 = vmatpush2.msra.mxu0 0.0
        %1303 = vmatprep.subr.mxu0 0.0
        %1304 = vmatpush2.msra.mxu0 0.0
        %1305 = vmatprep.subr.mxu0 0.0
        %1306 = vmatpush2.msra.mxu0 0.0
        %1307 = vmatprep.subr.mxu0 0.0
        %1308 = vmatpush2.msra.mxu0 0.0
        %1309 = vmatprep.subr.mxu0 0.0
        %1310 = vmatpush2.msra.mxu0 0.0
        %1311 = vmatprep.subr.mxu0 0.0
        %1312 = vmatpush2.msra.mxu0 0.0
        %1313 = vmatprep.subr.mxu0 0.0
        %1314 = vmatpush2.msra.mxu0 0.0
        %1315 = vmatprep.subr.mxu0 0.0
        %1316 = vmatpush2.msra.mxu0 0.0
        %1317 = vmatprep.subr.mxu0 0.0
        %1318 = vmatpush2.msra.mxu0 0.0
        %1319 = vmatprep.subr.mxu0 0.0
        %1320 = vmatpush2.msra.mxu0 0.0
        %1321 = vmatprep.subr.mxu0 0.0
        %1322 = vmatpush2.msra.mxu0 0.0
        %1323 = vmatprep.subr.mxu0 0.0
        %1324 = vmatpush2.msra.mxu0 0.0
        %1325 = vmatprep.subr.mxu0 0.0
        %1326 = vmatpush2.msra.mxu0 0.0
        %1327 = vmatprep.mubr.f32.mxu0 0.0
        %1328 = vmatmul.mubr.f32.gmra.mxu0 %v1261
        %v1329 = vpop.f32.mrf.mxu0
        %v1330 = vadd.f32 0.0, %v1329
        %v1331 = vpop.f32.mrf.mxu0
        %1332 = vdwg.mxu0
        %1333 = vrot.lane.b32.xlu0 %v1025, 96
        %v1334 = vpop.permute.xlu0 %1333
        %1335 = vrot.lane.b32.xlu0 %v1095, 96
        %v1336 = vpop.permute.xlu0 %1335
        %v1337 = vsel %vm1169, %v1334, 0
        %v1339 = vsel %vm1169, %v1336, 0
        %1341 = vmatprep.subr.mxu0 0.0
        %1342 = vmatpush1.xpose.msra.mxu0 0.0
        %1343 = vmatprep.subr.mxu0 0.0
        %1344 = vmatpush1.xpose.msra.mxu0 0.0
        %1345 = vmatprep.subr.mxu0 0.0
        %1346 = vmatpush1.xpose.msra.mxu0 0.0
        %1347 = vmatprep.subr.mxu0 0.0
        %1348 = vmatpush1.xpose.msra.mxu0 0.0
        %1349 = vmatprep.subr.mxu0 0.0
        %1350 = vmatpush1.xpose.msra.mxu0 0.0
        %1351 = vmatprep.subr.mxu0 0.0
        %1352 = vmatpush1.xpose.msra.mxu0 0.0
        %1353 = vmatprep.subr.mxu0 0.0
        %1354 = vmatpush1.xpose.msra.mxu0 0.0
        %1355 = vmatprep.subr.mxu0 0.0
        %1356 = vmatpush1.xpose.msra.mxu0 0.0
        %1357 = vmatprep.subr.mxu0 0.0
        %1358 = vmatpush1.xpose.msra.mxu0 0.0
        %1359 = vmatprep.subr.mxu0 0.0
        %1360 = vmatpush1.xpose.msra.mxu0 0.0
        %1361 = vmatprep.subr.mxu0 0.0
        %1362 = vmatpush1.xpose.msra.mxu0 0.0
        %1363 = vmatprep.subr.mxu0 0.0
        %1364 = vmatpush1.xpose.msra.mxu0 0.0
        %1365 = vmatprep.subr.mxu0 0.0
        %1366 = vmatpush1.xpose.msra.mxu0 0.0
        %1367 = vmatprep.subr.mxu0 0.0
        %1368 = vmatpush1.xpose.msra.mxu0 0.0
        %1369 = vmatprep.subr.mxu0 0.0
        %1370 = vmatpush1.xpose.msra.mxu0 0.0
        %1371 = vmatprep.subr.mxu0 0.0
        %1372 = vmatpush1.xpose.msra.mxu0 %v1339
        %1373 = vmatprep.subr.mxu0 0.0
        %1374 = vmatpush2.xpose.msra.mxu0 0.0
        %1375 = vmatprep.subr.mxu0 0.0
        %1376 = vmatpush2.xpose.msra.mxu0 0.0
        %1377 = vmatprep.subr.mxu0 0.0
        %1378 = vmatpush2.xpose.msra.mxu0 0.0
        %1379 = vmatprep.subr.mxu0 0.0
        %1380 = vmatpush2.xpose.msra.mxu0 0.0
        %1381 = vmatprep.subr.mxu0 0.0
        %1382 = vmatpush2.xpose.msra.mxu0 0.0
        %1383 = vmatprep.subr.mxu0 0.0
        %1384 = vmatpush2.xpose.msra.mxu0 0.0
        %1385 = vmatprep.subr.mxu0 0.0
        %1386 = vmatpush2.xpose.msra.mxu0 0.0
        %1387 = vmatprep.subr.mxu0 0.0
        %1388 = vmatpush2.xpose.msra.mxu0 0.0
        %1389 = vmatprep.subr.mxu0 0.0
        %1390 = vmatpush2.xpose.msra.mxu0 0.0
        %1391 = vmatprep.subr.mxu0 0.0
        %1392 = vmatpush2.xpose.msra.mxu0 0.0
        %1393 = vmatprep.subr.mxu0 0.0
        %1394 = vmatpush2.xpose.msra.mxu0 0.0
        %1395 = vmatprep.subr.mxu0 0.0
        %1396 = vmatpush2.xpose.msra.mxu0 0.0
        %1397 = vmatprep.subr.mxu0 0.0
        %1398 = vmatpush2.xpose.msra.mxu0 0.0
        %1399 = vmatprep.subr.mxu0 0.0
        %1400 = vmatpush2.xpose.msra.mxu0 0.0
        %1401 = vmatprep.subr.mxu0 0.0
        %1402 = vmatpush2.xpose.msra.mxu0 0.0
        %1403 = vmatprep.subr.mxu0 0.0
        %1404 = vmatpush2.xpose.msra.mxu0 0.0
        %1405 = vmatprep.mubr.f32.mxu0 0.0
        %1406 = vmatmul.mubr.f32.gmra.mxu0 %v1337
        %v1407 = vpop.f32.mrf.mxu0
        %v1408 = vadd.f32 0.0, %v1407
        %v1409 = vpop.f32.mrf.mxu0
        %1410 = vdwg.mxu0
        %v1411 = vmul.f32 %v1408, 0.17677669
        %v1412 = vsel %vm1168, -1e+09, %v1411
        %v1413 = vsel %vm1248, %v1412, -inf
        %1414 = vmax.xlane.f32.xlu0 %v1413
        %v1415 = vpop.xlane.xlu0 %1414
        %v1416 = vsub.f32 %v1412, %v1415
        %v1417 = vmul.f32 %v1416, 1.442695
        %v1418 = vpow.pop %v1417
        %v1419 = vsel %vm1248, %v1418, 0.0
        %1420 = vadd.xlane.f32.xlu0 %v1419
        %v1421 = vpop.xlane.xlu0 %1420
        %v1422 = vrcp.pop %v1421
        %v1423 = vmul.f32 %v1418, %v1422
        %1425 = vrot.lane.b32.xlu0 %v1165, 96
        %v1426 = vpop.permute.xlu0 %1425
        %v1429 = vsel %vm1248, %v1423, 0
        %1431 = vmatprep.subr.mxu0 0.0
        %1432 = vmatpush1.msra.mxu0 0.0
        %1433 = vmatprep.subr.mxu0 0.0
        %1434 = vmatpush1.msra.mxu0 0.0
        %1435 = vmatprep.subr.mxu0 0.0
        %1436 = vmatpush1.msra.mxu0 0.0
        %1437 = vmatprep.subr.mxu0 0.0
        %1438 = vmatpush1.msra.mxu0 0.0
        %1439 = vmatprep.subr.mxu0 0.0
        %1440 = vmatpush1.msra.mxu0 0.0
        %1441 = vmatprep.subr.mxu0 0.0
        %1442 = vmatpush1.msra.mxu0 0.0
        %1443 = vmatprep.subr.mxu0 0.0
        %1444 = vmatpush1.msra.mxu0 0.0
        %1445 = vmatprep.subr.mxu0 0.0
        %1446 = vmatpush1.msra.mxu0 0.0
        %1447 = vmatprep.subr.mxu0 0.0
        %1448 = vmatpush1.msra.mxu0 0.0
        %1449 = vmatprep.subr.mxu0 0.0
        %1450 = vmatpush1.msra.mxu0 0.0
        %1451 = vmatprep.subr.mxu0 0.0
        %1452 = vmatpush1.msra.mxu0 0.0
        %1453 = vmatprep.subr.mxu0 0.0
        %1454 = vmatpush1.msra.mxu0 0.0
        %1455 = vmatprep.subr.mxu0 0.0
        %1456 = vmatpush1.msra.mxu0 0.0
        %1457 = vmatprep.subr.mxu0 0.0
        %1458 = vmatpush1.msra.mxu0 0.0
        %1459 = vmatprep.subr.mxu0 0.0
        %1460 = vmatpush1.msra.mxu0 0.0
        %1461 = vmatprep.subr.mxu0 0.0
        %1462 = vmatpush1.msra.mxu0 %v1426
        %1463 = vmatprep.subr.mxu0 0.0
        %1464 = vmatpush2.msra.mxu0 0.0
        %1465 = vmatprep.subr.mxu0 0.0
        %1466 = vmatpush2.msra.mxu0 0.0
        %1467 = vmatprep.subr.mxu0 0.0
        %1468 = vmatpush2.msra.mxu0 0.0
        %1469 = vmatprep.subr.mxu0 0.0
        %1470 = vmatpush2.msra.mxu0 0.0
        %1471 = vmatprep.subr.mxu0 0.0
        %1472 = vmatpush2.msra.mxu0 0.0
        %1473 = vmatprep.subr.mxu0 0.0
        %1474 = vmatpush2.msra.mxu0 0.0
        %1475 = vmatprep.subr.mxu0 0.0
        %1476 = vmatpush2.msra.mxu0 0.0
        %1477 = vmatprep.subr.mxu0 0.0
        %1478 = vmatpush2.msra.mxu0 0.0
        %1479 = vmatprep.subr.mxu0 0.0
        %1480 = vmatpush2.msra.mxu0 0.0
        %1481 = vmatprep.subr.mxu0 0.0
        %1482 = vmatpush2.msra.mxu0 0.0
        %1483 = vmatprep.subr.mxu0 0.0
        %1484 = vmatpush2.msra.mxu0 0.0
        %1485 = vmatprep.subr.mxu0 0.0
        %1486 = vmatpush2.msra.mxu0 0.0
        %1487 = vmatprep.subr.mxu0 0.0
        %1488 = vmatpush2.msra.mxu0 0.0
        %1489 = vmatprep.subr.mxu0 0.0
        %1490 = vmatpush2.msra.mxu0 0.0
        %1491 = vmatprep.subr.mxu0 0.0
        %1492 = vmatpush2.msra.mxu0 0.0
        %1493 = vmatprep.subr.mxu0 0.0
        %1494 = vmatpush2.msra.mxu0 0.0
        %1495 = vmatprep.mubr.f32.mxu0 0.0
        %1496 = vmatmul.mubr.f32.gmra.mxu0 %v1429
        %v1497 = vpop.f32.mrf.mxu0
        %v1498 = vadd.f32 0.0, %v1497
        %v1499 = vpop.f32.mrf.mxu0
        %1500 = vdwg.mxu0
        %v1502 = vsel %vm1169, %v1498, 0
        %1504 = vmatprep.subr.mxu0 0.0
        %1505 = vmatpush1.msra.mxu0 0.0
        %1506 = vmatprep.subr.mxu0 0.0
        %1507 = vmatpush1.msra.mxu0 0.0
        %1508 = vmatprep.subr.mxu0 0.0
        %1509 = vmatpush1.msra.mxu0 0.0
        %1510 = vmatprep.subr.mxu0 0.0
        %1511 = vmatpush1.msra.mxu0 0.0
        %1512 = vmatprep.subr.mxu0 0.0
        %1513 = vmatpush1.msra.mxu0 0.0
        %1514 = vmatprep.subr.mxu0 0.0
        %1515 = vmatpush1.msra.mxu0 0.0
        %1516 = vmatprep.subr.mxu0 0.0
        %1517 = vmatpush1.msra.mxu0 0.0
        %1518 = vmatprep.subr.mxu0 0.0
        %1519 = vmatpush1.msra.mxu0 0.0
        %1520 = vmatprep.subr.mxu0 0.0
        %1521 = vmatpush1.msra.mxu0 0.0
        %1522 = vmatprep.subr.mxu0 0.0
        %1523 = vmatpush1.msra.mxu0 0.0
        %1524 = vmatprep.subr.mxu0 0.0
        %1525 = vmatpush1.msra.mxu0 0.0
        %1526 = vmatprep.subr.mxu0 0.0
        %1527 = vmatpush1.msra.mxu0 0.0
        %1528 = vmatprep.subr.mxu0 0.0
        %1529 = vmatpush1.msra.mxu0 %v949
        %1530 = vmatprep.subr.mxu0 0.0
        %1531 = vmatpush1.msra.mxu0 %v948
        %1532 = vmatprep.subr.mxu0 0.0
        %1533 = vmatpush1.msra.mxu0 %v947
        %1534 = vmatprep.subr.mxu0 0.0
        %1535 = vmatpush1.msra.mxu0 %v946
        %1536 = vmatprep.subr.mxu0 0.0
        %1537 = vmatpush2.msra.mxu0 0.0
        %1538 = vmatprep.subr.mxu0 0.0
        %1539 = vmatpush2.msra.mxu0 0.0
        %1540 = vmatprep.subr.mxu0 0.0
        %1541 = vmatpush2.msra.mxu0 0.0
        %1542 = vmatprep.subr.mxu0 0.0
        %1543 = vmatpush2.msra.mxu0 0.0
        %1544 = vmatprep.subr.mxu0 0.0
        %1545 = vmatpush2.msra.mxu0 0.0
        %1546 = vmatprep.subr.mxu0 0.0
        %1547 = vmatpush2.msra.mxu0 0.0
        %1548 = vmatprep.subr.mxu0 0.0
        %1549 = vmatpush2.msra.mxu0 0.0
        %1550 = vmatprep.subr.mxu0 0.0
        %1551 = vmatpush2.msra.mxu0 0.0
        %1552 = vmatprep.subr.mxu0 0.0
        %1553 = vmatpush2.msra.mxu0 0.0
        %1554 = vmatprep.subr.mxu0 0.0
        %1555 = vmatpush2.msra.mxu0 0.0
        %1556 = vmatprep.subr.mxu0 0.0
        %1557 = vmatpush2.msra.mxu0 0.0
        %1558 = vmatprep.subr.mxu0 0.0
        %1559 = vmatpush2.msra.mxu0 0.0
        %1560 = vmatprep.subr.mxu0 0.0
        %1561 = vmatpush2.msra.mxu0 0.0
        %1562 = vmatprep.subr.mxu0 0.0
        %1563 = vmatpush2.msra.mxu0 0.0
        %1564 = vmatprep.subr.mxu0 0.0
        %1565 = vmatpush2.msra.mxu0 0.0
        %1566 = vmatprep.subr.mxu0 0.0
        %1567 = vmatpush2.msra.mxu0 0.0
        %1568 = vmatprep.mubr.f32.mxu0 0.0
        %1569 = vmatmul.mubr.f32.gmra.mxu0 %v1502
        %v1570 = vpop.f32.mrf.mxu0
        %v1571 = vadd.f32 0.0, %v1570
        %v1572 = vpop.f32.mrf.mxu0
        %1573 = vdwg.mxu0
        %v1575 = vsel %vm1169, %v1330, 0
        %1577 = vmatprep.subr.mxu0 0.0
        %1578 = vmatpush1.msra.mxu0 0.0
        %1579 = vmatprep.subr.mxu0 0.0
        %1580 = vmatpush1.msra.mxu0 0.0
        %1581 = vmatprep.subr.mxu0 0.0
        %1582 = vmatpush1.msra.mxu0 0.0
        %1583 = vmatprep.subr.mxu0 0.0
        %1584 = vmatpush1.msra.mxu0 0.0
        %1585 = vmatprep.subr.mxu0 0.0
        %1586 = vmatpush1.msra.mxu0 0.0
        %1587 = vmatprep.subr.mxu0 0.0
        %1588 = vmatpush1.msra.mxu0 0.0
        %1589 = vmatprep.subr.mxu0 0.0
        %1590 = vmatpush1.msra.mxu0 0.0
        %1591 = vmatprep.subr.mxu0 0.0
        %1592 = vmatpush1.msra.mxu0 0.0
        %1593 = vmatprep.subr.mxu0 0.0
        %1594 = vmatpush1.msra.mxu0 0.0
        %1595 = vmatprep.subr.mxu0 0.0
        %1596 = vmatpush1.msra.mxu0 0.0
        %1597 = vmatprep.subr.mxu0 0.0
        %1598 = vmatpush1.msra.mxu0 0.0
        %1599 = vmatprep.subr.mxu0 0.0
        %1600 = vmatpush1.msra.mxu0 0.0
        %1601 = vmatprep.subr.mxu0 0.0
        %1602 = vmatpush1.msra.mxu0 %v945
        %1603 = vmatprep.subr.mxu0 0.0
        %1604 = vmatpush1.msra.mxu0 %v944
        %1605 = vmatprep.subr.mxu0 0.0
        %1606 = vmatpush1.msra.mxu0 %v943
        %1607 = vmatprep.subr.mxu0 0.0
        %1608 = vmatpush1.msra.mxu0 %v942
        %1609 = vmatprep.subr.mxu0 0.0
        %1610 = vmatpush2.msra.mxu0 0.0
        %1611 = vmatprep.subr.mxu0 0.0
        %1612 = vmatpush2.msra.mxu0 0.0
        %1613 = vmatprep.subr.mxu0 0.0
        %1614 = vmatpush2.msra.mxu0 0.0
        %1615 = vmatprep.subr.mxu0 0.0
        %1616 = vmatpush2.msra.mxu0 0.0
        %1617 = vmatprep.subr.mxu0 0.0
        %1618 = vmatpush2.msra.mxu0 0.0
        %1619 = vmatprep.subr.mxu0 0.0
        %1620 = vmatpush2.msra.mxu0 0.0
        %1621 = vmatprep.subr.mxu0 0.0
        %1622 = vmatpush2.msra.mxu0 0.0
        %1623 = vmatprep.subr.mxu0 0.0
        %1624 = vmatpush2.msra.mxu0 0.0
        %1625 = vmatprep.subr.mxu0 0.0
        %1626 = vmatpush2.msra.mxu0 0.0
        %1627 = vmatprep.subr.mxu0 0.0
        %1628 = vmatpush2.msra.mxu0 0.0
        %1629 = vmatprep.subr.mxu0 0.0
        %1630 = vmatpush2.msra.mxu0 0.0
        %1631 = vmatprep.subr.mxu0 0.0
        %1632 = vmatpush2.msra.mxu0 0.0
        %1633 = vmatprep.subr.mxu0 0.0
        %1634 = vmatpush2.msra.mxu0 0.0
        %1635 = vmatprep.subr.mxu0 0.0
        %1636 = vmatpush2.msra.mxu0 0.0
        %1637 = vmatprep.subr.mxu0 0.0
        %1638 = vmatpush2.msra.mxu0 0.0
        %1639 = vmatprep.subr.mxu0 0.0
        %1640 = vmatpush2.msra.mxu0 0.0
        %1641 = vmatprep.mubr.f32.mxu0 0.0
        %1642 = vmatmul.mubr.f32.gmra.mxu0 %v1575
        %v1643 = vpop.f32.mrf.mxu0
        %v1644 = vadd.f32 %v1571, %v1643
        %v1645 = vpop.f32.mrf.mxu0
        %1646 = vdwg.mxu0
        %1647 = vrot.lane.b32.xlu0 %v1025, 64
        %v1648 = vpop.permute.xlu0 %1647
        %1649 = vrot.lane.b32.xlu0 %v1095, 64
        %v1650 = vpop.permute.xlu0 %1649
        %v1651 = vsel %vm1169, %v1648, 0
        %v1653 = vsel %vm1169, %v1650, 0
        %1655 = vmatprep.subr.mxu0 0.0
        %1656 = vmatpush1.xpose.msra.mxu0 0.0
        %1657 = vmatprep.subr.mxu0 0.0
        %1658 = vmatpush1.xpose.msra.mxu0 0.0
        %1659 = vmatprep.subr.mxu0 0.0
        %1660 = vmatpush1.xpose.msra.mxu0 0.0
        %1661 = vmatprep.subr.mxu0 0.0
        %1662 = vmatpush1.xpose.msra.mxu0 0.0
        %1663 = vmatprep.subr.mxu0 0.0
        %1664 = vmatpush1.xpose.msra.mxu0 0.0
        %1665 = vmatprep.subr.mxu0 0.0
        %1666 = vmatpush1.xpose.msra.mxu0 0.0
        %1667 = vmatprep.subr.mxu0 0.0
        %1668 = vmatpush1.xpose.msra.mxu0 0.0
        %1669 = vmatprep.subr.mxu0 0.0
        %1670 = vmatpush1.xpose.msra.mxu0 0.0
        %1671 = vmatprep.subr.mxu0 0.0
        %1672 = vmatpush1.xpose.msra.mxu0 0.0
        %1673 = vmatprep.subr.mxu0 0.0
        %1674 = vmatpush1.xpose.msra.mxu0 0.0
        %1675 = vmatprep.subr.mxu0 0.0
        %1676 = vmatpush1.xpose.msra.mxu0 0.0
        %1677 = vmatprep.subr.mxu0 0.0
        %1678 = vmatpush1.xpose.msra.mxu0 0.0
        %1679 = vmatprep.subr.mxu0 0.0
        %1680 = vmatpush1.xpose.msra.mxu0 0.0
        %1681 = vmatprep.subr.mxu0 0.0
        %1682 = vmatpush1.xpose.msra.mxu0 0.0
        %1683 = vmatprep.subr.mxu0 0.0
        %1684 = vmatpush1.xpose.msra.mxu0 0.0
        %1685 = vmatprep.subr.mxu0 0.0
        %1686 = vmatpush1.xpose.msra.mxu0 %v1653
        %1687 = vmatprep.subr.mxu0 0.0
        %1688 = vmatpush2.xpose.msra.mxu0 0.0
        %1689 = vmatprep.subr.mxu0 0.0
        %1690 = vmatpush2.xpose.msra.mxu0 0.0
        %1691 = vmatprep.subr.mxu0 0.0
        %1692 = vmatpush2.xpose.msra.mxu0 0.0
        %1693 = vmatprep.subr.mxu0 0.0
        %1694 = vmatpush2.xpose.msra.mxu0 0.0
        %1695 = vmatprep.subr.mxu0 0.0
        %1696 = vmatpush2.xpose.msra.mxu0 0.0
        %1697 = vmatprep.subr.mxu0 0.0
        %1698 = vmatpush2.xpose.msra.mxu0 0.0
        %1699 = vmatprep.subr.mxu0 0.0
        %1700 = vmatpush2.xpose.msra.mxu0 0.0
        %1701 = vmatprep.subr.mxu0 0.0
        %1702 = vmatpush2.xpose.msra.mxu0 0.0
        %1703 = vmatprep.subr.mxu0 0.0
        %1704 = vmatpush2.xpose.msra.mxu0 0.0
        %1705 = vmatprep.subr.mxu0 0.0
        %1706 = vmatpush2.xpose.msra.mxu0 0.0
        %1707 = vmatprep.subr.mxu0 0.0
        %1708 = vmatpush2.xpose.msra.mxu0 0.0
        %1709 = vmatprep.subr.mxu0 0.0
        %1710 = vmatpush2.xpose.msra.mxu0 0.0
        %1711 = vmatprep.subr.mxu0 0.0
        %1712 = vmatpush2.xpose.msra.mxu0 0.0
        %1713 = vmatprep.subr.mxu0 0.0
        %1714 = vmatpush2.xpose.msra.mxu0 0.0
        %1715 = vmatprep.subr.mxu0 0.0
        %1716 = vmatpush2.xpose.msra.mxu0 0.0
        %1717 = vmatprep.subr.mxu0 0.0
        %1718 = vmatpush2.xpose.msra.mxu0 0.0
        %1719 = vmatprep.mubr.f32.mxu0 0.0
        %1720 = vmatmul.mubr.f32.gmra.mxu0 %v1651
        %v1721 = vpop.f32.mrf.mxu0
        %v1722 = vadd.f32 0.0, %v1721
        %v1723 = vpop.f32.mrf.mxu0
        %1724 = vdwg.mxu0
        %v1725 = vmul.f32 %v1722, 0.17677669
        %v1726 = vsel %vm1168, -1e+09, %v1725
        %v1727 = vsel %vm1248, %v1726, -inf
        %1728 = vmax.xlane.f32.xlu0 %v1727
        %v1729 = vpop.xlane.xlu0 %1728
        %v1730 = vsub.f32 %v1726, %v1729
        %v1731 = vmul.f32 %v1730, 1.442695
        %v1732 = vpow.pop %v1731
        %v1733 = vsel %vm1248, %v1732, 0.0
        %1734 = vadd.xlane.f32.xlu0 %v1733
        %v1735 = vpop.xlane.xlu0 %1734
        %v1736 = vrcp.pop %v1735
        %v1737 = vmul.f32 %v1732, %v1736
        %1738 = vrot.lane.b32.xlu0 %v1165, 64
        %v1739 = vpop.permute.xlu0 %1738
        %v1742 = vsel %vm1248, %v1737, 0
        %1744 = vmatprep.subr.mxu0 0.0
        %1745 = vmatpush1.msra.mxu0 0.0
        %1746 = vmatprep.subr.mxu0 0.0
        %1747 = vmatpush1.msra.mxu0 0.0
        %1748 = vmatprep.subr.mxu0 0.0
        %1749 = vmatpush1.msra.mxu0 0.0
        %1750 = vmatprep.subr.mxu0 0.0
        %1751 = vmatpush1.msra.mxu0 0.0
        %1752 = vmatprep.subr.mxu0 0.0
        %1753 = vmatpush1.msra.mxu0 0.0
        %1754 = vmatprep.subr.mxu0 0.0
        %1755 = vmatpush1.msra.mxu0 0.0
        %1756 = vmatprep.subr.mxu0 0.0
        %1757 = vmatpush1.msra.mxu0 0.0
        %1758 = vmatprep.subr.mxu0 0.0
        %1759 = vmatpush1.msra.mxu0 0.0
        %1760 = vmatprep.subr.mxu0 0.0
        %1761 = vmatpush1.msra.mxu0 0.0
        %1762 = vmatprep.subr.mxu0 0.0
        %1763 = vmatpush1.msra.mxu0 0.0
        %1764 = vmatprep.subr.mxu0 0.0
        %1765 = vmatpush1.msra.mxu0 0.0
        %1766 = vmatprep.subr.mxu0 0.0
        %1767 = vmatpush1.msra.mxu0 0.0
        %1768 = vmatprep.subr.mxu0 0.0
        %1769 = vmatpush1.msra.mxu0 0.0
        %1770 = vmatprep.subr.mxu0 0.0
        %1771 = vmatpush1.msra.mxu0 0.0
        %1772 = vmatprep.subr.mxu0 0.0
        %1773 = vmatpush1.msra.mxu0 0.0
        %1774 = vmatprep.subr.mxu0 0.0
        %1775 = vmatpush1.msra.mxu0 %v1739
        %1776 = vmatprep.subr.mxu0 0.0
        %1777 = vmatpush2.msra.mxu0 0.0
        %1778 = vmatprep.subr.mxu0 0.0
        %1779 = vmatpush2.msra.mxu0 0.0
        %1780 = vmatprep.subr.mxu0 0.0
        %1781 = vmatpush2.msra.mxu0 0.0
        %1782 = vmatprep.subr.mxu0 0.0
        %1783 = vmatpush2.msra.mxu0 0.0
        %1784 = vmatprep.subr.mxu0 0.0
        %1785 = vmatpush2.msra.mxu0 0.0
        %1786 = vmatprep.subr.mxu0 0.0
        %1787 = vmatpush2.msra.mxu0 0.0
        %1788 = vmatprep.subr.mxu0 0.0
        %1789 = vmatpush2.msra.mxu0 0.0
        %1790 = vmatprep.subr.mxu0 0.0
        %1791 = vmatpush2.msra.mxu0 0.0
        %1792 = vmatprep.subr.mxu0 0.0
        %1793 = vmatpush2.msra.mxu0 0.0
        %1794 = vmatprep.subr.mxu0 0.0
        %1795 = vmatpush2.msra.mxu0 0.0
        %1796 = vmatprep.subr.mxu0 0.0
        %1797 = vmatpush2.msra.mxu0 0.0
        %1798 = vmatprep.subr.mxu0 0.0
        %1799 = vmatpush2.msra.mxu0 0.0
        %1800 = vmatprep.subr.mxu0 0.0
        %1801 = vmatpush2.msra.mxu0 0.0
        %1802 = vmatprep.subr.mxu0 0.0
        %1803 = vmatpush2.msra.mxu0 0.0
        %1804 = vmatprep.subr.mxu0 0.0
        %1805 = vmatpush2.msra.mxu0 0.0
        %1806 = vmatprep.subr.mxu0 0.0
        %1807 = vmatpush2.msra.mxu0 0.0
        %1808 = vmatprep.mubr.f32.mxu0 0.0
        %1809 = vmatmul.mubr.f32.gmra.mxu0 %v1742
        %v1810 = vpop.f32.mrf.mxu0
        %v1811 = vadd.f32 0.0, %v1810
        %v1812 = vpop.f32.mrf.mxu0
        %1813 = vdwg.mxu0
        %v1815 = vsel %vm1169, %v1811, 0
        %1817 = vmatprep.subr.mxu0 0.0
        %1818 = vmatpush1.msra.mxu0 0.0
        %1819 = vmatprep.subr.mxu0 0.0
        %1820 = vmatpush1.msra.mxu0 0.0
        %1821 = vmatprep.subr.mxu0 0.0
        %1822 = vmatpush1.msra.mxu0 0.0
        %1823 = vmatprep.subr.mxu0 0.0
        %1824 = vmatpush1.msra.mxu0 0.0
        %1825 = vmatprep.subr.mxu0 0.0
        %1826 = vmatpush1.msra.mxu0 0.0
        %1827 = vmatprep.subr.mxu0 0.0
        %1828 = vmatpush1.msra.mxu0 0.0
        %1829 = vmatprep.subr.mxu0 0.0
        %1830 = vmatpush1.msra.mxu0 0.0
        %1831 = vmatprep.subr.mxu0 0.0
        %1832 = vmatpush1.msra.mxu0 0.0
        %1833 = vmatprep.subr.mxu0 0.0
        %1834 = vmatpush1.msra.mxu0 0.0
        %1835 = vmatprep.subr.mxu0 0.0
        %1836 = vmatpush1.msra.mxu0 0.0
        %1837 = vmatprep.subr.mxu0 0.0
        %1838 = vmatpush1.msra.mxu0 0.0
        %1839 = vmatprep.subr.mxu0 0.0
        %1840 = vmatpush1.msra.mxu0 0.0
        %1841 = vmatprep.subr.mxu0 0.0
        %1842 = vmatpush1.msra.mxu0 %v953
        %1843 = vmatprep.subr.mxu0 0.0
        %1844 = vmatpush1.msra.mxu0 %v952
        %1845 = vmatprep.subr.mxu0 0.0
        %1846 = vmatpush1.msra.mxu0 %v951
        %1847 = vmatprep.subr.mxu0 0.0
        %1848 = vmatpush1.msra.mxu0 %v950
        %1849 = vmatprep.subr.mxu0 0.0
        %1850 = vmatpush2.msra.mxu0 0.0
        %1851 = vmatprep.subr.mxu0 0.0
        %1852 = vmatpush2.msra.mxu0 0.0
        %1853 = vmatprep.subr.mxu0 0.0
        %1854 = vmatpush2.msra.mxu0 0.0
        %1855 = vmatprep.subr.mxu0 0.0
        %1856 = vmatpush2.msra.mxu0 0.0
        %1857 = vmatprep.subr.mxu0 0.0
        %1858 = vmatpush2.msra.mxu0 0.0
        %1859 = vmatprep.subr.mxu0 0.0
        %1860 = vmatpush2.msra.mxu0 0.0
        %1861 = vmatprep.subr.mxu0 0.0
        %1862 = vmatpush2.msra.mxu0 0.0
        %1863 = vmatprep.subr.mxu0 0.0
        %1864 = vmatpush2.msra.mxu0 0.0
        %1865 = vmatprep.subr.mxu0 0.0
        %1866 = vmatpush2.msra.mxu0 0.0
        %1867 = vmatprep.subr.mxu0 0.0
        %1868 = vmatpush2.msra.mxu0 0.0
        %1869 = vmatprep.subr.mxu0 0.0
        %1870 = vmatpush2.msra.mxu0 0.0
        %1871 = vmatprep.subr.mxu0 0.0
        %1872 = vmatpush2.msra.mxu0 0.0
        %1873 = vmatprep.subr.mxu0 0.0
        %1874 = vmatpush2.msra.mxu0 0.0
        %1875 = vmatprep.subr.mxu0 0.0
        %1876 = vmatpush2.msra.mxu0 0.0
        %1877 = vmatprep.subr.mxu0 0.0
        %1878 = vmatpush2.msra.mxu0 0.0
        %1879 = vmatprep.subr.mxu0 0.0
        %1880 = vmatpush2.msra.mxu0 0.0
        %1881 = vmatprep.mubr.f32.mxu0 0.0
        %1882 = vmatmul.mubr.f32.gmra.mxu0 %v1815
        %v1883 = vpop.f32.mrf.mxu0
        %v1884 = vadd.f32 0.0, %v1883
        %v1885 = vpop.f32.mrf.mxu0
        %1886 = vdwg.mxu0
        %v1887 = vadd.f32 %v1644, %v1884
        %1888 = vrot.lane.b32.xlu0 %v1025, 32
        %v1889 = vpop.permute.xlu0 %1888
        %1890 = vrot.lane.b32.xlu0 %v1095, 32
        %v1891 = vpop.permute.xlu0 %1890
        %v1892 = vsel %vm1169, %v1889, 0
        %v1894 = vsel %vm1169, %v1891, 0
        %1896 = vmatprep.subr.mxu0 0.0
        %1897 = vmatpush1.xpose.msra.mxu0 0.0
        %1898 = vmatprep.subr.mxu0 0.0
        %1899 = vmatpush1.xpose.msra.mxu0 0.0
        %1900 = vmatprep.subr.mxu0 0.0
        %1901 = vmatpush1.xpose.msra.mxu0 0.0
        %1902 = vmatprep.subr.mxu0 0.0
        %1903 = vmatpush1.xpose.msra.mxu0 0.0
        %1904 = vmatprep.subr.mxu0 0.0
        %1905 = vmatpush1.xpose.msra.mxu0 0.0
        %1906 = vmatprep.subr.mxu0 0.0
        %1907 = vmatpush1.xpose.msra.mxu0 0.0
        %1908 = vmatprep.subr.mxu0 0.0
        %1909 = vmatpush1.xpose.msra.mxu0 0.0
        %1910 = vmatprep.subr.mxu0 0.0
        %1911 = vmatpush1.xpose.msra.mxu0 0.0
        %1912 = vmatprep.subr.mxu0 0.0
        %1913 = vmatpush1.xpose.msra.mxu0 0.0
        %1914 = vmatprep.subr.mxu0 0.0
        %1915 = vmatpush1.xpose.msra.mxu0 0.0
        %1916 = vmatprep.subr.mxu0 0.0
        %1917 = vmatpush1.xpose.msra.mxu0 0.0
        %1918 = vmatprep.subr.mxu0 0.0
        %1919 = vmatpush1.xpose.msra.mxu0 0.0
        %1920 = vmatprep.subr.mxu0 0.0
        %1921 = vmatpush1.xpose.msra.mxu0 0.0
        %1922 = vmatprep.subr.mxu0 0.0
        %1923 = vmatpush1.xpose.msra.mxu0 0.0
        %1924 = vmatprep.subr.mxu0 0.0
        %1925 = vmatpush1.xpose.msra.mxu0 0.0
        %1926 = vmatprep.subr.mxu0 0.0
        %1927 = vmatpush1.xpose.msra.mxu0 %v1894
        %1928 = vmatprep.subr.mxu0 0.0
        %1929 = vmatpush2.xpose.msra.mxu0 0.0
        %1930 = vmatprep.subr.mxu0 0.0
        %1931 = vmatpush2.xpose.msra.mxu0 0.0
        %1932 = vmatprep.subr.mxu0 0.0
        %1933 = vmatpush2.xpose.msra.mxu0 0.0
        %1934 = vmatprep.subr.mxu0 0.0
        %1935 = vmatpush2.xpose.msra.mxu0 0.0
        %1936 = vmatprep.subr.mxu0 0.0
        %1937 = vmatpush2.xpose.msra.mxu0 0.0
        %1938 = vmatprep.subr.mxu0 0.0
        %1939 = vmatpush2.xpose.msra.mxu0 0.0
        %1940 = vmatprep.subr.mxu0 0.0
        %1941 = vmatpush2.xpose.msra.mxu0 0.0
        %1942 = vmatprep.subr.mxu0 0.0
        %1943 = vmatpush2.xpose.msra.mxu0 0.0
        %1944 = vmatprep.subr.mxu0 0.0
        %1945 = vmatpush2.xpose.msra.mxu0 0.0
        %1946 = vmatprep.subr.mxu0 0.0
        %1947 = vmatpush2.xpose.msra.mxu0 0.0
        %1948 = vmatprep.subr.mxu0 0.0
        %1949 = vmatpush2.xpose.msra.mxu0 0.0
        %1950 = vmatprep.subr.mxu0 0.0
        %1951 = vmatpush2.xpose.msra.mxu0 0.0
        %1952 = vmatprep.subr.mxu0 0.0
        %1953 = vmatpush2.xpose.msra.mxu0 0.0
        %1954 = vmatprep.subr.mxu0 0.0
        %1955 = vmatpush2.xpose.msra.mxu0 0.0
        %1956 = vmatprep.subr.mxu0 0.0
        %1957 = vmatpush2.xpose.msra.mxu0 0.0
        %1958 = vmatprep.subr.mxu0 0.0
        %1959 = vmatpush2.xpose.msra.mxu0 0.0
        %1960 = vmatprep.mubr.f32.mxu0 0.0
        %1961 = vmatmul.mubr.f32.gmra.mxu0 %v1892
        %v1962 = vpop.f32.mrf.mxu0
        %v1963 = vadd.f32 0.0, %v1962
        %v1964 = vpop.f32.mrf.mxu0
        %1965 = vdwg.mxu0
        %v1966 = vmul.f32 %v1963, 0.17677669
        %v1967 = vsel %vm1168, -1e+09, %v1966
        %v1968 = vsel %vm1248, %v1967, -inf
        %1969 = vmax.xlane.f32.xlu0 %v1968
        %v1970 = vpop.xlane.xlu0 %1969
        %v1971 = vsub.f32 %v1967, %v1970
        %v1972 = vmul.f32 %v1971, 1.442695
        %v1973 = vpow.pop %v1972
        %v1974 = vsel %vm1248, %v1973, 0.0
        %1975 = vadd.xlane.f32.xlu0 %v1974
        %v1976 = vpop.xlane.xlu0 %1975
        %v1977 = vrcp.pop %v1976
        %v1978 = vmul.f32 %v1973, %v1977
        %1979 = vrot.lane.b32.xlu0 %v1165, 32
        %v1980 = vpop.permute.xlu0 %1979
        %v1983 = vsel %vm1248, %v1978, 0
        %1985 = vmatprep.subr.mxu0 0.0
        %1986 = vmatpush1.msra.mxu0 0.0
        %1987 = vmatprep.subr.mxu0 0.0
        %1988 = vmatpush1.msra.mxu0 0.0
        %1989 = vmatprep.subr.mxu0 0.0
        %1990 = vmatpush1.msra.mxu0 0.0
        %1991 = vmatprep.subr.mxu0 0.0
        %1992 = vmatpush1.msra.mxu0 0.0
        %1993 = vmatprep.subr.mxu0 0.0
        %1994 = vmatpush1.msra.mxu0 0.0
        %1995 = vmatprep.subr.mxu0 0.0
        %1996 = vmatpush1.msra.mxu0 0.0
        %1997 = vmatprep.subr.mxu0 0.0
        %1998 = vmatpush1.msra.mxu0 0.0
        %1999 = vmatprep.subr.mxu0 0.0
        %2000 = vmatpush1.msra.mxu0 0.0
        %2001 = vmatprep.subr.mxu0 0.0
        %2002 = vmatpush1.msra.mxu0 0.0
        %2003 = vmatprep.subr.mxu0 0.0
        %2004 = vmatpush1.msra.mxu0 0.0
        %2005 = vmatprep.subr.mxu0 0.0
        %2006 = vmatpush1.msra.mxu0 0.0
        %2007 = vmatprep.subr.mxu0 0.0
        %2008 = vmatpush1.msra.mxu0 0.0
        %2009 = vmatprep.subr.mxu0 0.0
        %2010 = vmatpush1.msra.mxu0 0.0
        %2011 = vmatprep.subr.mxu0 0.0
        %2012 = vmatpush1.msra.mxu0 0.0
        %2013 = vmatprep.subr.mxu0 0.0
        %2014 = vmatpush1.msra.mxu0 0.0
        %2015 = vmatprep.subr.mxu0 0.0
        %2016 = vmatpush1.msra.mxu0 %v1980
        %2017 = vmatprep.subr.mxu0 0.0
        %2018 = vmatpush2.msra.mxu0 0.0
        %2019 = vmatprep.subr.mxu0 0.0
        %2020 = vmatpush2.msra.mxu0 0.0
        %2021 = vmatprep.subr.mxu0 0.0
        %2022 = vmatpush2.msra.mxu0 0.0
        %2023 = vmatprep.subr.mxu0 0.0
        %2024 = vmatpush2.msra.mxu0 0.0
        %2025 = vmatprep.subr.mxu0 0.0
        %2026 = vmatpush2.msra.mxu0 0.0
        %2027 = vmatprep.subr.mxu0 0.0
        %2028 = vmatpush2.msra.mxu0 0.0
        %2029 = vmatprep.subr.mxu0 0.0
        %2030 = vmatpush2.msra.mxu0 0.0
        %2031 = vmatprep.subr.mxu0 0.0
        %2032 = vmatpush2.msra.mxu0 0.0
        %2033 = vmatprep.subr.mxu0 0.0
        %2034 = vmatpush2.msra.mxu0 0.0
        %2035 = vmatprep.subr.mxu0 0.0
        %2036 = vmatpush2.msra.mxu0 0.0
        %2037 = vmatprep.subr.mxu0 0.0
        %2038 = vmatpush2.msra.mxu0 0.0
        %2039 = vmatprep.subr.mxu0 0.0
        %2040 = vmatpush2.msra.mxu0 0.0
        %2041 = vmatprep.subr.mxu0 0.0
        %2042 = vmatpush2.msra.mxu0 0.0
        %2043 = vmatprep.subr.mxu0 0.0
        %2044 = vmatpush2.msra.mxu0 0.0
        %2045 = vmatprep.subr.mxu0 0.0
        %2046 = vmatpush2.msra.mxu0 0.0
        %2047 = vmatprep.subr.mxu0 0.0
        %2048 = vmatpush2.msra.mxu0 0.0
        %2049 = vmatprep.mubr.f32.mxu0 0.0
        %2050 = vmatmul.mubr.f32.gmra.mxu0 %v1983
        %v2051 = vpop.f32.mrf.mxu0
        %v2052 = vadd.f32 0.0, %v2051
        %v2053 = vpop.f32.mrf.mxu0
        %2054 = vdwg.mxu0
        %v2056 = vsel %vm1169, %v2052, 0
        %2058 = vmatprep.subr.mxu0 0.0
        %2059 = vmatpush1.msra.mxu0 0.0
        %2060 = vmatprep.subr.mxu0 0.0
        %2061 = vmatpush1.msra.mxu0 0.0
        %2062 = vmatprep.subr.mxu0 0.0
        %2063 = vmatpush1.msra.mxu0 0.0
        %2064 = vmatprep.subr.mxu0 0.0
        %2065 = vmatpush1.msra.mxu0 0.0
        %2066 = vmatprep.subr.mxu0 0.0
        %2067 = vmatpush1.msra.mxu0 0.0
        %2068 = vmatprep.subr.mxu0 0.0
        %2069 = vmatpush1.msra.mxu0 0.0
        %2070 = vmatprep.subr.mxu0 0.0
        %2071 = vmatpush1.msra.mxu0 0.0
        %2072 = vmatprep.subr.mxu0 0.0
        %2073 = vmatpush1.msra.mxu0 0.0
        %2074 = vmatprep.subr.mxu0 0.0
        %2075 = vmatpush1.msra.mxu0 0.0
        %2076 = vmatprep.subr.mxu0 0.0
        %2077 = vmatpush1.msra.mxu0 0.0
        %2078 = vmatprep.subr.mxu0 0.0
        %2079 = vmatpush1.msra.mxu0 0.0
        %2080 = vmatprep.subr.mxu0 0.0
        %2081 = vmatpush1.msra.mxu0 0.0
        %2082 = vmatprep.subr.mxu0 0.0
        %2083 = vmatpush1.msra.mxu0 %v957
        %2084 = vmatprep.subr.mxu0 0.0
        %2085 = vmatpush1.msra.mxu0 %v956
        %2086 = vmatprep.subr.mxu0 0.0
        %2087 = vmatpush1.msra.mxu0 %v955
        %2088 = vmatprep.subr.mxu0 0.0
        %2089 = vmatpush1.msra.mxu0 %v954
        %2090 = vmatprep.subr.mxu0 0.0
        %2091 = vmatpush2.msra.mxu0 0.0
        %2092 = vmatprep.subr.mxu0 0.0
        %2093 = vmatpush2.msra.mxu0 0.0
        %2094 = vmatprep.subr.mxu0 0.0
        %2095 = vmatpush2.msra.mxu0 0.0
        %2096 = vmatprep.subr.mxu0 0.0
        %2097 = vmatpush2.msra.mxu0 0.0
        %2098 = vmatprep.subr.mxu0 0.0
        %2099 = vmatpush2.msra.mxu0 0.0
        %2100 = vmatprep.subr.mxu0 0.0
        %2101 = vmatpush2.msra.mxu0 0.0
        %2102 = vmatprep.subr.mxu0 0.0
        %2103 = vmatpush2.msra.mxu0 0.0
        %2104 = vmatprep.subr.mxu0 0.0
        %2105 = vmatpush2.msra.mxu0 0.0
        %2106 = vmatprep.subr.mxu0 0.0
        %2107 = vmatpush2.msra.mxu0 0.0
        %2108 = vmatprep.subr.mxu0 0.0
        %2109 = vmatpush2.msra.mxu0 0.0
        %2110 = vmatprep.subr.mxu0 0.0
        %2111 = vmatpush2.msra.mxu0 0.0
        %2112 = vmatprep.subr.mxu0 0.0
        %2113 = vmatpush2.msra.mxu0 0.0
        %2114 = vmatprep.subr.mxu0 0.0
        %2115 = vmatpush2.msra.mxu0 0.0
        %2116 = vmatprep.subr.mxu0 0.0
        %2117 = vmatpush2.msra.mxu0 0.0
        %2118 = vmatprep.subr.mxu0 0.0
        %2119 = vmatpush2.msra.mxu0 0.0
        %2120 = vmatprep.subr.mxu0 0.0
        %2121 = vmatpush2.msra.mxu0 0.0
        %2122 = vmatprep.mubr.f32.mxu0 0.0
        %2123 = vmatmul.mubr.f32.gmra.mxu0 %v2056
        %v2124 = vpop.f32.mrf.mxu0
        %v2125 = vadd.f32 0.0, %v2124
        %v2126 = vpop.f32.mrf.mxu0
        %2127 = vdwg.mxu0
        %v2128 = vadd.f32 %v1887, %v2125
        %v2129 = vadd.f32 %v851, %v2128
        %s2130 = scalar_lea.vmem %s837, 1
        %v2131 = vld [vmem:[%s2130] sm:$0x1]
        %s2132 = scalar_lea.vmem %s702, 1 [#allocation11]
        %v2133 = vld [vmem:[%s2132] sm:$0x1]
        %2134 = vadd.xlane.f32.xlu0 %v2129
        %v2135 = vpop.xlane.xlu0 %2134
        %v2136 = vmul.f32 %v2135, %v860
        %v2137 = vsub.f32 %v2129, %v2136
        %v2138 = vmul.f32 %v2137, %v2137
        %2139 = vadd.xlane.f32.xlu0 %v2138
        %v2140 = vpop.xlane.xlu0 %2139
        %v2141 = vmul.f32 %v2140, 0.007874016
        %v2142 = vrsqrt.pop %v2141
        %v2143 = vmul.f32 %v2141, %v2142
        %vm2144 = vcmp.eq.f32.partialorder %v2141, inf
        %v2145 = vsel %vm2144, %v2141, %v2143
        %vm2146 = vcmp.eq.f32.partialorder %v2141, 0.0
        %v2147 = vand.u32 %v2141, 2147483648
        %v2148 = vsel %vm2146, %v2147, %v2145
        %v2149 = vadd.f32 %v2148, 1e-06
        %v2150 = vrcp.pop %v2149
        %v2151 = vmul.f32 %v2137, %v2150
        %v2153 = vlaneseq
        %v2154 = vshrl.u32 %v2153, 7
        %v2155 = vsub.s32 0, %v2154
        %v2156 = vrot.slane %v2131, %v2155
        %v2158 = vmul.f32 %v2156, %v2151
        %v2160 = vlaneseq
        %v2161 = vshrl.u32 %v2160, 7
        %v2162 = vsub.s32 0, %v2161
        %v2163 = vrot.slane %v2133, %v2162
        %v2165 = vadd.f32 %v2158, %v2163
        %v2166 = vld [vmem:[%s720] sm:$0xff]
        %v2167 = vld [vmem:[%s720 + $0x8] sm:$0xff]
        %v2168 = vld [vmem:[%s720 + $0x10] sm:$0xff]
        %v2169 = vld [vmem:[%s720 + $0x18] sm:$0xff]
        %v2170 = vld [vmem:[%s720 + $0x20] sm:$0xff]
        %v2171 = vld [vmem:[%s720 + $0x28] sm:$0xff]
        %v2172 = vld [vmem:[%s720 + $0x30] sm:$0xff]
        %v2173 = vld [vmem:[%s720 + $0x38] sm:$0xff]
        %v2174 = vld [vmem:[%s720 + $0x40] sm:$0xff]
        %v2175 = vld [vmem:[%s720 + $0x48] sm:$0xff]
        %v2176 = vld [vmem:[%s720 + $0x50] sm:$0xff]
        %v2177 = vld [vmem:[%s720 + $0x58] sm:$0xff]
        %v2178 = vld [vmem:[%s720 + $0x60] sm:$0xff]
        %v2179 = vld [vmem:[%s720 + $0x68] sm:$0xff]
        %v2180 = vld [vmem:[%s720 + $0x70] sm:$0xff]
        %v2181 = vld [vmem:[%s720 + $0x78] sm:$0xff]
        %s2182 = scalar_lea.vmem %s720, 128 [#allocation14]
        %v2183 = vld [vmem:[%s2182] sm:$0xff]
        %v2184 = vld [vmem:[%s2182 + $0x8] sm:$0xff]
        %v2185 = vld [vmem:[%s2182 + $0x10] sm:$0xff]
        %v2186 = vld [vmem:[%s2182 + $0x18] sm:$0xff]
        %v2187 = vld [vmem:[%s2182 + $0x20] sm:$0xff]
        %v2188 = vld [vmem:[%s2182 + $0x28] sm:$0xff]
        %v2189 = vld [vmem:[%s2182 + $0x30] sm:$0xff]
        %v2190 = vld [vmem:[%s2182 + $0x38] sm:$0xff]
        %v2191 = vld [vmem:[%s2182 + $0x40] sm:$0xff]
        %v2192 = vld [vmem:[%s2182 + $0x48] sm:$0xff]
        %v2193 = vld [vmem:[%s2182 + $0x50] sm:$0xff]
        %v2194 = vld [vmem:[%s2182 + $0x58] sm:$0xff]
        %v2195 = vld [vmem:[%s2182 + $0x60] sm:$0xff]
        %v2196 = vld [vmem:[%s2182 + $0x68] sm:$0xff]
        %v2197 = vld [vmem:[%s2182 + $0x70] sm:$0xff]
        %v2198 = vld [vmem:[%s2182 + $0x78] sm:$0xff]
        %s2199 = scalar_lea.vmem %s720, 256 [#allocation14]
        %v2200 = vld [vmem:[%s2199] sm:$0xff]
        %v2201 = vld [vmem:[%s2199 + $0x8] sm:$0xff]
        %v2202 = vld [vmem:[%s2199 + $0x10] sm:$0xff]
        %v2203 = vld [vmem:[%s2199 + $0x18] sm:$0xff]
        %v2204 = vld [vmem:[%s2199 + $0x20] sm:$0xff]
        %v2205 = vld [vmem:[%s2199 + $0x28] sm:$0xff]
        %v2206 = vld [vmem:[%s2199 + $0x30] sm:$0xff]
        %v2207 = vld [vmem:[%s2199 + $0x38] sm:$0xff]
        %v2208 = vld [vmem:[%s2199 + $0x40] sm:$0xff]
        %v2209 = vld [vmem:[%s2199 + $0x48] sm:$0xff]
        %v2210 = vld [vmem:[%s2199 + $0x50] sm:$0xff]
        %v2211 = vld [vmem:[%s2199 + $0x58] sm:$0xff]
        %v2212 = vld [vmem:[%s2199 + $0x60] sm:$0xff]
        %v2213 = vld [vmem:[%s2199 + $0x68] sm:$0xff]
        %v2214 = vld [vmem:[%s2199 + $0x70] sm:$0xff]
        %v2215 = vld [vmem:[%s2199 + $0x78] sm:$0xff]
        %s2216 = scalar_lea.vmem %s720, 384 [#allocation14]
        %v2217 = vld [vmem:[%s2216] sm:$0xff]
        %v2218 = vld [vmem:[%s2216 + $0x8] sm:$0xff]
        %v2219 = vld [vmem:[%s2216 + $0x10] sm:$0xff]
        %v2220 = vld [vmem:[%s2216 + $0x18] sm:$0xff]
        %v2221 = vld [vmem:[%s2216 + $0x20] sm:$0xff]
        %v2222 = vld [vmem:[%s2216 + $0x28] sm:$0xff]
        %v2223 = vld [vmem:[%s2216 + $0x30] sm:$0xff]
        %v2224 = vld [vmem:[%s2216 + $0x38] sm:$0xff]
        %v2225 = vld [vmem:[%s2216 + $0x40] sm:$0xff]
        %v2226 = vld [vmem:[%s2216 + $0x48] sm:$0xff]
        %v2227 = vld [vmem:[%s2216 + $0x50] sm:$0xff]
        %v2228 = vld [vmem:[%s2216 + $0x58] sm:$0xff]
        %v2229 = vld [vmem:[%s2216 + $0x60] sm:$0xff]
        %v2230 = vld [vmem:[%s2216 + $0x68] sm:$0xff]
        %v2231 = vld [vmem:[%s2216 + $0x70] sm:$0xff]
        %v2232 = vld [vmem:[%s2216 + $0x78] sm:$0xff]
        %2233 = vmatprep.subr.mxu0 0.0
        %2234 = vmatpush1.msra.mxu0 %v2181
        %2235 = vmatprep.subr.mxu0 0.0
        %2236 = vmatpush1.msra.mxu0 %v2180
        %2237 = vmatprep.subr.mxu0 0.0
        %2238 = vmatpush1.msra.mxu0 %v2179
        %2239 = vmatprep.subr.mxu0 0.0
        %2240 = vmatpush1.msra.mxu0 %v2178
        %2241 = vmatprep.subr.mxu0 0.0
        %2242 = vmatpush1.msra.mxu0 %v2177
        %2243 = vmatprep.subr.mxu0 0.0
        %2244 = vmatpush1.msra.mxu0 %v2176
        %2245 = vmatprep.subr.mxu0 0.0
        %2246 = vmatpush1.msra.mxu0 %v2175
        %2247 = vmatprep.subr.mxu0 0.0
        %2248 = vmatpush1.msra.mxu0 %v2174
        %2249 = vmatprep.subr.mxu0 0.0
        %2250 = vmatpush1.msra.mxu0 %v2173
        %2251 = vmatprep.subr.mxu0 0.0
        %2252 = vmatpush1.msra.mxu0 %v2172
        %2253 = vmatprep.subr.mxu0 0.0
        %2254 = vmatpush1.msra.mxu0 %v2171
        %2255 = vmatprep.subr.mxu0 0.0
        %2256 = vmatpush1.msra.mxu0 %v2170
        %2257 = vmatprep.subr.mxu0 0.0
        %2258 = vmatpush1.msra.mxu0 %v2169
        %2259 = vmatprep.subr.mxu0 0.0
        %2260 = vmatpush1.msra.mxu0 %v2168
        %2261 = vmatprep.subr.mxu0 0.0
        %2262 = vmatpush1.msra.mxu0 %v2167
        %2263 = vmatprep.subr.mxu0 0.0
        %2264 = vmatpush1.msra.mxu0 %v2166
        %2265 = vmatprep.subr.mxu0 0.0
        %2266 = vmatpush2.msra.mxu0 0.0
        %2267 = vmatprep.subr.mxu0 0.0
        %2268 = vmatpush2.msra.mxu0 0.0
        %2269 = vmatprep.subr.mxu0 0.0
        %2270 = vmatpush2.msra.mxu0 0.0
        %2271 = vmatprep.subr.mxu0 0.0
        %2272 = vmatpush2.msra.mxu0 0.0
        %2273 = vmatprep.subr.mxu0 0.0
        %2274 = vmatpush2.msra.mxu0 0.0
        %2275 = vmatprep.subr.mxu0 0.0
        %2276 = vmatpush2.msra.mxu0 0.0
        %2277 = vmatprep.subr.mxu0 0.0
        %2278 = vmatpush2.msra.mxu0 0.0
        %2279 = vmatprep.subr.mxu0 0.0
        %2280 = vmatpush2.msra.mxu0 0.0
        %2281 = vmatprep.subr.mxu0 0.0
        %2282 = vmatpush2.msra.mxu0 0.0
        %2283 = vmatprep.subr.mxu0 0.0
        %2284 = vmatpush2.msra.mxu0 0.0
        %2285 = vmatprep.subr.mxu0 0.0
        %2286 = vmatpush2.msra.mxu0 0.0
        %2287 = vmatprep.subr.mxu0 0.0
        %2288 = vmatpush2.msra.mxu0 0.0
        %2289 = vmatprep.subr.mxu0 0.0
        %2290 = vmatpush2.msra.mxu0 0.0
        %2291 = vmatprep.subr.mxu0 0.0
        %2292 = vmatpush2.msra.mxu0 0.0
        %2293 = vmatprep.subr.mxu0 0.0
        %2294 = vmatpush2.msra.mxu0 0.0
        %2295 = vmatprep.subr.mxu0 0.0
        %2296 = vmatpush2.msra.mxu0 0.0
        %2297 = vmatprep.mubr.f32.mxu0 0.0
        %2298 = vmatmul.mubr.f32.gmra.mxu0 %v2165
        %v2299 = vpop.f32.mrf.mxu0
        %v2300 = vadd.f32 0.0, %v2299
        %v2301 = vpop.f32.mrf.mxu0
        %2302 = vdwg.mxu0
        %2303 = vmatprep.subr.mxu0 0.0
        %2304 = vmatpush1.msra.mxu0 %v2198
        %2305 = vmatprep.subr.mxu0 0.0
        %2306 = vmatpush1.msra.mxu0 %v2197
        %2307 = vmatprep.subr.mxu0 0.0
        %2308 = vmatpush1.msra.mxu0 %v2196
        %2309 = vmatprep.subr.mxu0 0.0
        %2310 = vmatpush1.msra.mxu0 %v2195
        %2311 = vmatprep.subr.mxu0 0.0
        %2312 = vmatpush1.msra.mxu0 %v2194
        %2313 = vmatprep.subr.mxu0 0.0
        %2314 = vmatpush1.msra.mxu0 %v2193
        %2315 = vmatprep.subr.mxu0 0.0
        %2316 = vmatpush1.msra.mxu0 %v2192
        %2317 = vmatprep.subr.mxu0 0.0
        %2318 = vmatpush1.msra.mxu0 %v2191
        %2319 = vmatprep.subr.mxu0 0.0
        %2320 = vmatpush1.msra.mxu0 %v2190
        %2321 = vmatprep.subr.mxu0 0.0
        %2322 = vmatpush1.msra.mxu0 %v2189
        %2323 = vmatprep.subr.mxu0 0.0
        %2324 = vmatpush1.msra.mxu0 %v2188
        %2325 = vmatprep.subr.mxu0 0.0
        %2326 = vmatpush1.msra.mxu0 %v2187
        %2327 = vmatprep.subr.mxu0 0.0
        %2328 = vmatpush1.msra.mxu0 %v2186
        %2329 = vmatprep.subr.mxu0 0.0
        %2330 = vmatpush1.msra.mxu0 %v2185
        %2331 = vmatprep.subr.mxu0 0.0
        %2332 = vmatpush1.msra.mxu0 %v2184
        %2333 = vmatprep.subr.mxu0 0.0
        %2334 = vmatpush1.msra.mxu0 %v2183
        %2335 = vmatprep.subr.mxu0 0.0
        %2336 = vmatpush2.msra.mxu0 0.0
        %2337 = vmatprep.subr.mxu0 0.0
        %2338 = vmatpush2.msra.mxu0 0.0
        %2339 = vmatprep.subr.mxu0 0.0
        %2340 = vmatpush2.msra.mxu0 0.0
        %2341 = vmatprep.subr.mxu0 0.0
        %2342 = vmatpush2.msra.mxu0 0.0
        %2343 = vmatprep.subr.mxu0 0.0
        %2344 = vmatpush2.msra.mxu0 0.0
        %2345 = vmatprep.subr.mxu0 0.0
        %2346 = vmatpush2.msra.mxu0 0.0
        %2347 = vmatprep.subr.mxu0 0.0
        %2348 = vmatpush2.msra.mxu0 0.0
        %2349 = vmatprep.subr.mxu0 0.0
        %2350 = vmatpush2.msra.mxu0 0.0
        %2351 = vmatprep.subr.mxu0 0.0
        %2352 = vmatpush2.msra.mxu0 0.0
        %2353 = vmatprep.subr.mxu0 0.0
        %2354 = vmatpush2.msra.mxu0 0.0
        %2355 = vmatprep.subr.mxu0 0.0
        %2356 = vmatpush2.msra.mxu0 0.0
        %2357 = vmatprep.subr.mxu0 0.0
        %2358 = vmatpush2.msra.mxu0 0.0
        %2359 = vmatprep.subr.mxu0 0.0
        %2360 = vmatpush2.msra.mxu0 0.0
        %2361 = vmatprep.subr.mxu0 0.0
        %2362 = vmatpush2.msra.mxu0 0.0
        %2363 = vmatprep.subr.mxu0 0.0
        %2364 = vmatpush2.msra.mxu0 0.0
        %2365 = vmatprep.subr.mxu0 0.0
        %2366 = vmatpush2.msra.mxu0 0.0
        %2367 = vmatprep.mubr.f32.mxu0 0.0
        %2368 = vmatmul.mubr.f32.gmra.mxu0 %v852
        %v2369 = vpop.f32.mrf.mxu0
        %v2370 = vadd.f32 0.0, %v2369
        %v2371 = vpop.f32.mrf.mxu0
        %2372 = vmatprep.mubr.f32.mxu0 0.0
        %2373 = vmatmul.mubr.f32.gmra.mxu0 %v853
        %v2374 = vpop.f32.mrf.mxu0
        %v2375 = vadd.f32 0.0, %v2374
        %v2376 = vpop.f32.mrf.mxu0
        %2377 = vdwg.mxu0
        %2378 = vmatprep.subr.mxu0 0.0
        %2379 = vmatpush1.msra.mxu0 %v2215
        %2380 = vmatprep.subr.mxu0 0.0
        %2381 = vmatpush1.msra.mxu0 %v2214
        %2382 = vmatprep.subr.mxu0 0.0
        %2383 = vmatpush1.msra.mxu0 %v2213
        %2384 = vmatprep.subr.mxu0 0.0
        %2385 = vmatpush1.msra.mxu0 %v2212
        %2386 = vmatprep.subr.mxu0 0.0
        %2387 = vmatpush1.msra.mxu0 %v2211
        %2388 = vmatprep.subr.mxu0 0.0
        %2389 = vmatpush1.msra.mxu0 %v2210
        %2390 = vmatprep.subr.mxu0 0.0
        %2391 = vmatpush1.msra.mxu0 %v2209
        %2392 = vmatprep.subr.mxu0 0.0
        %2393 = vmatpush1.msra.mxu0 %v2208
        %2394 = vmatprep.subr.mxu0 0.0
        %2395 = vmatpush1.msra.mxu0 %v2207
        %2396 = vmatprep.subr.mxu0 0.0
        %2397 = vmatpush1.msra.mxu0 %v2206
        %2398 = vmatprep.subr.mxu0 0.0
        %2399 = vmatpush1.msra.mxu0 %v2205
        %2400 = vmatprep.subr.mxu0 0.0
        %2401 = vmatpush1.msra.mxu0 %v2204
        %2402 = vmatprep.subr.mxu0 0.0
        %2403 = vmatpush1.msra.mxu0 %v2203
        %2404 = vmatprep.subr.mxu0 0.0
        %2405 = vmatpush1.msra.mxu0 %v2202
        %2406 = vmatprep.subr.mxu0 0.0
        %2407 = vmatpush1.msra.mxu0 %v2201
        %2408 = vmatprep.subr.mxu0 0.0
        %2409 = vmatpush1.msra.mxu0 %v2200
        %2410 = vmatprep.subr.mxu0 0.0
        %2411 = vmatpush2.msra.mxu0 0.0
        %2412 = vmatprep.subr.mxu0 0.0
        %2413 = vmatpush2.msra.mxu0 0.0
        %2414 = vmatprep.subr.mxu0 0.0
        %2415 = vmatpush2.msra.mxu0 0.0
        %2416 = vmatprep.subr.mxu0 0.0
        %2417 = vmatpush2.msra.mxu0 0.0
        %2418 = vmatprep.subr.mxu0 0.0
        %2419 = vmatpush2.msra.mxu0 0.0
        %2420 = vmatprep.subr.mxu0 0.0
        %2421 = vmatpush2.msra.mxu0 0.0
        %2422 = vmatprep.subr.mxu0 0.0
        %2423 = vmatpush2.msra.mxu0 0.0
        %2424 = vmatprep.subr.mxu0 0.0
        %2425 = vmatpush2.msra.mxu0 0.0
        %2426 = vmatprep.subr.mxu0 0.0
        %2427 = vmatpush2.msra.mxu0 0.0
        %2428 = vmatprep.subr.mxu0 0.0
        %2429 = vmatpush2.msra.mxu0 0.0
        %2430 = vmatprep.subr.mxu0 0.0
        %2431 = vmatpush2.msra.mxu0 0.0
        %2432 = vmatprep.subr.mxu0 0.0
        %2433 = vmatpush2.msra.mxu0 0.0
        %2434 = vmatprep.subr.mxu0 0.0
        %2435 = vmatpush2.msra.mxu0 0.0
        %2436 = vmatprep.subr.mxu0 0.0
        %2437 = vmatpush2.msra.mxu0 0.0
        %2438 = vmatprep.subr.mxu0 0.0
        %2439 = vmatpush2.msra.mxu0 0.0
        %2440 = vmatprep.subr.mxu0 0.0
        %2441 = vmatpush2.msra.mxu0 0.0
        %2442 = vmatprep.mubr.f32.mxu0 0.0
        %2443 = vmatmul.mubr.f32.gmra.mxu0 %v852
        %v2444 = vpop.f32.mrf.mxu0
        %v2445 = vadd.f32 0.0, %v2444
        %v2446 = vpop.f32.mrf.mxu0
        %2447 = vmatprep.mubr.f32.mxu0 0.0
        %2448 = vmatmul.mubr.f32.gmra.mxu0 %v853
        %v2449 = vpop.f32.mrf.mxu0
        %v2450 = vadd.f32 0.0, %v2449
        %v2451 = vpop.f32.mrf.mxu0
        %2452 = vdwg.mxu0
        %vm2453 = vcmp.eq.f32.partialorder %v854, 0.0
        %v2455 = vsel %vm1169, %v2300, 0
        %v2458 = vsel %vm1169, %v2370, 0
        %v2461 = vsel %vm1169, %v2375, 0
        %2463 = vmatprep.subr.mxu0 0.0
        %2464 = vmatpush1.xpose.msra.mxu0 0.0
        %2465 = vmatprep.subr.mxu0 0.0
        %2466 = vmatpush1.xpose.msra.mxu0 0.0
        %2467 = vmatprep.subr.mxu0 0.0
        %2468 = vmatpush1.xpose.msra.mxu0 0.0
        %2469 = vmatprep.subr.mxu0 0.0
        %2470 = vmatpush1.xpose.msra.mxu0 0.0
        %2471 = vmatprep.subr.mxu0 0.0
        %2472 = vmatpush1.xpose.msra.mxu0 0.0
        %2473 = vmatprep.subr.mxu0 0.0
        %2474 = vmatpush1.xpose.msra.mxu0 0.0
        %2475 = vmatprep.subr.mxu0 0.0
        %2476 = vmatpush1.xpose.msra.mxu0 0.0
        %2477 = vmatprep.subr.mxu0 0.0
        %2478 = vmatpush1.xpose.msra.mxu0 0.0
        %2479 = vmatprep.subr.mxu0 0.0
        %2480 = vmatpush1.xpose.msra.mxu0 0.0
        %2481 = vmatprep.subr.mxu0 0.0
        %2482 = vmatpush1.xpose.msra.mxu0 0.0
        %2483 = vmatprep.subr.mxu0 0.0
        %2484 = vmatpush1.xpose.msra.mxu0 0.0
        %2485 = vmatprep.subr.mxu0 0.0
        %2486 = vmatpush1.xpose.msra.mxu0 0.0
        %2487 = vmatprep.subr.mxu0 0.0
        %2488 = vmatpush1.xpose.msra.mxu0 0.0
        %2489 = vmatprep.subr.mxu0 0.0
        %2490 = vmatpush1.xpose.msra.mxu0 0.0
        %2491 = vmatprep.subr.mxu0 0.0
        %2492 = vmatpush1.xpose.msra.mxu0 %v2461
        %2493 = vmatprep.subr.mxu0 0.0
        %2494 = vmatpush1.xpose.msra.mxu0 %v2458
        %2495 = vmatprep.subr.mxu0 0.0
        %2496 = vmatpush2.xpose.msra.mxu0 0.0
        %2497 = vmatprep.subr.mxu0 0.0
        %2498 = vmatpush2.xpose.msra.mxu0 0.0
        %2499 = vmatprep.subr.mxu0 0.0
        %2500 = vmatpush2.xpose.msra.mxu0 0.0
        %2501 = vmatprep.subr.mxu0 0.0
        %2502 = vmatpush2.xpose.msra.mxu0 0.0
        %2503 = vmatprep.subr.mxu0 0.0
        %2504 = vmatpush2.xpose.msra.mxu0 0.0
        %2505 = vmatprep.subr.mxu0 0.0
        %2506 = vmatpush2.xpose.msra.mxu0 0.0
        %2507 = vmatprep.subr.mxu0 0.0
        %2508 = vmatpush2.xpose.msra.mxu0 0.0
        %2509 = vmatprep.subr.mxu0 0.0
        %2510 = vmatpush2.xpose.msra.mxu0 0.0
        %2511 = vmatprep.subr.mxu0 0.0
        %2512 = vmatpush2.xpose.msra.mxu0 0.0
        %2513 = vmatprep.subr.mxu0 0.0
        %2514 = vmatpush2.xpose.msra.mxu0 0.0
        %2515 = vmatprep.subr.mxu0 0.0
        %2516 = vmatpush2.xpose.msra.mxu0 0.0
        %2517 = vmatprep.subr.mxu0 0.0
        %2518 = vmatpush2.xpose.msra.mxu0 0.0
        %2519 = vmatprep.subr.mxu0 0.0
        %2520 = vmatpush2.xpose.msra.mxu0 0.0
        %2521 = vmatprep.subr.mxu0 0.0
        %2522 = vmatpush2.xpose.msra.mxu0 0.0
        %2523 = vmatprep.subr.mxu0 0.0
        %2524 = vmatpush2.xpose.msra.mxu0 0.0
        %2525 = vmatprep.subr.mxu0 0.0
        %2526 = vmatpush2.xpose.msra.mxu0 0.0
        %2527 = vmatprep.mubr.f32.mxu0 0.0
        %2528 = vmatmul.mubr.f32.gmra.mxu0 %v2455
        %v2529 = vpop.f32.mrf.mxu0
        %v2530 = vadd.f32 0.0, %v2529
        %v2531 = vpop.f32.mrf.mxu0
        %2532 = vdwg.mxu0
        %v2533 = vmul.f32 %v2530, 0.17677669
        %v2534 = vsel %vm2453, -1e+09, %v2533
        %vm2535 = vcmask 130048
        %v2536 = vsel %vm2535, %v2534, -inf
        %2537 = vmax.xlane.f32.xlu0 %v2536
        %v2538 = vpop.xlane.xlu0 %2537
        %v2539 = vsub.f32 %v2534, %v2538
        %v2540 = vmul.f32 %v2539, 1.442695
        %v2541 = vpow.pop %v2540
        %v2542 = vsel %vm2535, %v2541, 0.0
        %2543 = vadd.xlane.f32.xlu0 %v2542
        %v2544 = vpop.xlane.xlu0 %2543
        %v2545 = vrcp.pop %v2544
        %v2546 = vmul.f32 %v2541, %v2545
        %v2548 = vsel %vm2535, %v2546, 0
        %2550 = vmatprep.subr.mxu0 0.0
        %2551 = vmatpush1.msra.mxu0 0.0
        %2552 = vmatprep.subr.mxu0 0.0
        %2553 = vmatpush1.msra.mxu0 0.0
        %2554 = vmatprep.subr.mxu0 0.0
        %2555 = vmatpush1.msra.mxu0 0.0
        %2556 = vmatprep.subr.mxu0 0.0
        %2557 = vmatpush1.msra.mxu0 0.0
        %2558 = vmatprep.subr.mxu0 0.0
        %2559 = vmatpush1.msra.mxu0 0.0
        %2560 = vmatprep.subr.mxu0 0.0
        %2561 = vmatpush1.msra.mxu0 0.0
        %2562 = vmatprep.subr.mxu0 0.0
        %2563 = vmatpush1.msra.mxu0 0.0
        %2564 = vmatprep.subr.mxu0 0.0
        %2565 = vmatpush1.msra.mxu0 0.0
        %2566 = vmatprep.subr.mxu0 0.0
        %2567 = vmatpush1.msra.mxu0 0.0
        %2568 = vmatprep.subr.mxu0 0.0
        %2569 = vmatpush1.msra.mxu0 0.0
        %2570 = vmatprep.subr.mxu0 0.0
        %2571 = vmatpush1.msra.mxu0 0.0
        %2572 = vmatprep.subr.mxu0 0.0
        %2573 = vmatpush1.msra.mxu0 0.0
        %2574 = vmatprep.subr.mxu0 0.0
        %2575 = vmatpush1.msra.mxu0 0.0
        %2576 = vmatprep.subr.mxu0 0.0
        %2577 = vmatpush1.msra.mxu0 0.0
        %2578 = vmatprep.subr.mxu0 0.0
        %2579 = vmatpush1.msra.mxu0 %v2450
        %2580 = vmatprep.subr.mxu0 0.0
        %2581 = vmatpush1.msra.mxu0 %v2445
        %2582 = vmatprep.subr.mxu0 0.0
        %2583 = vmatpush2.msra.mxu0 0.0
        %2584 = vmatprep.subr.mxu0 0.0
        %2585 = vmatpush2.msra.mxu0 0.0
        %2586 = vmatprep.subr.mxu0 0.0
        %2587 = vmatpush2.msra.mxu0 0.0
        %2588 = vmatprep.subr.mxu0 0.0
        %2589 = vmatpush2.msra.mxu0 0.0
        %2590 = vmatprep.subr.mxu0 0.0
        %2591 = vmatpush2.msra.mxu0 0.0
        %2592 = vmatprep.subr.mxu0 0.0
        %2593 = vmatpush2.msra.mxu0 0.0
        %2594 = vmatprep.subr.mxu0 0.0
        %2595 = vmatpush2.msra.mxu0 0.0
        %2596 = vmatprep.subr.mxu0 0.0
        %2597 = vmatpush2.msra.mxu0 0.0
        %2598 = vmatprep.subr.mxu0 0.0
        %2599 = vmatpush2.msra.mxu0 0.0
        %2600 = vmatprep.subr.mxu0 0.0
        %2601 = vmatpush2.msra.mxu0 0.0
        %2602 = vmatprep.subr.mxu0 0.0
        %2603 = vmatpush2.msra.mxu0 0.0
        %2604 = vmatprep.subr.mxu0 0.0
        %2605 = vmatpush2.msra.mxu0 0.0
        %2606 = vmatprep.subr.mxu0 0.0
        %2607 = vmatpush2.msra.mxu0 0.0
        %2608 = vmatprep.subr.mxu0 0.0
        %2609 = vmatpush2.msra.mxu0 0.0
        %2610 = vmatprep.subr.mxu0 0.0
        %2611 = vmatpush2.msra.mxu0 0.0
        %2612 = vmatprep.subr.mxu0 0.0
        %2613 = vmatpush2.msra.mxu0 0.0
        %2614 = vmatprep.mubr.f32.mxu0 0.0
        %2615 = vmatmul.mubr.f32.gmra.mxu0 %v2548
        %v2616 = vpop.f32.mrf.mxu0
        %v2617 = vadd.f32 0.0, %v2616
        %v2618 = vpop.f32.mrf.mxu0
        %2619 = vdwg.mxu0
        %2620 = vrot.lane.b32.xlu0 %v2300, 96
        %v2621 = vpop.permute.xlu0 %2620
        %2622 = vrot.lane.b32.xlu0 %v2370, 96
        %v2623 = vpop.permute.xlu0 %2622
        %2624 = vrot.lane.b32.xlu0 %v2375, 96
        %v2625 = vpop.permute.xlu0 %2624
        %v2626 = vsel %vm1169, %v2621, 0
        %v2628 = vsel %vm1169, %v2623, 0
        %v2630 = vsel %vm1169, %v2625, 0
        %2632 = vmatprep.subr.mxu0 0.0
        %2633 = vmatpush1.xpose.msra.mxu0 0.0
        %2634 = vmatprep.subr.mxu0 0.0
        %2635 = vmatpush1.xpose.msra.mxu0 0.0
        %2636 = vmatprep.subr.mxu0 0.0
        %2637 = vmatpush1.xpose.msra.mxu0 0.0
        %2638 = vmatprep.subr.mxu0 0.0
        %2639 = vmatpush1.xpose.msra.mxu0 0.0
        %2640 = vmatprep.subr.mxu0 0.0
        %2641 = vmatpush1.xpose.msra.mxu0 0.0
        %2642 = vmatprep.subr.mxu0 0.0
        %2643 = vmatpush1.xpose.msra.mxu0 0.0
        %2644 = vmatprep.subr.mxu0 0.0
        %2645 = vmatpush1.xpose.msra.mxu0 0.0
        %2646 = vmatprep.subr.mxu0 0.0
        %2647 = vmatpush1.xpose.msra.mxu0 0.0
        %2648 = vmatprep.subr.mxu0 0.0
        %2649 = vmatpush1.xpose.msra.mxu0 0.0
        %2650 = vmatprep.subr.mxu0 0.0
        %2651 = vmatpush1.xpose.msra.mxu0 0.0
        %2652 = vmatprep.subr.mxu0 0.0
        %2653 = vmatpush1.xpose.msra.mxu0 0.0
        %2654 = vmatprep.subr.mxu0 0.0
        %2655 = vmatpush1.xpose.msra.mxu0 0.0
        %2656 = vmatprep.subr.mxu0 0.0
        %2657 = vmatpush1.xpose.msra.mxu0 0.0
        %2658 = vmatprep.subr.mxu0 0.0
        %2659 = vmatpush1.xpose.msra.mxu0 0.0
        %2660 = vmatprep.subr.mxu0 0.0
        %2661 = vmatpush1.xpose.msra.mxu0 %v2630
        %2662 = vmatprep.subr.mxu0 0.0
        %2663 = vmatpush1.xpose.msra.mxu0 %v2628
        %2664 = vmatprep.subr.mxu0 0.0
        %2665 = vmatpush2.xpose.msra.mxu0 0.0
        %2666 = vmatprep.subr.mxu0 0.0
        %2667 = vmatpush2.xpose.msra.mxu0 0.0
        %2668 = vmatprep.subr.mxu0 0.0
        %2669 = vmatpush2.xpose.msra.mxu0 0.0
        %2670 = vmatprep.subr.mxu0 0.0
        %2671 = vmatpush2.xpose.msra.mxu0 0.0
        %2672 = vmatprep.subr.mxu0 0.0
        %2673 = vmatpush2.xpose.msra.mxu0 0.0
        %2674 = vmatprep.subr.mxu0 0.0
        %2675 = vmatpush2.xpose.msra.mxu0 0.0
        %2676 = vmatprep.subr.mxu0 0.0
        %2677 = vmatpush2.xpose.msra.mxu0 0.0
        %2678 = vmatprep.subr.mxu0 0.0
        %2679 = vmatpush2.xpose.msra.mxu0 0.0
        %2680 = vmatprep.subr.mxu0 0.0
        %2681 = vmatpush2.xpose.msra.mxu0 0.0
        %2682 = vmatprep.subr.mxu0 0.0
        %2683 = vmatpush2.xpose.msra.mxu0 0.0
        %2684 = vmatprep.subr.mxu0 0.0
        %2685 = vmatpush2.xpose.msra.mxu0 0.0
        %2686 = vmatprep.subr.mxu0 0.0
        %2687 = vmatpush2.xpose.msra.mxu0 0.0
        %2688 = vmatprep.subr.mxu0 0.0
        %2689 = vmatpush2.xpose.msra.mxu0 0.0
        %2690 = vmatprep.subr.mxu0 0.0
        %2691 = vmatpush2.xpose.msra.mxu0 0.0
        %2692 = vmatprep.subr.mxu0 0.0
        %2693 = vmatpush2.xpose.msra.mxu0 0.0
        %2694 = vmatprep.subr.mxu0 0.0
        %2695 = vmatpush2.xpose.msra.mxu0 0.0
        %2696 = vmatprep.mubr.f32.mxu0 0.0
        %2697 = vmatmul.mubr.f32.gmra.mxu0 %v2626
        %v2698 = vpop.f32.mrf.mxu0
        %v2699 = vadd.f32 0.0, %v2698
        %v2700 = vpop.f32.mrf.mxu0
        %2701 = vdwg.mxu0
        %v2702 = vmul.f32 %v2699, 0.17677669
        %v2703 = vsel %vm2453, -1e+09, %v2702
        %v2704 = vsel %vm2535, %v2703, -inf
        %2705 = vmax.xlane.f32.xlu0 %v2704
        %v2706 = vpop.xlane.xlu0 %2705
        %v2707 = vsub.f32 %v2703, %v2706
        %v2708 = vmul.f32 %v2707, 1.442695
        %v2709 = vpow.pop %v2708
        %v2710 = vsel %vm2535, %v2709, 0.0
        %2711 = vadd.xlane.f32.xlu0 %v2710
        %v2712 = vpop.xlane.xlu0 %2711
        %v2713 = vrcp.pop %v2712
        %v2714 = vmul.f32 %v2709, %v2713
        %2717 = vrot.lane.b32.xlu0 %v2445, 96
        %v2718 = vpop.permute.xlu0 %2717
        %2719 = vrot.lane.b32.xlu0 %v2450, 96
        %v2720 = vpop.permute.xlu0 %2719
        %v2724 = vsel %vm2535, %v2714, 0
        %2726 = vmatprep.subr.mxu0 0.0
        %2727 = vmatpush1.msra.mxu0 0.0
        %2728 = vmatprep.subr.mxu0 0.0
        %2729 = vmatpush1.msra.mxu0 0.0
        %2730 = vmatprep.subr.mxu0 0.0
        %2731 = vmatpush1.msra.mxu0 0.0
        %2732 = vmatprep.subr.mxu0 0.0
        %2733 = vmatpush1.msra.mxu0 0.0
        %2734 = vmatprep.subr.mxu0 0.0
        %2735 = vmatpush1.msra.mxu0 0.0
        %2736 = vmatprep.subr.mxu0 0.0
        %2737 = vmatpush1.msra.mxu0 0.0
        %2738 = vmatprep.subr.mxu0 0.0
        %2739 = vmatpush1.msra.mxu0 0.0
        %2740 = vmatprep.subr.mxu0 0.0
        %2741 = vmatpush1.msra.mxu0 0.0
        %2742 = vmatprep.subr.mxu0 0.0
        %2743 = vmatpush1.msra.mxu0 0.0
        %2744 = vmatprep.subr.mxu0 0.0
        %2745 = vmatpush1.msra.mxu0 0.0
        %2746 = vmatprep.subr.mxu0 0.0
        %2747 = vmatpush1.msra.mxu0 0.0
        %2748 = vmatprep.subr.mxu0 0.0
        %2749 = vmatpush1.msra.mxu0 0.0
        %2750 = vmatprep.subr.mxu0 0.0
        %2751 = vmatpush1.msra.mxu0 0.0
        %2752 = vmatprep.subr.mxu0 0.0
        %2753 = vmatpush1.msra.mxu0 0.0
        %2754 = vmatprep.subr.mxu0 0.0
        %2755 = vmatpush1.msra.mxu0 %v2720
        %2756 = vmatprep.subr.mxu0 0.0
        %2757 = vmatpush1.msra.mxu0 %v2718
        %2758 = vmatprep.subr.mxu0 0.0
        %2759 = vmatpush2.msra.mxu0 0.0
        %2760 = vmatprep.subr.mxu0 0.0
        %2761 = vmatpush2.msra.mxu0 0.0
        %2762 = vmatprep.subr.mxu0 0.0
        %2763 = vmatpush2.msra.mxu0 0.0
        %2764 = vmatprep.subr.mxu0 0.0
        %2765 = vmatpush2.msra.mxu0 0.0
        %2766 = vmatprep.subr.mxu0 0.0
        %2767 = vmatpush2.msra.mxu0 0.0
        %2768 = vmatprep.subr.mxu0 0.0
        %2769 = vmatpush2.msra.mxu0 0.0
        %2770 = vmatprep.subr.mxu0 0.0
        %2771 = vmatpush2.msra.mxu0 0.0
        %2772 = vmatprep.subr.mxu0 0.0
        %2773 = vmatpush2.msra.mxu0 0.0
        %2774 = vmatprep.subr.mxu0 0.0
        %2775 = vmatpush2.msra.mxu0 0.0
        %2776 = vmatprep.subr.mxu0 0.0
        %2777 = vmatpush2.msra.mxu0 0.0
        %2778 = vmatprep.subr.mxu0 0.0
        %2779 = vmatpush2.msra.mxu0 0.0
        %2780 = vmatprep.subr.mxu0 0.0
        %2781 = vmatpush2.msra.mxu0 0.0
        %2782 = vmatprep.subr.mxu0 0.0
        %2783 = vmatpush2.msra.mxu0 0.0
        %2784 = vmatprep.subr.mxu0 0.0
        %2785 = vmatpush2.msra.mxu0 0.0
        %2786 = vmatprep.subr.mxu0 0.0
        %2787 = vmatpush2.msra.mxu0 0.0
        %2788 = vmatprep.subr.mxu0 0.0
        %2789 = vmatpush2.msra.mxu0 0.0
        %2790 = vmatprep.mubr.f32.mxu0 0.0
        %2791 = vmatmul.mubr.f32.gmra.mxu0 %v2724
        %v2792 = vpop.f32.mrf.mxu0
        %v2793 = vadd.f32 0.0, %v2792
        %v2794 = vpop.f32.mrf.mxu0
        %2795 = vdwg.mxu0
        %v2797 = vsel %vm1169, %v2793, 0
        %2799 = vmatprep.subr.mxu0 0.0
        %2800 = vmatpush1.msra.mxu0 0.0
        %2801 = vmatprep.subr.mxu0 0.0
        %2802 = vmatpush1.msra.mxu0 0.0
        %2803 = vmatprep.subr.mxu0 0.0
        %2804 = vmatpush1.msra.mxu0 0.0
        %2805 = vmatprep.subr.mxu0 0.0
        %2806 = vmatpush1.msra.mxu0 0.0
        %2807 = vmatprep.subr.mxu0 0.0
        %2808 = vmatpush1.msra.mxu0 0.0
        %2809 = vmatprep.subr.mxu0 0.0
        %2810 = vmatpush1.msra.mxu0 0.0
        %2811 = vmatprep.subr.mxu0 0.0
        %2812 = vmatpush1.msra.mxu0 0.0
        %2813 = vmatprep.subr.mxu0 0.0
        %2814 = vmatpush1.msra.mxu0 0.0
        %2815 = vmatprep.subr.mxu0 0.0
        %2816 = vmatpush1.msra.mxu0 0.0
        %2817 = vmatprep.subr.mxu0 0.0
        %2818 = vmatpush1.msra.mxu0 0.0
        %2819 = vmatprep.subr.mxu0 0.0
        %2820 = vmatpush1.msra.mxu0 0.0
        %2821 = vmatprep.subr.mxu0 0.0
        %2822 = vmatpush1.msra.mxu0 0.0
        %2823 = vmatprep.subr.mxu0 0.0
        %2824 = vmatpush1.msra.mxu0 %v2224
        %2825 = vmatprep.subr.mxu0 0.0
        %2826 = vmatpush1.msra.mxu0 %v2223
        %2827 = vmatprep.subr.mxu0 0.0
        %2828 = vmatpush1.msra.mxu0 %v2222
        %2829 = vmatprep.subr.mxu0 0.0
        %2830 = vmatpush1.msra.mxu0 %v2221
        %2831 = vmatprep.subr.mxu0 0.0
        %2832 = vmatpush2.msra.mxu0 0.0
        %2833 = vmatprep.subr.mxu0 0.0
        %2834 = vmatpush2.msra.mxu0 0.0
        %2835 = vmatprep.subr.mxu0 0.0
        %2836 = vmatpush2.msra.mxu0 0.0
        %2837 = vmatprep.subr.mxu0 0.0
        %2838 = vmatpush2.msra.mxu0 0.0
        %2839 = vmatprep.subr.mxu0 0.0
        %2840 = vmatpush2.msra.mxu0 0.0
        %2841 = vmatprep.subr.mxu0 0.0
        %2842 = vmatpush2.msra.mxu0 0.0
        %2843 = vmatprep.subr.mxu0 0.0
        %2844 = vmatpush2.msra.mxu0 0.0
        %2845 = vmatprep.subr.mxu0 0.0
        %2846 = vmatpush2.msra.mxu0 0.0
        %2847 = vmatprep.subr.mxu0 0.0
        %2848 = vmatpush2.msra.mxu0 0.0
        %2849 = vmatprep.subr.mxu0 0.0
        %2850 = vmatpush2.msra.mxu0 0.0
        %2851 = vmatprep.subr.mxu0 0.0
        %2852 = vmatpush2.msra.mxu0 0.0
        %2853 = vmatprep.subr.mxu0 0.0
        %2854 = vmatpush2.msra.mxu0 0.0
        %2855 = vmatprep.subr.mxu0 0.0
        %2856 = vmatpush2.msra.mxu0 0.0
        %2857 = vmatprep.subr.mxu0 0.0
        %2858 = vmatpush2.msra.mxu0 0.0
        %2859 = vmatprep.subr.mxu0 0.0
        %2860 = vmatpush2.msra.mxu0 0.0
        %2861 = vmatprep.subr.mxu0 0.0
        %2862 = vmatpush2.msra.mxu0 0.0
        %2863 = vmatprep.mubr.f32.mxu0 0.0
        %2864 = vmatmul.mubr.f32.gmra.mxu0 %v2797
        %v2865 = vpop.f32.mrf.mxu0
        %v2866 = vadd.f32 0.0, %v2865
        %v2867 = vpop.f32.mrf.mxu0
        %2868 = vdwg.mxu0
        %v2870 = vsel %vm1169, %v2617, 0
        %2872 = vmatprep.subr.mxu0 0.0
        %2873 = vmatpush1.msra.mxu0 0.0
        %2874 = vmatprep.subr.mxu0 0.0
        %2875 = vmatpush1.msra.mxu0 0.0
        %2876 = vmatprep.subr.mxu0 0.0
        %2877 = vmatpush1.msra.mxu0 0.0
        %2878 = vmatprep.subr.mxu0 0.0
        %2879 = vmatpush1.msra.mxu0 0.0
        %2880 = vmatprep.subr.mxu0 0.0
        %2881 = vmatpush1.msra.mxu0 0.0
        %2882 = vmatprep.subr.mxu0 0.0
        %2883 = vmatpush1.msra.mxu0 0.0
        %2884 = vmatprep.subr.mxu0 0.0
        %2885 = vmatpush1.msra.mxu0 0.0
        %2886 = vmatprep.subr.mxu0 0.0
        %2887 = vmatpush1.msra.mxu0 0.0
        %2888 = vmatprep.subr.mxu0 0.0
        %2889 = vmatpush1.msra.mxu0 0.0
        %2890 = vmatprep.subr.mxu0 0.0
        %2891 = vmatpush1.msra.mxu0 0.0
        %2892 = vmatprep.subr.mxu0 0.0
        %2893 = vmatpush1.msra.mxu0 0.0
        %2894 = vmatprep.subr.mxu0 0.0
        %2895 = vmatpush1.msra.mxu0 0.0
        %2896 = vmatprep.subr.mxu0 0.0
        %2897 = vmatpush1.msra.mxu0 %v2220
        %2898 = vmatprep.subr.mxu0 0.0
        %2899 = vmatpush1.msra.mxu0 %v2219
        %2900 = vmatprep.subr.mxu0 0.0
        %2901 = vmatpush1.msra.mxu0 %v2218
        %2902 = vmatprep.subr.mxu0 0.0
        %2903 = vmatpush1.msra.mxu0 %v2217
        %2904 = vmatprep.subr.mxu0 0.0
        %2905 = vmatpush2.msra.mxu0 0.0
        %2906 = vmatprep.subr.mxu0 0.0
        %2907 = vmatpush2.msra.mxu0 0.0
        %2908 = vmatprep.subr.mxu0 0.0
        %2909 = vmatpush2.msra.mxu0 0.0
        %2910 = vmatprep.subr.mxu0 0.0
        %2911 = vmatpush2.msra.mxu0 0.0
        %2912 = vmatprep.subr.mxu0 0.0
        %2913 = vmatpush2.msra.mxu0 0.0
        %2914 = vmatprep.subr.mxu0 0.0
        %2915 = vmatpush2.msra.mxu0 0.0
        %2916 = vmatprep.subr.mxu0 0.0
        %2917 = vmatpush2.msra.mxu0 0.0
        %2918 = vmatprep.subr.mxu0 0.0
        %2919 = vmatpush2.msra.mxu0 0.0
        %2920 = vmatprep.subr.mxu0 0.0
        %2921 = vmatpush2.msra.mxu0 0.0
        %2922 = vmatprep.subr.mxu0 0.0
        %2923 = vmatpush2.msra.mxu0 0.0
        %2924 = vmatprep.subr.mxu0 0.0
        %2925 = vmatpush2.msra.mxu0 0.0
        %2926 = vmatprep.subr.mxu0 0.0
        %2927 = vmatpush2.msra.mxu0 0.0
        %2928 = vmatprep.subr.mxu0 0.0
        %2929 = vmatpush2.msra.mxu0 0.0
        %2930 = vmatprep.subr.mxu0 0.0
        %2931 = vmatpush2.msra.mxu0 0.0
        %2932 = vmatprep.subr.mxu0 0.0
        %2933 = vmatpush2.msra.mxu0 0.0
        %2934 = vmatprep.subr.mxu0 0.0
        %2935 = vmatpush2.msra.mxu0 0.0
        %2936 = vmatprep.mubr.f32.mxu0 0.0
        %2937 = vmatmul.mubr.f32.gmra.mxu0 %v2870
        %v2938 = vpop.f32.mrf.mxu0
        %v2939 = vadd.f32 %v2866, %v2938
        %v2940 = vpop.f32.mrf.mxu0
        %2941 = vdwg.mxu0
        %2942 = vrot.lane.b32.xlu0 %v2300, 64
        %v2943 = vpop.permute.xlu0 %2942
        %2944 = vrot.lane.b32.xlu0 %v2370, 64
        %v2945 = vpop.permute.xlu0 %2944
        %2946 = vrot.lane.b32.xlu0 %v2375, 64
        %v2947 = vpop.permute.xlu0 %2946
        %v2948 = vsel %vm1169, %v2943, 0
        %v2950 = vsel %vm1169, %v2945, 0
        %v2952 = vsel %vm1169, %v2947, 0
        %2954 = vmatprep.subr.mxu0 0.0
        %2955 = vmatpush1.xpose.msra.mxu0 0.0
        %2956 = vmatprep.subr.mxu0 0.0
        %2957 = vmatpush1.xpose.msra.mxu0 0.0
        %2958 = vmatprep.subr.mxu0 0.0
        %2959 = vmatpush1.xpose.msra.mxu0 0.0
        %2960 = vmatprep.subr.mxu0 0.0
        %2961 = vmatpush1.xpose.msra.mxu0 0.0
        %2962 = vmatprep.subr.mxu0 0.0
        %2963 = vmatpush1.xpose.msra.mxu0 0.0
        %2964 = vmatprep.subr.mxu0 0.0
        %2965 = vmatpush1.xpose.msra.mxu0 0.0
        %2966 = vmatprep.subr.mxu0 0.0
        %2967 = vmatpush1.xpose.msra.mxu0 0.0
        %2968 = vmatprep.subr.mxu0 0.0
        %2969 = vmatpush1.xpose.msra.mxu0 0.0
        %2970 = vmatprep.subr.mxu0 0.0
        %2971 = vmatpush1.xpose.msra.mxu0 0.0
        %2972 = vmatprep.subr.mxu0 0.0
        %2973 = vmatpush1.xpose.msra.mxu0 0.0
        %2974 = vmatprep.subr.mxu0 0.0
        %2975 = vmatpush1.xpose.msra.mxu0 0.0
        %2976 = vmatprep.subr.mxu0 0.0
        %2977 = vmatpush1.xpose.msra.mxu0 0.0
        %2978 = vmatprep.subr.mxu0 0.0
        %2979 = vmatpush1.xpose.msra.mxu0 0.0
        %2980 = vmatprep.subr.mxu0 0.0
        %2981 = vmatpush1.xpose.msra.mxu0 0.0
        %2982 = vmatprep.subr.mxu0 0.0
        %2983 = vmatpush1.xpose.msra.mxu0 %v2952
        %2984 = vmatprep.subr.mxu0 0.0
        %2985 = vmatpush1.xpose.msra.mxu0 %v2950
        %2986 = vmatprep.subr.mxu0 0.0
        %2987 = vmatpush2.xpose.msra.mxu0 0.0
        %2988 = vmatprep.subr.mxu0 0.0
        %2989 = vmatpush2.xpose.msra.mxu0 0.0
        %2990 = vmatprep.subr.mxu0 0.0
        %2991 = vmatpush2.xpose.msra.mxu0 0.0
        %2992 = vmatprep.subr.mxu0 0.0
        %2993 = vmatpush2.xpose.msra.mxu0 0.0
        %2994 = vmatprep.subr.mxu0 0.0
        %2995 = vmatpush2.xpose.msra.mxu0 0.0
        %2996 = vmatprep.subr.mxu0 0.0
        %2997 = vmatpush2.xpose.msra.mxu0 0.0
        %2998 = vmatprep.subr.mxu0 0.0
        %2999 = vmatpush2.xpose.msra.mxu0 0.0
        %3000 = vmatprep.subr.mxu0 0.0
        %3001 = vmatpush2.xpose.msra.mxu0 0.0
        %3002 = vmatprep.subr.mxu0 0.0
        %3003 = vmatpush2.xpose.msra.mxu0 0.0
        %3004 = vmatprep.subr.mxu0 0.0
        %3005 = vmatpush2.xpose.msra.mxu0 0.0
        %3006 = vmatprep.subr.mxu0 0.0
        %3007 = vmatpush2.xpose.msra.mxu0 0.0
        %3008 = vmatprep.subr.mxu0 0.0
        %3009 = vmatpush2.xpose.msra.mxu0 0.0
        %3010 = vmatprep.subr.mxu0 0.0
        %3011 = vmatpush2.xpose.msra.mxu0 0.0
        %3012 = vmatprep.subr.mxu0 0.0
        %3013 = vmatpush2.xpose.msra.mxu0 0.0
        %3014 = vmatprep.subr.mxu0 0.0
        %3015 = vmatpush2.xpose.msra.mxu0 0.0
        %3016 = vmatprep.subr.mxu0 0.0
        %3017 = vmatpush2.xpose.msra.mxu0 0.0
        %3018 = vmatprep.mubr.f32.mxu0 0.0
        %3019 = vmatmul.mubr.f32.gmra.mxu0 %v2948
        %v3020 = vpop.f32.mrf.mxu0
        %v3021 = vadd.f32 0.0, %v3020
        %v3022 = vpop.f32.mrf.mxu0
        %3023 = vdwg.mxu0
        %v3024 = vmul.f32 %v3021, 0.17677669
        %v3025 = vsel %vm2453, -1e+09, %v3024
        %v3026 = vsel %vm2535, %v3025, -inf
        %3027 = vmax.xlane.f32.xlu0 %v3026
        %v3028 = vpop.xlane.xlu0 %3027
        %v3029 = vsub.f32 %v3025, %v3028
        %v3030 = vmul.f32 %v3029, 1.442695
        %v3031 = vpow.pop %v3030
        %v3032 = vsel %vm2535, %v3031, 0.0
        %3033 = vadd.xlane.f32.xlu0 %v3032
        %v3034 = vpop.xlane.xlu0 %3033
        %v3035 = vrcp.pop %v3034
        %v3036 = vmul.f32 %v3031, %v3035
        %3037 = vrot.lane.b32.xlu0 %v2445, 64
        %v3038 = vpop.permute.xlu0 %3037
        %3039 = vrot.lane.b32.xlu0 %v2450, 64
        %v3040 = vpop.permute.xlu0 %3039
        %v3044 = vsel %vm2535, %v3036, 0
        %3046 = vmatprep.subr.mxu0 0.0
        %3047 = vmatpush1.msra.mxu0 0.0
        %3048 = vmatprep.subr.mxu0 0.0
        %3049 = vmatpush1.msra.mxu0 0.0
        %3050 = vmatprep.subr.mxu0 0.0
        %3051 = vmatpush1.msra.mxu0 0.0
        %3052 = vmatprep.subr.mxu0 0.0
        %3053 = vmatpush1.msra.mxu0 0.0
        %3054 = vmatprep.subr.mxu0 0.0
        %3055 = vmatpush1.msra.mxu0 0.0
        %3056 = vmatprep.subr.mxu0 0.0
        %3057 = vmatpush1.msra.mxu0 0.0
        %3058 = vmatprep.subr.mxu0 0.0
        %3059 = vmatpush1.msra.mxu0 0.0
        %3060 = vmatprep.subr.mxu0 0.0
        %3061 = vmatpush1.msra.mxu0 0.0
        %3062 = vmatprep.subr.mxu0 0.0
        %3063 = vmatpush1.msra.mxu0 0.0
        %3064 = vmatprep.subr.mxu0 0.0
        %3065 = vmatpush1.msra.mxu0 0.0
        %3066 = vmatprep.subr.mxu0 0.0
        %3067 = vmatpush1.msra.mxu0 0.0
        %3068 = vmatprep.subr.mxu0 0.0
        %3069 = vmatpush1.msra.mxu0 0.0
        %3070 = vmatprep.subr.mxu0 0.0
        %3071 = vmatpush1.msra.mxu0 0.0
        %3072 = vmatprep.subr.mxu0 0.0
        %3073 = vmatpush1.msra.mxu0 0.0
        %3074 = vmatprep.subr.mxu0 0.0
        %3075 = vmatpush1.msra.mxu0 %v3040
        %3076 = vmatprep.subr.mxu0 0.0
        %3077 = vmatpush1.msra.mxu0 %v3038
        %3078 = vmatprep.subr.mxu0 0.0
        %3079 = vmatpush2.msra.mxu0 0.0
        %3080 = vmatprep.subr.mxu0 0.0
        %3081 = vmatpush2.msra.mxu0 0.0
        %3082 = vmatprep.subr.mxu0 0.0
        %3083 = vmatpush2.msra.mxu0 0.0
        %3084 = vmatprep.subr.mxu0 0.0
        %3085 = vmatpush2.msra.mxu0 0.0
        %3086 = vmatprep.subr.mxu0 0.0
        %3087 = vmatpush2.msra.mxu0 0.0
        %3088 = vmatprep.subr.mxu0 0.0
        %3089 = vmatpush2.msra.mxu0 0.0
        %3090 = vmatprep.subr.mxu0 0.0
        %3091 = vmatpush2.msra.mxu0 0.0
        %3092 = vmatprep.subr.mxu0 0.0
        %3093 = vmatpush2.msra.mxu0 0.0
        %3094 = vmatprep.subr.mxu0 0.0
        %3095 = vmatpush2.msra.mxu0 0.0
        %3096 = vmatprep.subr.mxu0 0.0
        %3097 = vmatpush2.msra.mxu0 0.0
        %3098 = vmatprep.subr.mxu0 0.0
        %3099 = vmatpush2.msra.mxu0 0.0
        %3100 = vmatprep.subr.mxu0 0.0
        %3101 = vmatpush2.msra.mxu0 0.0
        %3102 = vmatprep.subr.mxu0 0.0
        %3103 = vmatpush2.msra.mxu0 0.0
        %3104 = vmatprep.subr.mxu0 0.0
        %3105 = vmatpush2.msra.mxu0 0.0
        %3106 = vmatprep.subr.mxu0 0.0
        %3107 = vmatpush2.msra.mxu0 0.0
        %3108 = vmatprep.subr.mxu0 0.0
        %3109 = vmatpush2.msra.mxu0 0.0
        %3110 = vmatprep.mubr.f32.mxu0 0.0
        %3111 = vmatmul.mubr.f32.gmra.mxu0 %v3044
        %v3112 = vpop.f32.mrf.mxu0
        %v3113 = vadd.f32 0.0, %v3112
        %v3114 = vpop.f32.mrf.mxu0
        %3115 = vdwg.mxu0
        %v3117 = vsel %vm1169, %v3113, 0
        %3119 = vmatprep.subr.mxu0 0.0
        %3120 = vmatpush1.msra.mxu0 0.0
        %3121 = vmatprep.subr.mxu0 0.0
        %3122 = vmatpush1.msra.mxu0 0.0
        %3123 = vmatprep.subr.mxu0 0.0
        %3124 = vmatpush1.msra.mxu0 0.0
        %3125 = vmatprep.subr.mxu0 0.0
        %3126 = vmatpush1.msra.mxu0 0.0
        %3127 = vmatprep.subr.mxu0 0.0
        %3128 = vmatpush1.msra.mxu0 0.0
        %3129 = vmatprep.subr.mxu0 0.0
        %3130 = vmatpush1.msra.mxu0 0.0
        %3131 = vmatprep.subr.mxu0 0.0
        %3132 = vmatpush1.msra.mxu0 0.0
        %3133 = vmatprep.subr.mxu0 0.0
        %3134 = vmatpush1.msra.mxu0 0.0
        %3135 = vmatprep.subr.mxu0 0.0
        %3136 = vmatpush1.msra.mxu0 0.0
        %3137 = vmatprep.subr.mxu0 0.0
        %3138 = vmatpush1.msra.mxu0 0.0
        %3139 = vmatprep.subr.mxu0 0.0
        %3140 = vmatpush1.msra.mxu0 0.0
        %3141 = vmatprep.subr.mxu0 0.0
        %3142 = vmatpush1.msra.mxu0 0.0
        %3143 = vmatprep.subr.mxu0 0.0
        %3144 = vmatpush1.msra.mxu0 %v2228
        %3145 = vmatprep.subr.mxu0 0.0
        %3146 = vmatpush1.msra.mxu0 %v2227
        %3147 = vmatprep.subr.mxu0 0.0
        %3148 = vmatpush1.msra.mxu0 %v2226
        %3149 = vmatprep.subr.mxu0 0.0
        %3150 = vmatpush1.msra.mxu0 %v2225
        %3151 = vmatprep.subr.mxu0 0.0
        %3152 = vmatpush2.msra.mxu0 0.0
        %3153 = vmatprep.subr.mxu0 0.0
        %3154 = vmatpush2.msra.mxu0 0.0
        %3155 = vmatprep.subr.mxu0 0.0
        %3156 = vmatpush2.msra.mxu0 0.0
        %3157 = vmatprep.subr.mxu0 0.0
        %3158 = vmatpush2.msra.mxu0 0.0
        %3159 = vmatprep.subr.mxu0 0.0
        %3160 = vmatpush2.msra.mxu0 0.0
        %3161 = vmatprep.subr.mxu0 0.0
        %3162 = vmatpush2.msra.mxu0 0.0
        %3163 = vmatprep.subr.mxu0 0.0
        %3164 = vmatpush2.msra.mxu0 0.0
        %3165 = vmatprep.subr.mxu0 0.0
        %3166 = vmatpush2.msra.mxu0 0.0
        %3167 = vmatprep.subr.mxu0 0.0
        %3168 = vmatpush2.msra.mxu0 0.0
        %3169 = vmatprep.subr.mxu0 0.0
        %3170 = vmatpush2.msra.mxu0 0.0
        %3171 = vmatprep.subr.mxu0 0.0
        %3172 = vmatpush2.msra.mxu0 0.0
        %3173 = vmatprep.subr.mxu0 0.0
        %3174 = vmatpush2.msra.mxu0 0.0
        %3175 = vmatprep.subr.mxu0 0.0
        %3176 = vmatpush2.msra.mxu0 0.0
        %3177 = vmatprep.subr.mxu0 0.0
        %3178 = vmatpush2.msra.mxu0 0.0
        %3179 = vmatprep.subr.mxu0 0.0
        %3180 = vmatpush2.msra.mxu0 0.0
        %3181 = vmatprep.subr.mxu0 0.0
        %3182 = vmatpush2.msra.mxu0 0.0
        %3183 = vmatprep.mubr.f32.mxu0 0.0
        %3184 = vmatmul.mubr.f32.gmra.mxu0 %v3117
        %v3185 = vpop.f32.mrf.mxu0
        %v3186 = vadd.f32 0.0, %v3185
        %v3187 = vpop.f32.mrf.mxu0
        %3188 = vdwg.mxu0
        %v3189 = vadd.f32 %v2939, %v3186
        %3190 = vrot.lane.b32.xlu0 %v2300, 32
        %v3191 = vpop.permute.xlu0 %3190
        %3192 = vrot.lane.b32.xlu0 %v2370, 32
        %v3193 = vpop.permute.xlu0 %3192
        %3194 = vrot.lane.b32.xlu0 %v2375, 32
        %v3195 = vpop.permute.xlu0 %3194
        %v3196 = vsel %vm1169, %v3191, 0
        %v3198 = vsel %vm1169, %v3193, 0
        %v3200 = vsel %vm1169, %v3195, 0
        %3202 = vmatprep.subr.mxu0 0.0
        %3203 = vmatpush1.xpose.msra.mxu0 0.0
        %3204 = vmatprep.subr.mxu0 0.0
        %3205 = vmatpush1.xpose.msra.mxu0 0.0
        %3206 = vmatprep.subr.mxu0 0.0
        %3207 = vmatpush1.xpose.msra.mxu0 0.0
        %3208 = vmatprep.subr.mxu0 0.0
        %3209 = vmatpush1.xpose.msra.mxu0 0.0
        %3210 = vmatprep.subr.mxu0 0.0
        %3211 = vmatpush1.xpose.msra.mxu0 0.0
        %3212 = vmatprep.subr.mxu0 0.0
        %3213 = vmatpush1.xpose.msra.mxu0 0.0
        %3214 = vmatprep.subr.mxu0 0.0
        %3215 = vmatpush1.xpose.msra.mxu0 0.0
        %3216 = vmatprep.subr.mxu0 0.0
        %3217 = vmatpush1.xpose.msra.mxu0 0.0
        %3218 = vmatprep.subr.mxu0 0.0
        %3219 = vmatpush1.xpose.msra.mxu0 0.0
        %3220 = vmatprep.subr.mxu0 0.0
        %3221 = vmatpush1.xpose.msra.mxu0 0.0
        %3222 = vmatprep.subr.mxu0 0.0
        %3223 = vmatpush1.xpose.msra.mxu0 0.0
        %3224 = vmatprep.subr.mxu0 0.0
        %3225 = vmatpush1.xpose.msra.mxu0 0.0
        %3226 = vmatprep.subr.mxu0 0.0
        %3227 = vmatpush1.xpose.msra.mxu0 0.0
        %3228 = vmatprep.subr.mxu0 0.0
        %3229 = vmatpush1.xpose.msra.mxu0 0.0
        %3230 = vmatprep.subr.mxu0 0.0
        %3231 = vmatpush1.xpose.msra.mxu0 %v3200
        %3232 = vmatprep.subr.mxu0 0.0
        %3233 = vmatpush1.xpose.msra.mxu0 %v3198
        %3234 = vmatprep.subr.mxu0 0.0
        %3235 = vmatpush2.xpose.msra.mxu0 0.0
        %3236 = vmatprep.subr.mxu0 0.0
        %3237 = vmatpush2.xpose.msra.mxu0 0.0
        %3238 = vmatprep.subr.mxu0 0.0
        %3239 = vmatpush2.xpose.msra.mxu0 0.0
        %3240 = vmatprep.subr.mxu0 0.0
        %3241 = vmatpush2.xpose.msra.mxu0 0.0
        %3242 = vmatprep.subr.mxu0 0.0
        %3243 = vmatpush2.xpose.msra.mxu0 0.0
        %3244 = vmatprep.subr.mxu0 0.0
        %3245 = vmatpush2.xpose.msra.mxu0 0.0
        %3246 = vmatprep.subr.mxu0 0.0
        %3247 = vmatpush2.xpose.msra.mxu0 0.0
        %3248 = vmatprep.subr.mxu0 0.0
        %3249 = vmatpush2.xpose.msra.mxu0 0.0
        %3250 = vmatprep.subr.mxu0 0.0
        %3251 = vmatpush2.xpose.msra.mxu0 0.0
        %3252 = vmatprep.subr.mxu0 0.0
        %3253 = vmatpush2.xpose.msra.mxu0 0.0
        %3254 = vmatprep.subr.mxu0 0.0
        %3255 = vmatpush2.xpose.msra.mxu0 0.0
        %3256 = vmatprep.subr.mxu0 0.0
        %3257 = vmatpush2.xpose.msra.mxu0 0.0
        %3258 = vmatprep.subr.mxu0 0.0
        %3259 = vmatpush2.xpose.msra.mxu0 0.0
        %3260 = vmatprep.subr.mxu0 0.0
        %3261 = vmatpush2.xpose.msra.mxu0 0.0
        %3262 = vmatprep.subr.mxu0 0.0
        %3263 = vmatpush2.xpose.msra.mxu0 0.0
        %3264 = vmatprep.subr.mxu0 0.0
        %3265 = vmatpush2.xpose.msra.mxu0 0.0
        %3266 = vmatprep.mubr.f32.mxu0 0.0
        %3267 = vmatmul.mubr.f32.gmra.mxu0 %v3196
        %v3268 = vpop.f32.mrf.mxu0
        %v3269 = vadd.f32 0.0, %v3268
        %v3270 = vpop.f32.mrf.mxu0
        %3271 = vdwg.mxu0
        %v3272 = vmul.f32 %v3269, 0.17677669
        %v3273 = vsel %vm2453, -1e+09, %v3272
        %v3274 = vsel %vm2535, %v3273, -inf
        %3275 = vmax.xlane.f32.xlu0 %v3274
        %v3276 = vpop.xlane.xlu0 %3275
        %v3277 = vsub.f32 %v3273, %v3276
        %v3278 = vmul.f32 %v3277, 1.442695
        %v3279 = vpow.pop %v3278
        %v3280 = vsel %vm2535, %v3279, 0.0
        %3281 = vadd.xlane.f32.xlu0 %v3280
        %v3282 = vpop.xlane.xlu0 %3281
        %v3283 = vrcp.pop %v3282
        %v3284 = vmul.f32 %v3279, %v3283
        %3285 = vrot.lane.b32.xlu0 %v2445, 32
        %v3286 = vpop.permute.xlu0 %3285
        %3287 = vrot.lane.b32.xlu0 %v2450, 32
        %v3288 = vpop.permute.xlu0 %3287
        %v3292 = vsel %vm2535, %v3284, 0
        %3294 = vmatprep.subr.mxu0 0.0
        %3295 = vmatpush1.msra.mxu0 0.0
        %3296 = vmatprep.subr.mxu0 0.0
        %3297 = vmatpush1.msra.mxu0 0.0
        %3298 = vmatprep.subr.mxu0 0.0
        %3299 = vmatpush1.msra.mxu0 0.0
        %3300 = vmatprep.subr.mxu0 0.0
        %3301 = vmatpush1.msra.mxu0 0.0
        %3302 = vmatprep.subr.mxu0 0.0
        %3303 = vmatpush1.msra.mxu0 0.0
        %3304 = vmatprep.subr.mxu0 0.0
        %3305 = vmatpush1.msra.mxu0 0.0
        %3306 = vmatprep.subr.mxu0 0.0
        %3307 = vmatpush1.msra.mxu0 0.0
        %3308 = vmatprep.subr.mxu0 0.0
        %3309 = vmatpush1.msra.mxu0 0.0
        %3310 = vmatprep.subr.mxu0 0.0
        %3311 = vmatpush1.msra.mxu0 0.0
        %3312 = vmatprep.subr.mxu0 0.0
        %3313 = vmatpush1.msra.mxu0 0.0
        %3314 = vmatprep.subr.mxu0 0.0
        %3315 = vmatpush1.msra.mxu0 0.0
        %3316 = vmatprep.subr.mxu0 0.0
        %3317 = vmatpush1.msra.mxu0 0.0
        %3318 = vmatprep.subr.mxu0 0.0
        %3319 = vmatpush1.msra.mxu0 0.0
        %3320 = vmatprep.subr.mxu0 0.0
        %3321 = vmatpush1.msra.mxu0 0.0
        %3322 = vmatprep.subr.mxu0 0.0
        %3323 = vmatpush1.msra.mxu0 %v3288
        %3324 = vmatprep.subr.mxu0 0.0
        %3325 = vmatpush1.msra.mxu0 %v3286
        %3326 = vmatprep.subr.mxu0 0.0
        %3327 = vmatpush2.msra.mxu0 0.0
        %3328 = vmatprep.subr.mxu0 0.0
        %3329 = vmatpush2.msra.mxu0 0.0
        %3330 = vmatprep.subr.mxu0 0.0
        %3331 = vmatpush2.msra.mxu0 0.0
        %3332 = vmatprep.subr.mxu0 0.0
        %3333 = vmatpush2.msra.mxu0 0.0
        %3334 = vmatprep.subr.mxu0 0.0
        %3335 = vmatpush2.msra.mxu0 0.0
        %3336 = vmatprep.subr.mxu0 0.0
        %3337 = vmatpush2.msra.mxu0 0.0
        %3338 = vmatprep.subr.mxu0 0.0
        %3339 = vmatpush2.msra.mxu0 0.0
        %3340 = vmatprep.subr.mxu0 0.0
        %3341 = vmatpush2.msra.mxu0 0.0
        %3342 = vmatprep.subr.mxu0 0.0
        %3343 = vmatpush2.msra.mxu0 0.0
        %3344 = vmatprep.subr.mxu0 0.0
        %3345 = vmatpush2.msra.mxu0 0.0
        %3346 = vmatprep.subr.mxu0 0.0
        %3347 = vmatpush2.msra.mxu0 0.0
        %3348 = vmatprep.subr.mxu0 0.0
        %3349 = vmatpush2.msra.mxu0 0.0
        %3350 = vmatprep.subr.mxu0 0.0
        %3351 = vmatpush2.msra.mxu0 0.0
        %3352 = vmatprep.subr.mxu0 0.0
        %3353 = vmatpush2.msra.mxu0 0.0
        %3354 = vmatprep.subr.mxu0 0.0
        %3355 = vmatpush2.msra.mxu0 0.0
        %3356 = vmatprep.subr.mxu0 0.0
        %3357 = vmatpush2.msra.mxu0 0.0
        %3358 = vmatprep.mubr.f32.mxu0 0.0
        %3359 = vmatmul.mubr.f32.gmra.mxu0 %v3292
        %v3360 = vpop.f32.mrf.mxu0
        %v3361 = vadd.f32 0.0, %v3360
        %v3362 = vpop.f32.mrf.mxu0
        %3363 = vdwg.mxu0
        %v3365 = vsel %vm1169, %v3361, 0
        %3367 = vmatprep.subr.mxu0 0.0
        %3368 = vmatpush1.msra.mxu0 0.0
        %3369 = vmatprep.subr.mxu0 0.0
        %3370 = vmatpush1.msra.mxu0 0.0
        %3371 = vmatprep.subr.mxu0 0.0
        %3372 = vmatpush1.msra.mxu0 0.0
        %3373 = vmatprep.subr.mxu0 0.0
        %3374 = vmatpush1.msra.mxu0 0.0
        %3375 = vmatprep.subr.mxu0 0.0
        %3376 = vmatpush1.msra.mxu0 0.0
        %3377 = vmatprep.subr.mxu0 0.0
        %3378 = vmatpush1.msra.mxu0 0.0
        %3379 = vmatprep.subr.mxu0 0.0
        %3380 = vmatpush1.msra.mxu0 0.0
        %3381 = vmatprep.subr.mxu0 0.0
        %3382 = vmatpush1.msra.mxu0 0.0
        %3383 = vmatprep.subr.mxu0 0.0
        %3384 = vmatpush1.msra.mxu0 0.0
        %3385 = vmatprep.subr.mxu0 0.0
        %3386 = vmatpush1.msra.mxu0 0.0
        %3387 = vmatprep.subr.mxu0 0.0
        %3388 = vmatpush1.msra.mxu0 0.0
        %3389 = vmatprep.subr.mxu0 0.0
        %3390 = vmatpush1.msra.mxu0 0.0
        %3391 = vmatprep.subr.mxu0 0.0
        %3392 = vmatpush1.msra.mxu0 %v2232
        %3393 = vmatprep.subr.mxu0 0.0
        %3394 = vmatpush1.msra.mxu0 %v2231
        %3395 = vmatprep.subr.mxu0 0.0
        %3396 = vmatpush1.msra.mxu0 %v2230
        %3397 = vmatprep.subr.mxu0 0.0
        %3398 = vmatpush1.msra.mxu0 %v2229
        %3399 = vmatprep.subr.mxu0 0.0
        %3400 = vmatpush2.msra.mxu0 0.0
        %3401 = vmatprep.subr.mxu0 0.0
        %3402 = vmatpush2.msra.mxu0 0.0
        %3403 = vmatprep.subr.mxu0 0.0
        %3404 = vmatpush2.msra.mxu0 0.0
        %3405 = vmatprep.subr.mxu0 0.0
        %3406 = vmatpush2.msra.mxu0 0.0
        %3407 = vmatprep.subr.mxu0 0.0
        %3408 = vmatpush2.msra.mxu0 0.0
        %3409 = vmatprep.subr.mxu0 0.0
        %3410 = vmatpush2.msra.mxu0 0.0
        %3411 = vmatprep.subr.mxu0 0.0
        %3412 = vmatpush2.msra.mxu0 0.0
        %3413 = vmatprep.subr.mxu0 0.0
        %3414 = vmatpush2.msra.mxu0 0.0
        %3415 = vmatprep.subr.mxu0 0.0
        %3416 = vmatpush2.msra.mxu0 0.0
        %3417 = vmatprep.subr.mxu0 0.0
        %3418 = vmatpush2.msra.mxu0 0.0
        %3419 = vmatprep.subr.mxu0 0.0
        %3420 = vmatpush2.msra.mxu0 0.0
        %3421 = vmatprep.subr.mxu0 0.0
        %3422 = vmatpush2.msra.mxu0 0.0
        %3423 = vmatprep.subr.mxu0 0.0
        %3424 = vmatpush2.msra.mxu0 0.0
        %3425 = vmatprep.subr.mxu0 0.0
        %3426 = vmatpush2.msra.mxu0 0.0
        %3427 = vmatprep.subr.mxu0 0.0
        %3428 = vmatpush2.msra.mxu0 0.0
        %3429 = vmatprep.subr.mxu0 0.0
        %3430 = vmatpush2.msra.mxu0 0.0
        %3431 = vmatprep.mubr.f32.mxu0 0.0
        %3432 = vmatmul.mubr.f32.gmra.mxu0 %v3365
        %v3433 = vpop.f32.mrf.mxu0
        %v3434 = vadd.f32 0.0, %v3433
        %v3435 = vpop.f32.mrf.mxu0
        %3436 = vdwg.mxu0
        %v3437 = vadd.f32 %v3189, %v3434
        %v3438 = vadd.f32 %v2129, %v3437
        %s3439 = scalar_lea.vmem %s837, 2
        %v3440 = vld [vmem:[%s3439] sm:$0x1]
        %s3441 = scalar_lea.vmem %s702, 2 [#allocation11]
        %v3442 = vld [vmem:[%s3441] sm:$0x1]
        %3443 = vadd.xlane.f32.xlu0 %v3438
        %v3444 = vpop.xlane.xlu0 %3443
        %v3445 = vmul.f32 %v3444, %v860
        %v3446 = vsub.f32 %v3438, %v3445
        %v3447 = vmul.f32 %v3446, %v3446
        %3448 = vadd.xlane.f32.xlu0 %v3447
        %v3449 = vpop.xlane.xlu0 %3448
        %v3450 = vmul.f32 %v3449, 0.007874016
        %v3451 = vrsqrt.pop %v3450
        %v3452 = vmul.f32 %v3450, %v3451
        %vm3453 = vcmp.eq.f32.partialorder %v3450, inf
        %v3454 = vsel %vm3453, %v3450, %v3452
        %vm3455 = vcmp.eq.f32.partialorder %v3450, 0.0
        %v3456 = vand.u32 %v3450, 2147483648
        %v3457 = vsel %vm3455, %v3456, %v3454
        %v3458 = vadd.f32 %v3457, 1e-06
        %v3459 = vrcp.pop %v3458
        %v3460 = vmul.f32 %v3446, %v3459
        %v3462 = vlaneseq
        %v3463 = vshrl.u32 %v3462, 7
        %v3464 = vsub.s32 0, %v3463
        %v3465 = vrot.slane %v3440, %v3464
        %v3467 = vmul.f32 %v3465, %v3460
        %v3469 = vlaneseq
        %v3470 = vshrl.u32 %v3469, 7
        %v3471 = vsub.s32 0, %v3470
        %v3472 = vrot.slane %v3442, %v3471
        %v3474 = vadd.f32 %v3467, %v3472
        %v3475 = vld [vmem:[%s729] sm:$0xff]
        %v3476 = vld [vmem:[%s729 + $0x8] sm:$0xff]
        %v3477 = vld [vmem:[%s729 + $0x10] sm:$0xff]
        %v3478 = vld [vmem:[%s729 + $0x18] sm:$0xff]
        %v3479 = vld [vmem:[%s729 + $0x20] sm:$0xff]
        %v3480 = vld [vmem:[%s729 + $0x28] sm:$0xff]
        %v3481 = vld [vmem:[%s729 + $0x30] sm:$0xff]
        %v3482 = vld [vmem:[%s729 + $0x38] sm:$0xff]
        %v3483 = vld [vmem:[%s729 + $0x40] sm:$0xff]
        %v3484 = vld [vmem:[%s729 + $0x48] sm:$0xff]
        %v3485 = vld [vmem:[%s729 + $0x50] sm:$0xff]
        %v3486 = vld [vmem:[%s729 + $0x58] sm:$0xff]
        %v3487 = vld [vmem:[%s729 + $0x60] sm:$0xff]
        %v3488 = vld [vmem:[%s729 + $0x68] sm:$0xff]
        %v3489 = vld [vmem:[%s729 + $0x70] sm:$0xff]
        %v3490 = vld [vmem:[%s729 + $0x78] sm:$0xff]
        %v3491 = vld [vmem:[%s729 + $0x80] sm:$0xff]
        %v3492 = vld [vmem:[%s729 + $0x88] sm:$0xff]
        %v3493 = vld [vmem:[%s729 + $0x90] sm:$0xff]
        %v3494 = vld [vmem:[%s729 + $0x98] sm:$0xff]
        %v3495 = vld [vmem:[%s729 + $0xa0] sm:$0xff]
        %v3496 = vld [vmem:[%s729 + $0xa8] sm:$0xff]
        %v3497 = vld [vmem:[%s729 + $0xb0] sm:$0xff]
        %v3498 = vld [vmem:[%s729 + $0xb8] sm:$0xff]
        %v3499 = vld [vmem:[%s729 + $0xc0] sm:$0xff]
        %v3500 = vld [vmem:[%s729 + $0xc8] sm:$0xff]
        %v3501 = vld [vmem:[%s729 + $0xd0] sm:$0xff]
        %v3502 = vld [vmem:[%s729 + $0xd8] sm:$0xff]
        %v3503 = vld [vmem:[%s729 + $0xe0] sm:$0xff]
        %v3504 = vld [vmem:[%s729 + $0xe8] sm:$0xff]
        %v3505 = vld [vmem:[%s729 + $0xf0] sm:$0xff]
        %v3506 = vld [vmem:[%s729 + $0xf8] sm:$0xff]
        %v3507 = vld [vmem:[%s841] sm:$0x3]
        %v3509 = vlaneseq
        %v3510 = vshrl.u32 %v3509, 7
        %v3511 = vsub.s32 0, %v3510
        %v3512 = vrot.slane %v3507, %v3511
        %v3513 = vlaneseq
        %v3514 = vshrl.u32 %v3513, 7
        %v3515 = vsub.s32 1, %v3514
        %v3516 = vrot.slane %v3507, %v3515
        %3519 = vmatprep.subr.mxu0 %v3506
        %3520 = vmatpush1.msra.mxu0 %v3505
        %3521 = vmatprep.subr.mxu0 %v3504
        %3522 = vmatpush1.msra.mxu0 %v3503
        %3523 = vmatprep.subr.mxu0 %v3502
        %3524 = vmatpush1.msra.mxu0 %v3501
        %3525 = vmatprep.subr.mxu0 %v3500
        %3526 = vmatpush1.msra.mxu0 %v3499
        %3527 = vmatprep.subr.mxu0 %v3498
        %3528 = vmatpush1.msra.mxu0 %v3497
        %3529 = vmatprep.subr.mxu0 %v3496
        %3530 = vmatpush1.msra.mxu0 %v3495
        %3531 = vmatprep.subr.mxu0 %v3494
        %3532 = vmatpush1.msra.mxu0 %v3493
        %3533 = vmatprep.subr.mxu0 %v3492
        %3534 = vmatpush1.msra.mxu0 %v3491
        %3535 = vmatprep.subr.mxu0 %v3490
        %3536 = vmatpush1.msra.mxu0 %v3489
        %3537 = vmatprep.subr.mxu0 %v3488
        %3538 = vmatpush1.msra.mxu0 %v3487
        %3539 = vmatprep.subr.mxu0 %v3486
        %3540 = vmatpush1.msra.mxu0 %v3485
        %3541 = vmatprep.subr.mxu0 %v3484
        %3542 = vmatpush1.msra.mxu0 %v3483
        %3543 = vmatprep.subr.mxu0 %v3482
        %3544 = vmatpush1.msra.mxu0 %v3481
        %3545 = vmatprep.subr.mxu0 %v3480
        %3546 = vmatpush1.msra.mxu0 %v3479
        %3547 = vmatprep.subr.mxu0 %v3478
        %3548 = vmatpush1.msra.mxu0 %v3477
        %3549 = vmatprep.subr.mxu0 %v3476
        %3550 = vmatpush1.msra.mxu0 %v3475
        %3551 = vmatprep.subr.mxu0 0.0
        %3552 = vmatpush2.msra.mxu0 0.0
        %3553 = vmatprep.subr.mxu0 0.0
        %3554 = vmatpush2.msra.mxu0 0.0
        %3555 = vmatprep.subr.mxu0 0.0
        %3556 = vmatpush2.msra.mxu0 0.0
        %3557 = vmatprep.subr.mxu0 0.0
        %3558 = vmatpush2.msra.mxu0 0.0
        %3559 = vmatprep.subr.mxu0 0.0
        %3560 = vmatpush2.msra.mxu0 0.0
        %3561 = vmatprep.subr.mxu0 0.0
        %3562 = vmatpush2.msra.mxu0 0.0
        %3563 = vmatprep.subr.mxu0 0.0
        %3564 = vmatpush2.msra.mxu0 0.0
        %3565 = vmatprep.subr.mxu0 0.0
        %3566 = vmatpush2.msra.mxu0 0.0
        %3567 = vmatprep.subr.mxu0 0.0
        %3568 = vmatpush2.msra.mxu0 0.0
        %3569 = vmatprep.subr.mxu0 0.0
        %3570 = vmatpush2.msra.mxu0 0.0
        %3571 = vmatprep.subr.mxu0 0.0
        %3572 = vmatpush2.msra.mxu0 0.0
        %3573 = vmatprep.subr.mxu0 0.0
        %3574 = vmatpush2.msra.mxu0 0.0
        %3575 = vmatprep.subr.mxu0 0.0
        %3576 = vmatpush2.msra.mxu0 0.0
        %3577 = vmatprep.subr.mxu0 0.0
        %3578 = vmatpush2.msra.mxu0 0.0
        %3579 = vmatprep.subr.mxu0 0.0
        %3580 = vmatpush2.msra.mxu0 0.0
        %3581 = vmatprep.subr.mxu0 0.0
        %3582 = vmatpush2.msra.mxu0 0.0
        %3583 = vmatprep.mubr.f32.mxu0 0.0
        %3584 = vmatmul.mubr.f32.gmra.mxu0 %v3474
        %v3585 = vpop.f32.mrf.mxu0
        %v3586 = vadd.f32 %v3512, %v3585
        %v3587 = vpop.f32.mrf.mxu0
        %v3588 = vadd.f32 %v3516, %v3587
        %3589 = vdwg.mxu0
        %v3590 = vmax.f32 %v3586, 0.0
        %v3591 = vmax.f32 %v3588, 0.0
        %v3592 = vld [vmem:[%s738] sm:$0xff]
        %v3593 = vld [vmem:[%s738 + $0x8] sm:$0xff]
        %v3594 = vld [vmem:[%s738 + $0x10] sm:$0xff]
        %v3595 = vld [vmem:[%s738 + $0x18] sm:$0xff]
        %v3596 = vld [vmem:[%s738 + $0x20] sm:$0xff]
        %v3597 = vld [vmem:[%s738 + $0x28] sm:$0xff]
        %v3598 = vld [vmem:[%s738 + $0x30] sm:$0xff]
        %v3599 = vld [vmem:[%s738 + $0x38] sm:$0xff]
        %v3600 = vld [vmem:[%s738 + $0x40] sm:$0xff]
        %v3601 = vld [vmem:[%s738 + $0x48] sm:$0xff]
        %v3602 = vld [vmem:[%s738 + $0x50] sm:$0xff]
        %v3603 = vld [vmem:[%s738 + $0x58] sm:$0xff]
        %v3604 = vld [vmem:[%s738 + $0x60] sm:$0xff]
        %v3605 = vld [vmem:[%s738 + $0x68] sm:$0xff]
        %v3606 = vld [vmem:[%s738 + $0x70] sm:$0xff]
        %v3607 = vld [vmem:[%s738 + $0x78] sm:$0xff]
        %v3608 = vld [vmem:[%s738 + $0x80] sm:$0xff]
        %v3609 = vld [vmem:[%s738 + $0x88] sm:$0xff]
        %v3610 = vld [vmem:[%s738 + $0x90] sm:$0xff]
        %v3611 = vld [vmem:[%s738 + $0x98] sm:$0xff]
        %v3612 = vld [vmem:[%s738 + $0xa0] sm:$0xff]
        %v3613 = vld [vmem:[%s738 + $0xa8] sm:$0xff]
        %v3614 = vld [vmem:[%s738 + $0xb0] sm:$0xff]
        %v3615 = vld [vmem:[%s738 + $0xb8] sm:$0xff]
        %v3616 = vld [vmem:[%s738 + $0xc0] sm:$0xff]
        %v3617 = vld [vmem:[%s738 + $0xc8] sm:$0xff]
        %v3618 = vld [vmem:[%s738 + $0xd0] sm:$0xff]
        %v3619 = vld [vmem:[%s738 + $0xd8] sm:$0xff]
        %v3620 = vld [vmem:[%s738 + $0xe0] sm:$0xff]
        %v3621 = vld [vmem:[%s738 + $0xe8] sm:$0xff]
        %v3622 = vld [vmem:[%s738 + $0xf0] sm:$0xff]
        %v3623 = vld [vmem:[%s738 + $0xf8] sm:$0xff]
        %3624 = vmatprep.subr.mxu0 0.0
        %3625 = vmatpush1.msra.mxu0 %v3607
        %3626 = vmatprep.subr.mxu0 0.0
        %3627 = vmatpush1.msra.mxu0 %v3606
        %3628 = vmatprep.subr.mxu0 0.0
        %3629 = vmatpush1.msra.mxu0 %v3605
        %3630 = vmatprep.subr.mxu0 0.0
        %3631 = vmatpush1.msra.mxu0 %v3604
        %3632 = vmatprep.subr.mxu0 0.0
        %3633 = vmatpush1.msra.mxu0 %v3603
        %3634 = vmatprep.subr.mxu0 0.0
        %3635 = vmatpush1.msra.mxu0 %v3602
        %3636 = vmatprep.subr.mxu0 0.0
        %3637 = vmatpush1.msra.mxu0 %v3601
        %3638 = vmatprep.subr.mxu0 0.0
        %3639 = vmatpush1.msra.mxu0 %v3600
        %3640 = vmatprep.subr.mxu0 0.0
        %3641 = vmatpush1.msra.mxu0 %v3599
        %3642 = vmatprep.subr.mxu0 0.0
        %3643 = vmatpush1.msra.mxu0 %v3598
        %3644 = vmatprep.subr.mxu0 0.0
        %3645 = vmatpush1.msra.mxu0 %v3597
        %3646 = vmatprep.subr.mxu0 0.0
        %3647 = vmatpush1.msra.mxu0 %v3596
        %3648 = vmatprep.subr.mxu0 0.0
        %3649 = vmatpush1.msra.mxu0 %v3595
        %3650 = vmatprep.subr.mxu0 0.0
        %3651 = vmatpush1.msra.mxu0 %v3594
        %3652 = vmatprep.subr.mxu0 0.0
        %3653 = vmatpush1.msra.mxu0 %v3593
        %3654 = vmatprep.subr.mxu0 0.0
        %3655 = vmatpush1.msra.mxu0 %v3592
        %3656 = vmatprep.subr.mxu0 0.0
        %3657 = vmatpush2.msra.mxu0 %v3623
        %3658 = vmatprep.subr.mxu0 0.0
        %3659 = vmatpush2.msra.mxu0 %v3622
        %3660 = vmatprep.subr.mxu0 0.0
        %3661 = vmatpush2.msra.mxu0 %v3621
        %3662 = vmatprep.subr.mxu0 0.0
        %3663 = vmatpush2.msra.mxu0 %v3620
        %3664 = vmatprep.subr.mxu0 0.0
        %3665 = vmatpush2.msra.mxu0 %v3619
        %3666 = vmatprep.subr.mxu0 0.0
        %3667 = vmatpush2.msra.mxu0 %v3618
        %3668 = vmatprep.subr.mxu0 0.0
        %3669 = vmatpush2.msra.mxu0 %v3617
        %3670 = vmatprep.subr.mxu0 0.0
        %3671 = vmatpush2.msra.mxu0 %v3616
        %3672 = vmatprep.subr.mxu0 0.0
        %3673 = vmatpush2.msra.mxu0 %v3615
        %3674 = vmatprep.subr.mxu0 0.0
        %3675 = vmatpush2.msra.mxu0 %v3614
        %3676 = vmatprep.subr.mxu0 0.0
        %3677 = vmatpush2.msra.mxu0 %v3613
        %3678 = vmatprep.subr.mxu0 0.0
        %3679 = vmatpush2.msra.mxu0 %v3612
        %3680 = vmatprep.subr.mxu0 0.0
        %3681 = vmatpush2.msra.mxu0 %v3611
        %3682 = vmatprep.subr.mxu0 0.0
        %3683 = vmatpush2.msra.mxu0 %v3610
        %3684 = vmatprep.subr.mxu0 0.0
        %3685 = vmatpush2.msra.mxu0 %v3609
        %3686 = vmatprep.subr.mxu0 0.0
        %3687 = vmatpush2.msra.mxu0 %v3608
        %3688 = vmatprep.mubr.f32.mxu0 %v3591
        %3689 = vmatmul.mubr.f32.gmra.mxu0 %v3590
        %v3690 = vpop.f32.mrf.mxu0
        %v3691 = vadd.f32 0.0, %v3690
        %v3692 = vpop.f32.mrf.mxu0
        %3693 = vdwg.mxu0
        %v3694 = vadd.f32 %v3438, %v3691
        %v3695 = vld [vmem:[%s844] sm:$0x1]
        %v3697 = vlaneseq
        %v3698 = vshrl.u32 %v3697, 7
        %v3699 = vsub.s32 0, %v3698
        %v3700 = vrot.slane %v3695, %v3699
        %v3702 = vadd.f32 %v3694, %v3700
        %3703 = vst [vmem:[#allocation2] sm:$0xff] %v3702
        %p3704 = scmp.eq.s32.totalorder %s48, 1
        // Predicated region
        $region117: #{tpu_custom_call.1} parent=75 // pred_check
          %p3705 = pneg %p3704
        $region118: #{tpu_custom_call.1} parent=75 // pred_check_branch
          %3707 = sbr.rel (%p3705) target = $region120
        $region119: #{tpu_custom_call.1} parent=75 // pred_region
          %v3708 = vld [vmem:[%s12] sm:$0x1]
          %v3709 = vld [vmem:[%s13] sm:$0x1]
          %3710 = vadd.xlane.f32.xlu0 %v3702
          %v3711 = vpop.xlane.xlu0 %3710
          %v3712 = vmul.f32 %v3711, %v860
          %v3713 = vsub.f32 %v3702, %v3712
          %v3714 = vmul.f32 %v3713, %v3713
          %3715 = vadd.xlane.f32.xlu0 %v3714
          %v3716 = vpop.xlane.xlu0 %3715
          %v3717 = vmul.f32 %v3716, 0.007874016
          %v3718 = vrsqrt.pop %v3717
          %v3719 = vmul.f32 %v3717, %v3718
          %vm3720 = vcmp.eq.f32.partialorder %v3717, inf
          %v3721 = vsel %vm3720, %v3717, %v3719
          %vm3722 = vcmp.eq.f32.partialorder %v3717, 0.0
          %v3723 = vand.u32 %v3717, 2147483648
          %v3724 = vsel %vm3722, %v3723, %v3721
          %v3725 = vadd.f32 %v3724, 1e-06
          %v3726 = vrcp.pop %v3725
          %v3727 = vmul.f32 %v3713, %v3726
          %v3729 = vlaneseq
          %v3730 = vshrl.u32 %v3729, 7
          %v3731 = vsub.s32 0, %v3730
          %v3732 = vrot.slane %v3708, %v3731
          %v3734 = vmul.f32 %v3732, %v3727
          %v3736 = vlaneseq
          %v3737 = vshrl.u32 %v3736, 7
          %v3738 = vsub.s32 0, %v3737
          %v3739 = vrot.slane %v3709, %v3738
          %v3741 = vadd.f32 %v3734, %v3739
          %3742 = vst [vmem:[%s833] sm:$0xff] %v3741
        $region120: #{tpu_custom_call.1} parent=75 // pred_fallthru
          _
        %s3743 = sand.u32 %s417, 1
        %s3744 = scalar_lea.sflag [#allocation5], %s3743
        %s3745 = sand.u32 %s417, 1
        %s3746 = smul.addr %s3745, 8
        %s3747 = scalar_lea.vmem [#allocation18], %s3746
        // Predicated region
        $region121: #{tpu_custom_call.1} parent=75 // pred_check
          %p3748 = pneg %p427
        $region122: #{tpu_custom_call.1} parent=75 // pred_check_branch
          %3750 = sbr.rel (%p3748) target = $region124
        $region123: #{tpu_custom_call.1} parent=75 // pred_region
          %s3752 = ssub.s32 128, 128
          %3753 = vsyncadd %s3744, %s3752
          %s3754 = smul.addr %s47, 128
          %s3755 = scalar_lea.hbm %s14, %s3754
          %s3757 = sshll.u32 %s3747, 4
          %s3758 = int_to_ptr.vmem [resolvable:$true] %s3757
          %3760 = dma.vmem_to_hbm [thread:$0]  %s3758, 128, %s3755, %s3744
        $region124: #{tpu_custom_call.1} parent=75 // pred_fallthru
          _
      $region76: #{tpu_custom_call.1} parent=5 // pred_fallthru
        _
      %p3761 = scmp.le.s32.totalorder 2, %s38
      // Predicated region
      $region125: #{tpu_custom_call.1} parent=5 // pred_check
        %p3762 = pneg %p3761
      $region126: #{tpu_custom_call.1} parent=5 // pred_check_branch
        %3764 = sbr.rel (%p3762) target = $region128
      $region127: #{tpu_custom_call.1} parent=5 // pred_region
        %s3765 = ssub.s32 %s38, 2
        // Predicated region
        $region129: #{tpu_custom_call.1} parent=127 // pred_check
          %p3766 = pneg %p433
        $region130: #{tpu_custom_call.1} parent=127 // pred_check_branch
          %3768 = sbr.rel (%p3766) target = $region132
        $region131: #{tpu_custom_call.1} parent=127 // pred_region
          %s3769 = sand.u32 %s418, 1
          %s3770 = scalar_lea.sflag [#allocation5], %s3769
          %s3771 = sand.u32 %s418, 1
          %s3772 = smul.addr %s3771, 8
          %s3773 = scalar_lea.vmem [#allocation18], %s3772
          %3774 = dma.done %s3770, 128
        $region132: #{tpu_custom_call.1} parent=127 // pred_fallthru
          _
      $region128: #{tpu_custom_call.1} parent=5 // pred_fallthru
        _
    $region6: #{tpu_custom_call.1} parent=1 // loop_footer
      %s42 = sadd.s32 1, %s38
    $region7: #{tpu_custom_call.1} parent=1 // loop_footer_branch
      %37 = sbr.rel target = $region3
    $region8: #{tpu_custom_call.1} parent=1 // loop_exit
      _
    %3775 = vsyncpa [#allocation4], 1
    %s3776 = scalar_lea.sflag [#allocation4], 1
    %3777 = vsyncpa %s3776, 1
    %3778 = vsyncpa [#allocation7], 1
    %s3779 = scalar_lea.sflag [#allocation7], 1
    %3780 = vsyncpa %s3779, 1
    %3781 = vsyncpa [#allocation10], 1
    %s3782 = scalar_lea.sflag [#allocation10], 1
    %3783 = vsyncpa %s3782, 1
    %3784 = vsyncpa [#allocation13], 1
    %s3785 = scalar_lea.sflag [#allocation13], 1
    %3786 = vsyncpa %s3785, 1
    %3787 = vsyncpa [#allocation16], 1
    %s3788 = scalar_lea.sflag [#allocation16], 1
    %3789 = vsyncpa %s3788, 1
    %3790 = vsyncpa [#allocation5], 1
    %s3791 = scalar_lea.sflag [#allocation5], 1
    %3792 = vsyncpa %s3791, 1

</llo_original>
